<compile_context>
chip_gen: v5e
topology: v5e:2x2
jax: 0.10.0
libtpu: 0.0.40
codegen_flags: <defaults>
</compile_context>

<pallas_src>
import functools

import jax
import jax.numpy as jnp
import numpy as np
from jax.experimental import pallas as pl
from jax.experimental.pallas import tpu as pltpu


def mha_kernel(q_ref, k_ref, v_ref, mask_ref,
               wq_ref, wk_ref, wv_ref, wo_ref,
               out_ref, attn_ref,
               *, batch, n_heads, len_q, len_kv, d_k, d_v, inv_scale):
    f32 = jnp.float32
    bh = batch * n_heads

    # Fused full-width projections: one MXU matmul each, M = batch * seq.
    qh = jnp.dot(q_ref[...], wq_ref[...], preferred_element_type=f32)   # (B*len_q,  H*d_k)
    kh = jnp.dot(k_ref[...], wk_ref[...], preferred_element_type=f32)   # (B*len_kv, H*d_k)
    vh = jnp.dot(v_ref[...], wv_ref[...], preferred_element_type=f32)   # (B*len_kv, H*d_v)

    # Head-major relayout: (B*seq, H*d) -> (B*H, seq, d).
    qh = qh.reshape(batch, len_q, n_heads, d_k).transpose(0, 2, 1, 3).reshape(bh, len_q, d_k)
    kh = kh.reshape(batch, len_kv, n_heads, d_k).transpose(0, 2, 1, 3).reshape(bh, len_kv, d_k)
    vh = vh.reshape(batch, len_kv, n_heads, d_v).transpose(0, 2, 1, 3).reshape(bh, len_kv, d_v)

    # Scores for every (batch, head) pair with ONE batched contraction over d_k.
    scores = jnp.einsum("bqd,bkd->bqk", qh, kh,
                        preferred_element_type=f32) * inv_scale          # (B*H, len_q, len_kv)

    # Mask (nonzero => masked out), already broadcast over heads by the wrapper.
    # -inf matches torch masked_fill(-inf) + softmax (fully-masked rows -> NaN,
    # exactly as in the reference module).
    scores = jnp.where(mask_ref[...] != 0, -jnp.inf, scores)

    # ONE softmax over the stacked tensor (key axis last, == Softmax(dim=-1)).
    s_max = jnp.max(scores, axis=-1, keepdims=True)
    e = jnp.exp(scores - s_max)
    denom = jnp.sum(e, axis=-1, keepdims=True)
    attn = e * pl.reciprocal(denom, approx=True)
    attn_ref[...] = attn.astype(attn_ref.dtype)                          # single coalesced store

    # ONE batched PV matmul.
    pv = jnp.einsum("bqk,bkd->bqd", attn, vh,
                    preferred_element_type=f32)                          # (B*H, len_q, d_v)

    # Merge heads back to a lane-dense (B*len_q, H*d_v) slab (no concatenate),
    # then one fused W_o matmul.
    pv = pv.reshape(batch, n_heads, len_q, d_v).transpose(0, 2, 1, 3)
    pv = pv.reshape(batch * len_q, n_heads * d_v)
    out_ref[...] = jnp.dot(pv, wo_ref[...],
                           preferred_element_type=f32).astype(out_ref.dtype)


def multi_head_attention(q, k, v, mask, wq, wk, wv, wo, n_heads):
    """
    q    : (B, len_q,  d_model) float32
    k, v : (B, len_kv, d_model) float32
    mask : (B, len_q, len_kv)   bool (True => masked out)
    wq/wk/wv : (d_model, n_heads * d_head)   (the x @ W form of nn.Linear, no bias)
    wo       : (n_heads * d_v, d_model)
    returns (output (B, len_q, d_model), attn (B, n_heads, len_q, len_kv))
    """
    B, len_q, d_model = q.shape
    len_kv = k.shape[1]
    d_k = wq.shape[1] // n_heads
    d_v = wv.shape[1] // n_heads
    inv_scale = float(1.0 / np.sqrt(d_k))

    # Fold batch into the matmul M dimension (wrapper-side reshapes are free).
    q2 = q.reshape(B * len_q, d_model)
    k2 = k.reshape(B * len_kv, d_model)
    v2 = v.reshape(B * len_kv, d_model)

    # Pre-broadcast the mask over heads (mirrors the module's repeat) as int8.
    mask_bh = jnp.broadcast_to(mask[:, None, :, :], (B, n_heads, len_q, len_kv))
    mask_bh = mask_bh.reshape(B * n_heads, len_q, len_kv).astype(jnp.int8)

    kernel = functools.partial(mha_kernel, batch=B, n_heads=n_heads,
                               len_q=len_q, len_kv=len_kv, d_k=d_k, d_v=d_v,
                               inv_scale=inv_scale)

    out2, attn2 = pl.pallas_call(
        kernel,
        out_shape=(
            jax.ShapeDtypeStruct((B * len_q, d_model), jnp.float32),
            jax.ShapeDtypeStruct((B * n_heads, len_q, len_kv), jnp.float32),
        ),
        grid_spec=pltpu.PrefetchScalarGridSpec(
            num_scalar_prefetch=0,
            grid=(1,),                                      # single fused step
            in_specs=[
                pl.BlockSpec((B * len_q, d_model), lambda i: (0, 0)),
                pl.BlockSpec((B * len_kv, d_model), lambda i: (0, 0)),
                pl.BlockSpec((B * len_kv, d_model), lambda i: (0, 0)),
                pl.BlockSpec((B * n_heads, len_q, len_kv), lambda i: (0, 0, 0)),
                pl.BlockSpec((d_model, n_heads * d_k), lambda i: (0, 0)),
                pl.BlockSpec((d_model, n_heads * d_k), lambda i: (0, 0)),
                pl.BlockSpec((d_model, n_heads * d_v), lambda i: (0, 0)),
                pl.BlockSpec((n_heads * d_v, d_model), lambda i: (0, 0)),
            ],
            out_specs=[
                pl.BlockSpec((B * len_q, d_model), lambda i: (0, 0)),
                pl.BlockSpec((B * n_heads, len_q, len_kv), lambda i: (0, 0, 0)),
            ],
        ),
        compiler_params=pltpu.CompilerParams(
            dimension_semantics=("arbitrary",),
        ),
    )(q2, k2, v2, mask_bh, wq, wk, wv, wo)

    out = out2.reshape(B, len_q, d_model)
    attn = attn2.reshape(B, n_heads, len_q, len_kv)
    return out, attn


def reference_mha(q, k, v, mask, wq, wk, wv, wo, n_heads):
    """Pure-JAX reference mirroring the PyTorch module."""
    B, len_q, d_model = q.shape
    len_kv = k.shape[1]
    d_k = wq.shape[1] // n_heads
    d_v = wv.shape[1] // n_heads
    scale = np.sqrt(d_k)

    qp = (q @ wq).reshape(B, len_q, n_heads, d_k).transpose(0, 2, 1, 3)
    kp = (k @ wk).reshape(B, len_kv, n_heads, d_k).transpose(0, 2, 1, 3)
    vp = (v @ wv).reshape(B, len_kv, n_heads, d_v).transpose(0, 2, 1, 3)

    scores = jnp.einsum("bhqd,bhkd->bhqk", qp, kp) / scale
    scores = jnp.where(mask[:, None, :, :], -jnp.inf, scores)
    attn = jax.nn.softmax(scores, axis=-1)
    out_h = jnp.einsum("bhqk,bhkd->bhqd", attn, vp)
    out = out_h.transpose(0, 2, 1, 3).reshape(B, len_q, n_heads * d_v)
    out = out @ wo
    return out, attn


if __name__ == "__main__":
    # Shapes from the module's script constants.
    batch_size = 2
    len_q = 5
    len_kv = 10
    d_model = 512
    n_heads = 8
    d_k = d_model // n_heads
    d_v = d_model // n_heads

    key = jax.random.PRNGKey(0)
    kq, kk, kv_, kwq, kwk, kwv, kwo = jax.random.split(key, 7)

    q = jax.random.normal(kq, (batch_size, len_q, d_model), dtype=jnp.float32)
    k = jax.random.normal(kk, (batch_size, len_kv, d_model), dtype=jnp.float32)
    v = jax.random.normal(kv_, (batch_size, len_kv, d_model), dtype=jnp.float32)
    mask = jnp.zeros((batch_size, len_q, len_kv), dtype=bool)

    # Deterministic synthetic weights (equivalent of nn.Linear(...).weight.T).
    wq = jax.random.normal(kwq, (d_model, n_heads * d_k), dtype=jnp.float32) * 0.05
    wk = jax.random.normal(kwk, (d_model, n_heads * d_k), dtype=jnp.float32) * 0.05
    wv = jax.random.normal(kwv, (d_model, n_heads * d_v), dtype=jnp.float32) * 0.05
    wo = jax.random.normal(kwo, (n_heads * d_v, d_model), dtype=jnp.float32) * 0.05

    out, attn = multi_head_attention(q, k, v, mask, wq, wk, wv, wo, n_heads)
    out = jax.block_until_ready(out)
    attn = jax.block_until_ready(attn)

    out_ref, attn_ref = reference_mha(q, k, v, mask, wq, wk, wv, wo, n_heads)
    # Tolerance accounts for TPU default (bf16-pass) matmul precision on both
    # paths plus the EUP approx reciprocal in the kernel softmax.
    np.testing.assert_allclose(np.asarray(out), np.asarray(out_ref), rtol=2e-2, atol=2e-2)
    np.testing.assert_allclose(np.asarray(attn), np.asarray(attn_ref), rtol=2e-2, atol=2e-2)

    print("KERNEL_OK")
</pallas_src>

<mosaic_0001>
module attributes {stable_mosaic.version = 11 : i64} {
  func.func @mha_kernel(%arg0: i32, %arg1: memref<10x512xf32, #tpu.memory_space<vmem>>, %arg2: memref<20x512xf32, #tpu.memory_space<vmem>>, %arg3: memref<20x512xf32, #tpu.memory_space<vmem>>, %arg4: memref<16x5x10xi8, #tpu.memory_space<vmem>>, %arg5: memref<512x512xf32, #tpu.memory_space<vmem>>, %arg6: memref<512x512xf32, #tpu.memory_space<vmem>>, %arg7: memref<512x512xf32, #tpu.memory_space<vmem>>, %arg8: memref<512x512xf32, #tpu.memory_space<vmem>>, %arg9: memref<10x512xf32, #tpu.memory_space<vmem>>, %arg10: memref<16x5x10xf32, #tpu.memory_space<vmem>>) attributes {dimension_semantics = [#tpu.dimension_semantics<arbitrary>], iteration_bounds = array<i64: 1>, scalar_prefetch = 0 : i64, scratch_operands = 0 : i64, tpu.core_type = #tpu.core_type<tc>, window_params = [{pipeline_mode = #tpu.pipeline_mode<synchronous>, transform_indices = @transform_0, window_bounds = array<i64: 10, 512>}, {pipeline_mode = #tpu.pipeline_mode<synchronous>, transform_indices = @transform_1, window_bounds = array<i64: 20, 512>}, {pipeline_mode = #tpu.pipeline_mode<synchronous>, transform_indices = @transform_2, window_bounds = array<i64: 20, 512>}, {pipeline_mode = #tpu.pipeline_mode<synchronous>, transform_indices = @transform_3, window_bounds = array<i64: 16, 5, 10>}, {pipeline_mode = #tpu.pipeline_mode<synchronous>, transform_indices = @transform_4, window_bounds = array<i64: 512, 512>}, {pipeline_mode = #tpu.pipeline_mode<synchronous>, transform_indices = @transform_5, window_bounds = array<i64: 512, 512>}, {pipeline_mode = #tpu.pipeline_mode<synchronous>, transform_indices = @transform_6, window_bounds = array<i64: 512, 512>}, {pipeline_mode = #tpu.pipeline_mode<synchronous>, transform_indices = @transform_7, window_bounds = array<i64: 512, 512>}, {pipeline_mode = #tpu.pipeline_mode<synchronous>, transform_indices = @transform_8, window_bounds = array<i64: 10, 512>}, {pipeline_mode = #tpu.pipeline_mode<synchronous>, transform_indices = @transform_9, window_bounds = array<i64: 16, 5, 10>}]} {
    %c0 = arith.constant 0 : index
    %c0_0 = arith.constant 0 : index
    %0 = vector.load %arg1[%c0, %c0_0] : memref<10x512xf32, #tpu.memory_space<vmem>>, vector<10x512xf32>
    %c0_1 = arith.constant 0 : index
    %c0_2 = arith.constant 0 : index
    %1 = vector.load %arg5[%c0_1, %c0_2] : memref<512x512xf32, #tpu.memory_space<vmem>>, vector<512x512xf32>
    %cst = arith.constant dense<0.000000e+00> : vector<10x512xf32>
    %2 = tpu.matmul %0, %1, %cst {dimension_numbers = #tpu.dot_dimension_numbers<[1], [0], [0], [1], [0, 0, 1, 1], [], []>} : vector<10x512xf32>, vector<512x512xf32>, vector<10x512xf32> -> vector<10x512xf32>
    %c0_3 = arith.constant 0 : index
    %c0_4 = arith.constant 0 : index
    %3 = vector.load %arg2[%c0_3, %c0_4] : memref<20x512xf32, #tpu.memory_space<vmem>>, vector<20x512xf32>
    %c0_5 = arith.constant 0 : index
    %c0_6 = arith.constant 0 : index
    %4 = vector.load %arg6[%c0_5, %c0_6] : memref<512x512xf32, #tpu.memory_space<vmem>>, vector<512x512xf32>
    %cst_7 = arith.constant dense<0.000000e+00> : vector<20x512xf32>
    %5 = tpu.matmul %3, %4, %cst_7 {dimension_numbers = #tpu.dot_dimension_numbers<[1], [0], [0], [1], [0, 0, 1, 1], [], []>} : vector<20x512xf32>, vector<512x512xf32>, vector<20x512xf32> -> vector<20x512xf32>
    %c0_8 = arith.constant 0 : index
    %c0_9 = arith.constant 0 : index
    %6 = vector.load %arg3[%c0_8, %c0_9] : memref<20x512xf32, #tpu.memory_space<vmem>>, vector<20x512xf32>
    %c0_10 = arith.constant 0 : index
    %c0_11 = arith.constant 0 : index
    %7 = vector.load %arg7[%c0_10, %c0_11] : memref<512x512xf32, #tpu.memory_space<vmem>>, vector<512x512xf32>
    %cst_12 = arith.constant dense<0.000000e+00> : vector<20x512xf32>
    %8 = tpu.matmul %6, %7, %cst_12 {dimension_numbers = #tpu.dot_dimension_numbers<[1], [0], [0], [1], [0, 0, 1, 1], [], []>} : vector<20x512xf32>, vector<512x512xf32>, vector<20x512xf32> -> vector<20x512xf32>
    %9 = vector.shape_cast %2 : vector<10x512xf32> to vector<2x5x8x64xf32>
    %10 = tpu.transpose %9, [0, 2, 1, 3] : vector<2x5x8x64xf32> -> vector<2x8x5x64xf32>
    %11 = vector.shape_cast %10 : vector<2x8x5x64xf32> to vector<16x5x64xf32>
    %12 = vector.shape_cast %5 : vector<20x512xf32> to vector<2x10x8x64xf32>
    %13 = tpu.transpose %12, [0, 2, 1, 3] : vector<2x10x8x64xf32> -> vector<2x8x10x64xf32>
    %14 = vector.shape_cast %13 : vector<2x8x10x64xf32> to vector<16x10x64xf32>
    %15 = vector.shape_cast %8 : vector<20x512xf32> to vector<2x10x8x64xf32>
    %16 = tpu.transpose %15, [0, 2, 1, 3] : vector<2x10x8x64xf32> -> vector<2x8x10x64xf32>
    %17 = vector.shape_cast %16 : vector<2x8x10x64xf32> to vector<16x10x64xf32>
    "tpu.trace_start"() <{level = 10 : i32, message = "bqd,bkd->bqk"}> : () -> ()
    %cst_13 = arith.constant dense<0.000000e+00> : vector<16x5x10xf32>
    %18 = tpu.matmul %11, %14, %cst_13 {dimension_numbers = #tpu.dot_dimension_numbers<[2], [2], [1], [1], [0, 0, 0, 1, 1, 1], [0], [0]>} : vector<16x5x64xf32>, vector<16x10x64xf32>, vector<16x5x10xf32> -> vector<16x5x10xf32>
    "tpu.trace_stop"() : () -> ()
    %cst_14 = arith.constant 1.250000e-01 : f32
    %19 = vector.broadcast %cst_14 : f32 to vector<16x5x10xf32>
    %20 = arith.mulf %18, %19 : vector<16x5x10xf32>
    %c0_15 = arith.constant 0 : index
    %c0_16 = arith.constant 0 : index
    %c0_17 = arith.constant 0 : index
    %21 = vector.load %arg4[%c0_15, %c0_16, %c0_17] : memref<16x5x10xi8, #tpu.memory_space<vmem>>, vector<16x5x10xi8>
    %c0_i8 = arith.constant 0 : i8
    %22 = vector.broadcast %c0_i8 : i8 to vector<16x5x10xi8>
    %23 = arith.cmpi ne, %21, %22 : vector<16x5x10xi8>
    %cst_18 = arith.constant 0xFF800000 : f32
    %24 = vector.broadcast %cst_18 : f32 to vector<16x5x10xf32>
    %25 = arith.select %23, %24, %20 : vector<16x5x10xi1>, vector<16x5x10xf32>
    %cst_19 = arith.constant dense<0xFF800000> : vector<16x5xf32>
    %26 = vector.multi_reduction <maximumf>, %25, %cst_19 [2] : vector<16x5x10xf32> to vector<16x5xf32>
    %27 = vector.shape_cast %26 : vector<16x5xf32> to vector<16x5x1xf32>
    %28 = vector.broadcast %27 : vector<16x5x1xf32> to vector<16x5x10xf32>
    %29 = arith.subf %25, %28 : vector<16x5x10xf32>
    %30 = math.exp %29 : vector<16x5x10xf32>
    %cst_20 = arith.constant dense<0.000000e+00> : vector<16x5xf32>
    %31 = vector.multi_reduction <add>, %30, %cst_20 [2] : vector<16x5x10xf32> to vector<16x5xf32>
    %32 = vector.shape_cast %31 : vector<16x5xf32> to vector<16x5x1xf32>
    %33 = tpu.reciprocal %32 {approx = true} : vector<16x5x1xf32> -> vector<16x5x1xf32>
    %34 = vector.broadcast %33 : vector<16x5x1xf32> to vector<16x5x10xf32>
    %35 = arith.mulf %30, %34 : vector<16x5x10xf32>
    %c0_21 = arith.constant 0 : index
    %c0_22 = arith.constant 0 : index
    %c0_23 = arith.constant 0 : index
    %36 = vector.load %arg10[%c0_21, %c0_22, %c0_23] : memref<16x5x10xf32, #tpu.memory_space<vmem>>, vector<16x5x10xf32>
    tpu.vector_store %arg10[%c0_21, %c0_22, %c0_23], %35 {strides = array<i32>} : memref<16x5x10xf32, #tpu.memory_space<vmem>>, vector<16x5x10xf32>,
    "tpu.trace_start"() <{level = 10 : i32, message = "bqk,bkd->bqd"}> : () -> ()
    %cst_24 = arith.constant dense<0.000000e+00> : vector<16x5x64xf32>
    %37 = tpu.matmul %35, %17, %cst_24 {dimension_numbers = #tpu.dot_dimension_numbers<[2], [1], [1], [2], [0, 0, 0, 1, 1, 2], [0], [0]>} : vector<16x5x10xf32>, vector<16x10x64xf32>, vector<16x5x64xf32> -> vector<16x5x64xf32>
    "tpu.trace_stop"() : () -> ()
    %38 = vector.shape_cast %37 : vector<16x5x64xf32> to vector<2x8x5x64xf32>
    %39 = tpu.transpose %38, [0, 2, 1, 3] : vector<2x8x5x64xf32> -> vector<2x5x8x64xf32>
    %40 = vector.shape_cast %39 : vector<2x5x8x64xf32> to vector<10x512xf32>
    %c0_25 = arith.constant 0 : index
    %c0_26 = arith.constant 0 : index
    %41 = vector.load %arg8[%c0_25, %c0_26] : memref<512x512xf32, #tpu.memory_space<vmem>>, vector<512x512xf32>
    %cst_27 = arith.constant dense<0.000000e+00> : vector<10x512xf32>
    %42 = tpu.matmul %40, %41, %cst_27 {dimension_numbers = #tpu.dot_dimension_numbers<[1], [0], [0], [1], [0, 0, 1, 1], [], []>} : vector<10x512xf32>, vector<512x512xf32>, vector<10x512xf32> -> vector<10x512xf32>
    %c0_28 = arith.constant 0 : index
    %c0_29 = arith.constant 0 : index
    %43 = vector.load %arg9[%c0_28, %c0_29] : memref<10x512xf32, #tpu.memory_space<vmem>>, vector<10x512xf32>
    tpu.vector_store %arg9[%c0_28, %c0_29], %42 {strides = array<i32>} : memref<10x512xf32, #tpu.memory_space<vmem>>, vector<10x512xf32>,
    return
  }
  func.func @transform_0(%arg0: i32) -> (i32, i32) {
    %c0_i32 = arith.constant 0 : i32
    %c0_i32_0 = arith.constant 0 : i32
    %c0_i32_1 = arith.constant 0 : i32
    return %c0_i32, %c0_i32_0 : i32, i32
  }
  func.func @transform_1(%arg0: i32) -> (i32, i32) {
    %c0_i32 = arith.constant 0 : i32
    %c0_i32_0 = arith.constant 0 : i32
    %c0_i32_1 = arith.constant 0 : i32
    return %c0_i32, %c0_i32_0 : i32, i32
  }
  func.func @transform_2(%arg0: i32) -> (i32, i32) {
    %c0_i32 = arith.constant 0 : i32
    %c0_i32_0 = arith.constant 0 : i32
    %c0_i32_1 = arith.constant 0 : i32
    return %c0_i32, %c0_i32_0 : i32, i32
  }
  func.func @transform_3(%arg0: i32) -> (i32, i32, i32) {
    %c0_i32 = arith.constant 0 : i32
    %c0_i32_0 = arith.constant 0 : i32
    %c0_i32_1 = arith.constant 0 : i32
    %c0_i32_2 = arith.constant 0 : i32
    return %c0_i32, %c0_i32_0, %c0_i32_1 : i32, i32, i32
  }
  func.func @transform_4(%arg0: i32) -> (i32, i32) {
    %c0_i32 = arith.constant 0 : i32
    %c0_i32_0 = arith.constant 0 : i32
    %c0_i32_1 = arith.constant 0 : i32
    return %c0_i32, %c0_i32_0 : i32, i32
  }
  func.func @transform_5(%arg0: i32) -> (i32, i32) {
    %c0_i32 = arith.constant 0 : i32
    %c0_i32_0 = arith.constant 0 : i32
    %c0_i32_1 = arith.constant 0 : i32
    return %c0_i32, %c0_i32_0 : i32, i32
  }
  func.func @transform_6(%arg0: i32) -> (i32, i32) {
    %c0_i32 = arith.constant 0 : i32
    %c0_i32_0 = arith.constant 0 : i32
    %c0_i32_1 = arith.constant 0 : i32
    return %c0_i32, %c0_i32_0 : i32, i32
  }
  func.func @transform_7(%arg0: i32) -> (i32, i32) {
    %c0_i32 = arith.constant 0 : i32
    %c0_i32_0 = arith.constant 0 : i32
    %c0_i32_1 = arith.constant 0 : i32
    return %c0_i32, %c0_i32_0 : i32, i32
  }
  func.func @transform_8(%arg0: i32) -> (i32, i32) {
    %c0_i32 = arith.constant 0 : i32
    %c0_i32_0 = arith.constant 0 : i32
    %c0_i32_1 = arith.constant 0 : i32
    return %c0_i32, %c0_i32_0 : i32, i32
  }
  func.func @transform_9(%arg0: i32) -> (i32, i32, i32) {
    %c0_i32 = arith.constant 0 : i32
    %c0_i32_0 = arith.constant 0 : i32
    %c0_i32_1 = arith.constant 0 : i32
    %c0_i32_2 = arith.constant 0 : i32
    return %c0_i32, %c0_i32_0, %c0_i32_1 : i32, i32, i32
  }
}

</mosaic_0001>

<llo_original>
// kernel: tpu_custom_call.1
$region0: #{tpu_custom_call.1}
  #allocation0 [shape = 'u32[]', space=smem, size = 0x4, offset = 0x4, fixed_abs, tag = 'smem constant byte address 0x4 - core index']
  #allocation1 [shape = 'u32[72,128]{1,0:T(1,128)}', space=vmem, size = 0x9000, scoped, tag = 'internal scratch']
  %s0 = inlined_call_operand.hbm [shape: f32[10,512], index: 0, kind: input, shape index: {}]
  %s1 = inlined_call_operand.hbm [shape: f32[20,512], index: 1, kind: input, shape index: {}]
  %s2 = inlined_call_operand.hbm [shape: f32[20,512], index: 2, kind: input, shape index: {}]
  %s3 = inlined_call_operand.vmem [shape: s8[16,5,10], index: 3, kind: input, shape index: {}]
  %s4 = inlined_call_operand.hbm [shape: f32[512,512], index: 4, kind: input, shape index: {}]
  %s5 = inlined_call_operand.hbm [shape: f32[512,512], index: 5, kind: input, shape index: {}]
  %s6 = inlined_call_operand.hbm [shape: f32[512,512], index: 6, kind: input, shape index: {}]
  %s7 = inlined_call_operand.hbm [shape: f32[512,512], index: 7, kind: input, shape index: {}]
  %s8 = inlined_call_operand.hbm [shape: f32[10,512], index: 8, kind: output, shape index: {0}]
  %s9 = inlined_call_operand.vmem [shape: f32[16,5,10], index: 9, kind: output, shape index: {1}]
  %10 = xla_tuple %s8, %s9
  %s11 = sld [smem:[#allocation0]]
  $region78: #{tpu_custom_call.1} parent=0
    _
  %s13 = ssub.s32 1, %s11
  %s14 = scalar_select 0, %s13, %s11
  $region1: #{tpu_custom_call.1} parent=0
    #allocation2 [shape = 'u8[32768]{0}', space=vmem, size = 0x8000, scoped, tag = 'input window, operand 0, single buffered']
    #allocation3 [shape = 's32[1]{0}', space=sflag, size = 0x4, scoped, tag = 'scoped memory for tpu_custom_call.1']
    #allocation4 [shape = 's32[1]{0}', space=sflag, size = 0x4, scoped, tag = 'scoped memory for tpu_custom_call.1']
    #allocation5 [shape = 'u8[49152]{0}', space=vmem, size = 0xc000, scoped, tag = 'input window, operand 1, single buffered']
    #allocation6 [shape = 's32[1]{0}', space=sflag, size = 0x4, scoped, tag = 'scoped memory for tpu_custom_call.1']
    #allocation7 [shape = 'u8[49152]{0}', space=vmem, size = 0xc000, scoped, tag = 'input window, operand 2, single buffered']
    #allocation8 [shape = 'u8[1048576]{0}', space=vmem, size = 0x100000, scoped, tag = 'input window, operand 4, single buffered']
    #allocation9 [shape = 's32[1]{0}', space=sflag, size = 0x4, scoped, tag = 'scoped memory for tpu_custom_call.1']
    #allocation10 [shape = 'u8[1048576]{0}', space=vmem, size = 0x100000, scoped, tag = 'input window, operand 5, single buffered']
    #allocation11 [shape = 'u8[1048576]{0}', space=vmem, size = 0x100000, scoped, tag = 'input window, operand 6, single buffered']
    #allocation12 [shape = 's32[1]{0}', space=sflag, size = 0x4, scoped, tag = 'scoped memory for tpu_custom_call.1']
    #allocation13 [shape = 'u8[1048576]{0}', space=vmem, size = 0x100000, scoped, tag = 'input window, operand 7, single buffered']
    #allocation14 [shape = 'u8[32768]{0}', space=vmem, size = 0x8000, scoped, tag = 'output window, operand 0, single buffered']
    %15 = vsyncpa [#allocation3], 0
    %16 = vsyncpa [#allocation6], 0
    %17 = vsyncpa [#allocation9], 0
    %18 = vsyncpa [#allocation12], 0
    %19 = vsyncpa [#allocation4], 0
    // Predicated region
    $region2: #{tpu_custom_call.1} parent=1 // pred_check
      _
    $region3: #{tpu_custom_call.1} parent=1 // pred_check_branch
      %21 = sbr.rel (0) target = $region5
    $region4: #{tpu_custom_call.1} parent=1 // pred_region
      %23 = vsyncadd [#allocation3], 0
      %s24 = sshll.u32 %s0, 4
      %s25 = int_to_ptr.hbm [resolvable:$true] %s24
      %s26 = sshll.u32 [#allocation2], 4
      %s27 = int_to_ptr.vmem [resolvable:$true] %s26
      %32 = dma.hbm_to_vmem [thread:$0]  %s25, 1024, %s27, [#allocation3], 512, 512, 32
    $region5: #{tpu_custom_call.1} parent=1 // pred_fallthru
      _
    // Predicated region
    $region6: #{tpu_custom_call.1} parent=1 // pred_check
      _
    $region7: #{tpu_custom_call.1} parent=1 // pred_check_branch
      %34 = sbr.rel (0) target = $region9
    $region8: #{tpu_custom_call.1} parent=1 // pred_region
      %36 = vsyncadd [#allocation6], 0
      %s37 = sshll.u32 %s1, 4
      %s38 = int_to_ptr.hbm [resolvable:$true] %s37
      %s39 = sshll.u32 [#allocation5], 4
      %s40 = int_to_ptr.vmem [resolvable:$true] %s39
      %45 = dma.hbm_to_vmem [thread:$0]  %s38, 1536, %s40, [#allocation6], 512, 512, 32
    $region9: #{tpu_custom_call.1} parent=1 // pred_fallthru
      _
    // Predicated region
    $region10: #{tpu_custom_call.1} parent=1 // pred_check
      _
    $region11: #{tpu_custom_call.1} parent=1 // pred_check_branch
      %47 = sbr.rel (0) target = $region13
    $region12: #{tpu_custom_call.1} parent=1 // pred_region
      %49 = vsyncadd [#allocation6], 0
      %s50 = sshll.u32 %s2, 4
      %s51 = int_to_ptr.hbm [resolvable:$true] %s50
      %s52 = sshll.u32 [#allocation7], 4
      %s53 = int_to_ptr.vmem [resolvable:$true] %s52
      %58 = dma.hbm_to_vmem [thread:$0]  %s51, 1536, %s53, [#allocation6], 512, 512, 32
    $region13: #{tpu_custom_call.1} parent=1 // pred_fallthru
      _
    // Predicated region
    $region14: #{tpu_custom_call.1} parent=1 // pred_check
      _
    $region15: #{tpu_custom_call.1} parent=1 // pred_check_branch
      %60 = sbr.rel (0) target = $region17
    $region16: #{tpu_custom_call.1} parent=1 // pred_region
      _
    $region17: #{tpu_custom_call.1} parent=1 // pred_fallthru
      _
    // Predicated region
    $region18: #{tpu_custom_call.1} parent=1 // pred_check
      _
    $region19: #{tpu_custom_call.1} parent=1 // pred_check_branch
      %62 = sbr.rel (0) target = $region21
    $region20: #{tpu_custom_call.1} parent=1 // pred_region
      %64 = vsyncadd [#allocation9], 0
      %s65 = sshll.u32 %s4, 4
      %s66 = int_to_ptr.hbm [resolvable:$true] %s65
      %s67 = sshll.u32 [#allocation8], 4
      %s68 = int_to_ptr.vmem [resolvable:$true] %s67
      %73 = dma.hbm_to_vmem [thread:$0]  %s66, 32768, %s68, [#allocation9], 512, 512, 32
    $region21: #{tpu_custom_call.1} parent=1 // pred_fallthru
      _
    // Predicated region
    $region22: #{tpu_custom_call.1} parent=1 // pred_check
      _
    $region23: #{tpu_custom_call.1} parent=1 // pred_check_branch
      %75 = sbr.rel (0) target = $region25
    $region24: #{tpu_custom_call.1} parent=1 // pred_region
      %77 = vsyncadd [#allocation9], 0
      %s78 = sshll.u32 %s5, 4
      %s79 = int_to_ptr.hbm [resolvable:$true] %s78
      %s80 = sshll.u32 [#allocation10], 4
      %s81 = int_to_ptr.vmem [resolvable:$true] %s80
      %86 = dma.hbm_to_vmem [thread:$0]  %s79, 32768, %s81, [#allocation9], 512, 512, 32
    $region25: #{tpu_custom_call.1} parent=1 // pred_fallthru
      _
    // Predicated region
    $region26: #{tpu_custom_call.1} parent=1 // pred_check
      _
    $region27: #{tpu_custom_call.1} parent=1 // pred_check_branch
      %88 = sbr.rel (0) target = $region29
    $region28: #{tpu_custom_call.1} parent=1 // pred_region
      %90 = vsyncadd [#allocation12], 0
      %s91 = sshll.u32 %s6, 4
      %s92 = int_to_ptr.hbm [resolvable:$true] %s91
      %s93 = sshll.u32 [#allocation11], 4
      %s94 = int_to_ptr.vmem [resolvable:$true] %s93
      %99 = dma.hbm_to_vmem [thread:$0]  %s92, 32768, %s94, [#allocation12], 512, 512, 32
    $region29: #{tpu_custom_call.1} parent=1 // pred_fallthru
      _
    // Predicated region
    $region30: #{tpu_custom_call.1} parent=1 // pred_check
      _
    $region31: #{tpu_custom_call.1} parent=1 // pred_check_branch
      %101 = sbr.rel (0) target = $region33
    $region32: #{tpu_custom_call.1} parent=1 // pred_region
      %103 = vsyncadd [#allocation12], 0
      %s104 = sshll.u32 %s7, 4
      %s105 = int_to_ptr.hbm [resolvable:$true] %s104
      %s106 = sshll.u32 [#allocation13], 4
      %s107 = int_to_ptr.vmem [resolvable:$true] %s106
      %112 = dma.hbm_to_vmem [thread:$0]  %s105, 32768, %s107, [#allocation12], 512, 512, 32
    $region33: #{tpu_custom_call.1} parent=1 // pred_fallthru
      _
    // Predicated region
    $region34: #{tpu_custom_call.1} parent=1 // pred_check
      _
    $region35: #{tpu_custom_call.1} parent=1 // pred_check_branch
      %114 = sbr.rel (0) target = $region37
    $region36: #{tpu_custom_call.1} parent=1 // pred_region
      %116 = dma.done [#allocation3], 1024
    $region37: #{tpu_custom_call.1} parent=1 // pred_fallthru
      _
    // Predicated region
    $region38: #{tpu_custom_call.1} parent=1 // pred_check
      _
    $region39: #{tpu_custom_call.1} parent=1 // pred_check_branch
      %118 = sbr.rel (0) target = $region41
    $region40: #{tpu_custom_call.1} parent=1 // pred_region
      %120 = dma.done [#allocation6], 1536
    $region41: #{tpu_custom_call.1} parent=1 // pred_fallthru
      _
    // Predicated region
    $region42: #{tpu_custom_call.1} parent=1 // pred_check
      _
    $region43: #{tpu_custom_call.1} parent=1 // pred_check_branch
      %122 = sbr.rel (0) target = $region45
    $region44: #{tpu_custom_call.1} parent=1 // pred_region
      %124 = dma.done [#allocation6], 1536
    $region45: #{tpu_custom_call.1} parent=1 // pred_fallthru
      _
    // Predicated region
    $region46: #{tpu_custom_call.1} parent=1 // pred_check
      _
    $region47: #{tpu_custom_call.1} parent=1 // pred_check_branch
      %126 = sbr.rel (0) target = $region49
    $region48: #{tpu_custom_call.1} parent=1 // pred_region
      %128 = dma.done [#allocation9], 32768
    $region49: #{tpu_custom_call.1} parent=1 // pred_fallthru
      _
    // Predicated region
    $region50: #{tpu_custom_call.1} parent=1 // pred_check
      _
    $region51: #{tpu_custom_call.1} parent=1 // pred_check_branch
      %130 = sbr.rel (0) target = $region53
    $region52: #{tpu_custom_call.1} parent=1 // pred_region
      %132 = dma.done [#allocation9], 32768
    $region53: #{tpu_custom_call.1} parent=1 // pred_fallthru
      _
    // Predicated region
    $region54: #{tpu_custom_call.1} parent=1 // pred_check
      _
    $region55: #{tpu_custom_call.1} parent=1 // pred_check_branch
      %134 = sbr.rel (0) target = $region57
    $region56: #{tpu_custom_call.1} parent=1 // pred_region
      %136 = dma.done [#allocation12], 32768
    $region57: #{tpu_custom_call.1} parent=1 // pred_fallthru
      _
    // Predicated region
    $region58: #{tpu_custom_call.1} parent=1 // pred_check
      _
    $region59: #{tpu_custom_call.1} parent=1 // pred_check_branch
      %138 = sbr.rel (0) target = $region61
    $region60: #{tpu_custom_call.1} parent=1 // pred_region
      %140 = dma.done [#allocation12], 32768
    $region61: #{tpu_custom_call.1} parent=1 // pred_fallthru
      _
    %v143 = vld [vmem:[#allocation2] sm:$0xff]
    %v144 = vld [vmem:[#allocation2 + $0x8] sm:$0xff]
    %v145 = vld [vmem:[#allocation2 + $0x10] sm:$0xff]
    %v146 = vld [vmem:[#allocation2 + $0x18] sm:$0xff]
    %v147 = vld [vmem:[#allocation2 + $0x20] sm:$0x3]
    %v148 = vld [vmem:[#allocation2 + $0x28] sm:$0x3]
    %v149 = vld [vmem:[#allocation2 + $0x30] sm:$0x3]
    %v150 = vld [vmem:[#allocation2 + $0x38] sm:$0x3]
    %v151 = vld [vmem:[#allocation8] sm:$0xff]
    %v152 = vld [vmem:[#allocation8 + $0x8] sm:$0xff]
    %v153 = vld [vmem:[#allocation8 + $0x10] sm:$0xff]
    %v154 = vld [vmem:[#allocation8 + $0x18] sm:$0xff]
    %v155 = vld [vmem:[#allocation8 + $0x20] sm:$0xff]
    %v156 = vld [vmem:[#allocation8 + $0x28] sm:$0xff]
    %v157 = vld [vmem:[#allocation8 + $0x30] sm:$0xff]
    %v158 = vld [vmem:[#allocation8 + $0x38] sm:$0xff]
    %v159 = vld [vmem:[#allocation8 + $0x40] sm:$0xff]
    %v160 = vld [vmem:[#allocation8 + $0x48] sm:$0xff]
    %v161 = vld [vmem:[#allocation8 + $0x50] sm:$0xff]
    %v162 = vld [vmem:[#allocation8 + $0x58] sm:$0xff]
    %v163 = vld [vmem:[#allocation8 + $0x60] sm:$0xff]
    %v164 = vld [vmem:[#allocation8 + $0x68] sm:$0xff]
    %v165 = vld [vmem:[#allocation8 + $0x70] sm:$0xff]
    %v166 = vld [vmem:[#allocation8 + $0x78] sm:$0xff]
    %v167 = vld [vmem:[#allocation8 + $0x80] sm:$0xff]
    %v168 = vld [vmem:[#allocation8 + $0x88] sm:$0xff]
    %v169 = vld [vmem:[#allocation8 + $0x90] sm:$0xff]
    %v170 = vld [vmem:[#allocation8 + $0x98] sm:$0xff]
    %v171 = vld [vmem:[#allocation8 + $0xa0] sm:$0xff]
    %v172 = vld [vmem:[#allocation8 + $0xa8] sm:$0xff]
    %v173 = vld [vmem:[#allocation8 + $0xb0] sm:$0xff]
    %v174 = vld [vmem:[#allocation8 + $0xb8] sm:$0xff]
    %v175 = vld [vmem:[#allocation8 + $0xc0] sm:$0xff]
    %v176 = vld [vmem:[#allocation8 + $0xc8] sm:$0xff]
    %v177 = vld [vmem:[#allocation8 + $0xd0] sm:$0xff]
    %v178 = vld [vmem:[#allocation8 + $0xd8] sm:$0xff]
    %v179 = vld [vmem:[#allocation8 + $0xe0] sm:$0xff]
    %v180 = vld [vmem:[#allocation8 + $0xe8] sm:$0xff]
    %v181 = vld [vmem:[#allocation8 + $0xf0] sm:$0xff]
    %v182 = vld [vmem:[#allocation8 + $0xf8] sm:$0xff]
    %v183 = vld [vmem:[#allocation8 + $0x100] sm:$0xff]
    %v184 = vld [vmem:[#allocation8 + $0x108] sm:$0xff]
    %v185 = vld [vmem:[#allocation8 + $0x110] sm:$0xff]
    %v186 = vld [vmem:[#allocation8 + $0x118] sm:$0xff]
    %v187 = vld [vmem:[#allocation8 + $0x120] sm:$0xff]
    %v188 = vld [vmem:[#allocation8 + $0x128] sm:$0xff]
    %v189 = vld [vmem:[#allocation8 + $0x130] sm:$0xff]
    %v190 = vld [vmem:[#allocation8 + $0x138] sm:$0xff]
    %v191 = vld [vmem:[#allocation8 + $0x140] sm:$0xff]
    %v192 = vld [vmem:[#allocation8 + $0x148] sm:$0xff]
    %v193 = vld [vmem:[#allocation8 + $0x150] sm:$0xff]
    %v194 = vld [vmem:[#allocation8 + $0x158] sm:$0xff]
    %v195 = vld [vmem:[#allocation8 + $0x160] sm:$0xff]
    %v196 = vld [vmem:[#allocation8 + $0x168] sm:$0xff]
    %v197 = vld [vmem:[#allocation8 + $0x170] sm:$0xff]
    %v198 = vld [vmem:[#allocation8 + $0x178] sm:$0xff]
    %v199 = vld [vmem:[#allocation8 + $0x180] sm:$0xff]
    %v200 = vld [vmem:[#allocation8 + $0x188] sm:$0xff]
    %v201 = vld [vmem:[#allocation8 + $0x190] sm:$0xff]
    %v202 = vld [vmem:[#allocation8 + $0x198] sm:$0xff]
    %v203 = vld [vmem:[#allocation8 + $0x1a0] sm:$0xff]
    %v204 = vld [vmem:[#allocation8 + $0x1a8] sm:$0xff]
    %v205 = vld [vmem:[#allocation8 + $0x1b0] sm:$0xff]
    %v206 = vld [vmem:[#allocation8 + $0x1b8] sm:$0xff]
    %v207 = vld [vmem:[#allocation8 + $0x1c0] sm:$0xff]
    %v208 = vld [vmem:[#allocation8 + $0x1c8] sm:$0xff]
    %v209 = vld [vmem:[#allocation8 + $0x1d0] sm:$0xff]
    %v210 = vld [vmem:[#allocation8 + $0x1d8] sm:$0xff]
    %v211 = vld [vmem:[#allocation8 + $0x1e0] sm:$0xff]
    %v212 = vld [vmem:[#allocation8 + $0x1e8] sm:$0xff]
    %v213 = vld [vmem:[#allocation8 + $0x1f0] sm:$0xff]
    %v214 = vld [vmem:[#allocation8 + $0x1f8] sm:$0xff]
    %v215 = vld [vmem:[#allocation8 + $0x200] sm:$0xff]
    %v216 = vld [vmem:[#allocation8 + $0x208] sm:$0xff]
    %v217 = vld [vmem:[#allocation8 + $0x210] sm:$0xff]
    %v218 = vld [vmem:[#allocation8 + $0x218] sm:$0xff]
    %v219 = vld [vmem:[#allocation8 + $0x220] sm:$0xff]
    %v220 = vld [vmem:[#allocation8 + $0x228] sm:$0xff]
    %v221 = vld [vmem:[#allocation8 + $0x230] sm:$0xff]
    %v222 = vld [vmem:[#allocation8 + $0x238] sm:$0xff]
    %v223 = vld [vmem:[#allocation8 + $0x240] sm:$0xff]
    %v224 = vld [vmem:[#allocation8 + $0x248] sm:$0xff]
    %v225 = vld [vmem:[#allocation8 + $0x250] sm:$0xff]
    %v226 = vld [vmem:[#allocation8 + $0x258] sm:$0xff]
    %v227 = vld [vmem:[#allocation8 + $0x260] sm:$0xff]
    %v228 = vld [vmem:[#allocation8 + $0x268] sm:$0xff]
    %v229 = vld [vmem:[#allocation8 + $0x270] sm:$0xff]
    %v230 = vld [vmem:[#allocation8 + $0x278] sm:$0xff]
    %v231 = vld [vmem:[#allocation8 + $0x280] sm:$0xff]
    %v232 = vld [vmem:[#allocation8 + $0x288] sm:$0xff]
    %v233 = vld [vmem:[#allocation8 + $0x290] sm:$0xff]
    %v234 = vld [vmem:[#allocation8 + $0x298] sm:$0xff]
    %v235 = vld [vmem:[#allocation8 + $0x2a0] sm:$0xff]
    %v236 = vld [vmem:[#allocation8 + $0x2a8] sm:$0xff]
    %v237 = vld [vmem:[#allocation8 + $0x2b0] sm:$0xff]
    %v238 = vld [vmem:[#allocation8 + $0x2b8] sm:$0xff]
    %v239 = vld [vmem:[#allocation8 + $0x2c0] sm:$0xff]
    %v240 = vld [vmem:[#allocation8 + $0x2c8] sm:$0xff]
    %v241 = vld [vmem:[#allocation8 + $0x2d0] sm:$0xff]
    %v242 = vld [vmem:[#allocation8 + $0x2d8] sm:$0xff]
    %v243 = vld [vmem:[#allocation8 + $0x2e0] sm:$0xff]
    %v244 = vld [vmem:[#allocation8 + $0x2e8] sm:$0xff]
    %v245 = vld [vmem:[#allocation8 + $0x2f0] sm:$0xff]
    %v246 = vld [vmem:[#allocation8 + $0x2f8] sm:$0xff]
    %v247 = vld [vmem:[#allocation8 + $0x300] sm:$0xff]
    %v248 = vld [vmem:[#allocation8 + $0x308] sm:$0xff]
    %v249 = vld [vmem:[#allocation8 + $0x310] sm:$0xff]
    %v250 = vld [vmem:[#allocation8 + $0x318] sm:$0xff]
    %v251 = vld [vmem:[#allocation8 + $0x320] sm:$0xff]
    %v252 = vld [vmem:[#allocation8 + $0x328] sm:$0xff]
    %v253 = vld [vmem:[#allocation8 + $0x330] sm:$0xff]
    %v254 = vld [vmem:[#allocation8 + $0x338] sm:$0xff]
    %v255 = vld [vmem:[#allocation8 + $0x340] sm:$0xff]
    %v256 = vld [vmem:[#allocation8 + $0x348] sm:$0xff]
    %v257 = vld [vmem:[#allocation8 + $0x350] sm:$0xff]
    %v258 = vld [vmem:[#allocation8 + $0x358] sm:$0xff]
    %v259 = vld [vmem:[#allocation8 + $0x360] sm:$0xff]
    %v260 = vld [vmem:[#allocation8 + $0x368] sm:$0xff]
    %v261 = vld [vmem:[#allocation8 + $0x370] sm:$0xff]
    %v262 = vld [vmem:[#allocation8 + $0x378] sm:$0xff]
    %v263 = vld [vmem:[#allocation8 + $0x380] sm:$0xff]
    %v264 = vld [vmem:[#allocation8 + $0x388] sm:$0xff]
    %v265 = vld [vmem:[#allocation8 + $0x390] sm:$0xff]
    %v266 = vld [vmem:[#allocation8 + $0x398] sm:$0xff]
    %v267 = vld [vmem:[#allocation8 + $0x3a0] sm:$0xff]
    %v268 = vld [vmem:[#allocation8 + $0x3a8] sm:$0xff]
    %v269 = vld [vmem:[#allocation8 + $0x3b0] sm:$0xff]
    %v270 = vld [vmem:[#allocation8 + $0x3b8] sm:$0xff]
    %v271 = vld [vmem:[#allocation8 + $0x3c0] sm:$0xff]
    %v272 = vld [vmem:[#allocation8 + $0x3c8] sm:$0xff]
    %v273 = vld [vmem:[#allocation8 + $0x3d0] sm:$0xff]
    %v274 = vld [vmem:[#allocation8 + $0x3d8] sm:$0xff]
    %v275 = vld [vmem:[#allocation8 + $0x3e0] sm:$0xff]
    %v276 = vld [vmem:[#allocation8 + $0x3e8] sm:$0xff]
    %v277 = vld [vmem:[#allocation8 + $0x3f0] sm:$0xff]
    %v278 = vld [vmem:[#allocation8 + $0x3f8] sm:$0xff]
    %v279 = vld [vmem:[#allocation8 + $0x400] sm:$0xff]
    %v280 = vld [vmem:[#allocation8 + $0x408] sm:$0xff]
    %v281 = vld [vmem:[#allocation8 + $0x410] sm:$0xff]
    %v282 = vld [vmem:[#allocation8 + $0x418] sm:$0xff]
    %v283 = vld [vmem:[#allocation8 + $0x420] sm:$0xff]
    %v284 = vld [vmem:[#allocation8 + $0x428] sm:$0xff]
    %v285 = vld [vmem:[#allocation8 + $0x430] sm:$0xff]
    %v286 = vld [vmem:[#allocation8 + $0x438] sm:$0xff]
    %v287 = vld [vmem:[#allocation8 + $0x440] sm:$0xff]
    %v288 = vld [vmem:[#allocation8 + $0x448] sm:$0xff]
    %v289 = vld [vmem:[#allocation8 + $0x450] sm:$0xff]
    %v290 = vld [vmem:[#allocation8 + $0x458] sm:$0xff]
    %v291 = vld [vmem:[#allocation8 + $0x460] sm:$0xff]
    %v292 = vld [vmem:[#allocation8 + $0x468] sm:$0xff]
    %v293 = vld [vmem:[#allocation8 + $0x470] sm:$0xff]
    %v294 = vld [vmem:[#allocation8 + $0x478] sm:$0xff]
    %v295 = vld [vmem:[#allocation8 + $0x480] sm:$0xff]
    %v296 = vld [vmem:[#allocation8 + $0x488] sm:$0xff]
    %v297 = vld [vmem:[#allocation8 + $0x490] sm:$0xff]
    %v298 = vld [vmem:[#allocation8 + $0x498] sm:$0xff]
    %v299 = vld [vmem:[#allocation8 + $0x4a0] sm:$0xff]
    %v300 = vld [vmem:[#allocation8 + $0x4a8] sm:$0xff]
    %v301 = vld [vmem:[#allocation8 + $0x4b0] sm:$0xff]
    %v302 = vld [vmem:[#allocation8 + $0x4b8] sm:$0xff]
    %v303 = vld [vmem:[#allocation8 + $0x4c0] sm:$0xff]
    %v304 = vld [vmem:[#allocation8 + $0x4c8] sm:$0xff]
    %v305 = vld [vmem:[#allocation8 + $0x4d0] sm:$0xff]
    %v306 = vld [vmem:[#allocation8 + $0x4d8] sm:$0xff]
    %v307 = vld [vmem:[#allocation8 + $0x4e0] sm:$0xff]
    %v308 = vld [vmem:[#allocation8 + $0x4e8] sm:$0xff]
    %v309 = vld [vmem:[#allocation8 + $0x4f0] sm:$0xff]
    %v310 = vld [vmem:[#allocation8 + $0x4f8] sm:$0xff]
    %v311 = vld [vmem:[#allocation8 + $0x500] sm:$0xff]
    %v312 = vld [vmem:[#allocation8 + $0x508] sm:$0xff]
    %v313 = vld [vmem:[#allocation8 + $0x510] sm:$0xff]
    %v314 = vld [vmem:[#allocation8 + $0x518] sm:$0xff]
    %v315 = vld [vmem:[#allocation8 + $0x520] sm:$0xff]
    %v316 = vld [vmem:[#allocation8 + $0x528] sm:$0xff]
    %v317 = vld [vmem:[#allocation8 + $0x530] sm:$0xff]
    %v318 = vld [vmem:[#allocation8 + $0x538] sm:$0xff]
    %v319 = vld [vmem:[#allocation8 + $0x540] sm:$0xff]
    %v320 = vld [vmem:[#allocation8 + $0x548] sm:$0xff]
    %v321 = vld [vmem:[#allocation8 + $0x550] sm:$0xff]
    %v322 = vld [vmem:[#allocation8 + $0x558] sm:$0xff]
    %v323 = vld [vmem:[#allocation8 + $0x560] sm:$0xff]
    %v324 = vld [vmem:[#allocation8 + $0x568] sm:$0xff]
    %v325 = vld [vmem:[#allocation8 + $0x570] sm:$0xff]
    %v326 = vld [vmem:[#allocation8 + $0x578] sm:$0xff]
    %v327 = vld [vmem:[#allocation8 + $0x580] sm:$0xff]
    %v328 = vld [vmem:[#allocation8 + $0x588] sm:$0xff]
    %v329 = vld [vmem:[#allocation8 + $0x590] sm:$0xff]
    %v330 = vld [vmem:[#allocation8 + $0x598] sm:$0xff]
    %v331 = vld [vmem:[#allocation8 + $0x5a0] sm:$0xff]
    %v332 = vld [vmem:[#allocation8 + $0x5a8] sm:$0xff]
    %v333 = vld [vmem:[#allocation8 + $0x5b0] sm:$0xff]
    %v334 = vld [vmem:[#allocation8 + $0x5b8] sm:$0xff]
    %v335 = vld [vmem:[#allocation8 + $0x5c0] sm:$0xff]
    %v336 = vld [vmem:[#allocation8 + $0x5c8] sm:$0xff]
    %v337 = vld [vmem:[#allocation8 + $0x5d0] sm:$0xff]
    %v338 = vld [vmem:[#allocation8 + $0x5d8] sm:$0xff]
    %v339 = vld [vmem:[#allocation8 + $0x5e0] sm:$0xff]
    %v340 = vld [vmem:[#allocation8 + $0x5e8] sm:$0xff]
    %v341 = vld [vmem:[#allocation8 + $0x5f0] sm:$0xff]
    %v342 = vld [vmem:[#allocation8 + $0x5f8] sm:$0xff]
    %v343 = vld [vmem:[#allocation8 + $0x600] sm:$0xff]
    %v344 = vld [vmem:[#allocation8 + $0x608] sm:$0xff]
    %v345 = vld [vmem:[#allocation8 + $0x610] sm:$0xff]
    %v346 = vld [vmem:[#allocation8 + $0x618] sm:$0xff]
    %v347 = vld [vmem:[#allocation8 + $0x620] sm:$0xff]
    %v348 = vld [vmem:[#allocation8 + $0x628] sm:$0xff]
    %v349 = vld [vmem:[#allocation8 + $0x630] sm:$0xff]
    %v350 = vld [vmem:[#allocation8 + $0x638] sm:$0xff]
    %v351 = vld [vmem:[#allocation8 + $0x640] sm:$0xff]
    %v352 = vld [vmem:[#allocation8 + $0x648] sm:$0xff]
    %v353 = vld [vmem:[#allocation8 + $0x650] sm:$0xff]
    %v354 = vld [vmem:[#allocation8 + $0x658] sm:$0xff]
    %v355 = vld [vmem:[#allocation8 + $0x660] sm:$0xff]
    %v356 = vld [vmem:[#allocation8 + $0x668] sm:$0xff]
    %v357 = vld [vmem:[#allocation8 + $0x670] sm:$0xff]
    %v358 = vld [vmem:[#allocation8 + $0x678] sm:$0xff]
    %v359 = vld [vmem:[#allocation8 + $0x680] sm:$0xff]
    %v360 = vld [vmem:[#allocation8 + $0x688] sm:$0xff]
    %v361 = vld [vmem:[#allocation8 + $0x690] sm:$0xff]
    %v362 = vld [vmem:[#allocation8 + $0x698] sm:$0xff]
    %v363 = vld [vmem:[#allocation8 + $0x6a0] sm:$0xff]
    %v364 = vld [vmem:[#allocation8 + $0x6a8] sm:$0xff]
    %v365 = vld [vmem:[#allocation8 + $0x6b0] sm:$0xff]
    %v366 = vld [vmem:[#allocation8 + $0x6b8] sm:$0xff]
    %v367 = vld [vmem:[#allocation8 + $0x6c0] sm:$0xff]
    %v368 = vld [vmem:[#allocation8 + $0x6c8] sm:$0xff]
    %v369 = vld [vmem:[#allocation8 + $0x6d0] sm:$0xff]
    %v370 = vld [vmem:[#allocation8 + $0x6d8] sm:$0xff]
    %v371 = vld [vmem:[#allocation8 + $0x6e0] sm:$0xff]
    %v372 = vld [vmem:[#allocation8 + $0x6e8] sm:$0xff]
    %v373 = vld [vmem:[#allocation8 + $0x6f0] sm:$0xff]
    %v374 = vld [vmem:[#allocation8 + $0x6f8] sm:$0xff]
    %v375 = vld [vmem:[#allocation8 + $0x700] sm:$0xff]
    %v376 = vld [vmem:[#allocation8 + $0x708] sm:$0xff]
    %v377 = vld [vmem:[#allocation8 + $0x710] sm:$0xff]
    %v378 = vld [vmem:[#allocation8 + $0x718] sm:$0xff]
    %v379 = vld [vmem:[#allocation8 + $0x720] sm:$0xff]
    %v380 = vld [vmem:[#allocation8 + $0x728] sm:$0xff]
    %v381 = vld [vmem:[#allocation8 + $0x730] sm:$0xff]
    %v382 = vld [vmem:[#allocation8 + $0x738] sm:$0xff]
    %v383 = vld [vmem:[#allocation8 + $0x740] sm:$0xff]
    %v384 = vld [vmem:[#allocation8 + $0x748] sm:$0xff]
    %v385 = vld [vmem:[#allocation8 + $0x750] sm:$0xff]
    %v386 = vld [vmem:[#allocation8 + $0x758] sm:$0xff]
    %v387 = vld [vmem:[#allocation8 + $0x760] sm:$0xff]
    %v388 = vld [vmem:[#allocation8 + $0x768] sm:$0xff]
    %v389 = vld [vmem:[#allocation8 + $0x770] sm:$0xff]
    %v390 = vld [vmem:[#allocation8 + $0x778] sm:$0xff]
    %v391 = vld [vmem:[#allocation8 + $0x780] sm:$0xff]
    %v392 = vld [vmem:[#allocation8 + $0x788] sm:$0xff]
    %v393 = vld [vmem:[#allocation8 + $0x790] sm:$0xff]
    %v394 = vld [vmem:[#allocation8 + $0x798] sm:$0xff]
    %v395 = vld [vmem:[#allocation8 + $0x7a0] sm:$0xff]
    %v396 = vld [vmem:[#allocation8 + $0x7a8] sm:$0xff]
    %v397 = vld [vmem:[#allocation8 + $0x7b0] sm:$0xff]
    %v398 = vld [vmem:[#allocation8 + $0x7b8] sm:$0xff]
    %v399 = vld [vmem:[#allocation8 + $0x7c0] sm:$0xff]
    %v400 = vld [vmem:[#allocation8 + $0x7c8] sm:$0xff]
    %v401 = vld [vmem:[#allocation8 + $0x7d0] sm:$0xff]
    %v402 = vld [vmem:[#allocation8 + $0x7d8] sm:$0xff]
    %v403 = vld [vmem:[#allocation8 + $0x7e0] sm:$0xff]
    %v404 = vld [vmem:[#allocation8 + $0x7e8] sm:$0xff]
    %v405 = vld [vmem:[#allocation8 + $0x7f0] sm:$0xff]
    %v406 = vld [vmem:[#allocation8 + $0x7f8] sm:$0xff]
    %407 = vmatpush.msra.mxu0 %v211
    %408 = vmatpush.msra.mxu0 %v207
    %409 = vmatpush.msra.mxu0 %v203
    %410 = vmatpush.msra.mxu0 %v199
    %411 = vmatpush.msra.mxu0 %v195
    %412 = vmatpush.msra.mxu0 %v191
    %413 = vmatpush.msra.mxu0 %v187
    %414 = vmatpush.msra.mxu0 %v183
    %415 = vmatpush.msra.mxu0 %v179
    %416 = vmatpush.msra.mxu0 %v175
    %417 = vmatpush.msra.mxu0 %v171
    %418 = vmatpush.msra.mxu0 %v167
    %419 = vmatpush.msra.mxu0 %v163
    %420 = vmatpush.msra.mxu0 %v159
    %421 = vmatpush.msra.mxu0 %v155
    %422 = vmatpush.msra.mxu0 %v151
    %423 = vmatmul.f32.gmra.mxu0 %v143
    %v424 = vpop.f32.mrf.mxu0
    %v425 = vadd.f32 0.0, %v424
    %426 = vmatmul.f32.gmra.mxu0 %v147
    %v427 = vpop.f32.mrf.mxu0
    %v428 = vadd.f32 0.0, %v427
    %429 = vdwg.mxu0
    %430 = vmatpush.msra.mxu0 %v275
    %431 = vmatpush.msra.mxu0 %v271
    %432 = vmatpush.msra.mxu0 %v267
    %433 = vmatpush.msra.mxu0 %v263
    %434 = vmatpush.msra.mxu0 %v259
    %435 = vmatpush.msra.mxu0 %v255
    %436 = vmatpush.msra.mxu0 %v251
    %437 = vmatpush.msra.mxu0 %v247
    %438 = vmatpush.msra.mxu0 %v243
    %439 = vmatpush.msra.mxu0 %v239
    %440 = vmatpush.msra.mxu0 %v235
    %441 = vmatpush.msra.mxu0 %v231
    %442 = vmatpush.msra.mxu0 %v227
    %443 = vmatpush.msra.mxu0 %v223
    %444 = vmatpush.msra.mxu0 %v219
    %445 = vmatpush.msra.mxu0 %v215
    %446 = vmatmul.f32.gmra.mxu0 %v144
    %v447 = vpop.f32.mrf.mxu0
    %v448 = vadd.f32 %v425, %v447
    %449 = vmatmul.f32.gmra.mxu0 %v148
    %v450 = vpop.f32.mrf.mxu0
    %v451 = vadd.f32 %v428, %v450
    %452 = vdwg.mxu0
    %453 = vmatpush.msra.mxu0 %v339
    %454 = vmatpush.msra.mxu0 %v335
    %455 = vmatpush.msra.mxu0 %v331
    %456 = vmatpush.msra.mxu0 %v327
    %457 = vmatpush.msra.mxu0 %v323
    %458 = vmatpush.msra.mxu0 %v319
    %459 = vmatpush.msra.mxu0 %v315
    %460 = vmatpush.msra.mxu0 %v311
    %461 = vmatpush.msra.mxu0 %v307
    %462 = vmatpush.msra.mxu0 %v303
    %463 = vmatpush.msra.mxu0 %v299
    %464 = vmatpush.msra.mxu0 %v295
    %465 = vmatpush.msra.mxu0 %v291
    %466 = vmatpush.msra.mxu0 %v287
    %467 = vmatpush.msra.mxu0 %v283
    %468 = vmatpush.msra.mxu0 %v279
    %469 = vmatmul.f32.gmra.mxu0 %v145
    %v470 = vpop.f32.mrf.mxu0
    %v471 = vadd.f32 %v448, %v470
    %472 = vmatmul.f32.gmra.mxu0 %v149
    %v473 = vpop.f32.mrf.mxu0
    %v474 = vadd.f32 %v451, %v473
    %475 = vdwg.mxu0
    %476 = vmatpush.msra.mxu0 %v403
    %477 = vmatpush.msra.mxu0 %v399
    %478 = vmatpush.msra.mxu0 %v395
    %479 = vmatpush.msra.mxu0 %v391
    %480 = vmatpush.msra.mxu0 %v387
    %481 = vmatpush.msra.mxu0 %v383
    %482 = vmatpush.msra.mxu0 %v379
    %483 = vmatpush.msra.mxu0 %v375
    %484 = vmatpush.msra.mxu0 %v371
    %485 = vmatpush.msra.mxu0 %v367
    %486 = vmatpush.msra.mxu0 %v363
    %487 = vmatpush.msra.mxu0 %v359
    %488 = vmatpush.msra.mxu0 %v355
    %489 = vmatpush.msra.mxu0 %v351
    %490 = vmatpush.msra.mxu0 %v347
    %491 = vmatpush.msra.mxu0 %v343
    %492 = vmatmul.f32.gmra.mxu0 %v146
    %v493 = vpop.f32.mrf.mxu0
    %v494 = vadd.f32 %v471, %v493
    %495 = vmatmul.f32.gmra.mxu0 %v150
    %v496 = vpop.f32.mrf.mxu0
    %v497 = vadd.f32 %v474, %v496
    %498 = vdwg.mxu0
    %499 = vmatpush.msra.mxu0 %v212
    %500 = vmatpush.msra.mxu0 %v208
    %501 = vmatpush.msra.mxu0 %v204
    %502 = vmatpush.msra.mxu0 %v200
    %503 = vmatpush.msra.mxu0 %v196
    %504 = vmatpush.msra.mxu0 %v192
    %505 = vmatpush.msra.mxu0 %v188
    %506 = vmatpush.msra.mxu0 %v184
    %507 = vmatpush.msra.mxu0 %v180
    %508 = vmatpush.msra.mxu0 %v176
    %509 = vmatpush.msra.mxu0 %v172
    %510 = vmatpush.msra.mxu0 %v168
    %511 = vmatpush.msra.mxu0 %v164
    %512 = vmatpush.msra.mxu0 %v160
    %513 = vmatpush.msra.mxu0 %v156
    %514 = vmatpush.msra.mxu0 %v152
    %515 = vmatmul.f32.gmra.mxu0 %v143
    %v516 = vpop.f32.mrf.mxu0
    %v517 = vadd.f32 0.0, %v516
    %518 = vmatmul.f32.gmra.mxu0 %v147
    %v519 = vpop.f32.mrf.mxu0
    %v520 = vadd.f32 0.0, %v519
    %521 = vdwg.mxu0
    %522 = vmatpush.msra.mxu0 %v276
    %523 = vmatpush.msra.mxu0 %v272
    %524 = vmatpush.msra.mxu0 %v268
    %525 = vmatpush.msra.mxu0 %v264
    %526 = vmatpush.msra.mxu0 %v260
    %527 = vmatpush.msra.mxu0 %v256
    %528 = vmatpush.msra.mxu0 %v252
    %529 = vmatpush.msra.mxu0 %v248
    %530 = vmatpush.msra.mxu0 %v244
    %531 = vmatpush.msra.mxu0 %v240
    %532 = vmatpush.msra.mxu0 %v236
    %533 = vmatpush.msra.mxu0 %v232
    %534 = vmatpush.msra.mxu0 %v228
    %535 = vmatpush.msra.mxu0 %v224
    %536 = vmatpush.msra.mxu0 %v220
    %537 = vmatpush.msra.mxu0 %v216
    %538 = vmatmul.f32.gmra.mxu0 %v144
    %v539 = vpop.f32.mrf.mxu0
    %v540 = vadd.f32 %v517, %v539
    %541 = vmatmul.f32.gmra.mxu0 %v148
    %v542 = vpop.f32.mrf.mxu0
    %v543 = vadd.f32 %v520, %v542
    %544 = vdwg.mxu0
    %545 = vmatpush.msra.mxu0 %v340
    %546 = vmatpush.msra.mxu0 %v336
    %547 = vmatpush.msra.mxu0 %v332
    %548 = vmatpush.msra.mxu0 %v328
    %549 = vmatpush.msra.mxu0 %v324
    %550 = vmatpush.msra.mxu0 %v320
    %551 = vmatpush.msra.mxu0 %v316
    %552 = vmatpush.msra.mxu0 %v312
    %553 = vmatpush.msra.mxu0 %v308
    %554 = vmatpush.msra.mxu0 %v304
    %555 = vmatpush.msra.mxu0 %v300
    %556 = vmatpush.msra.mxu0 %v296
    %557 = vmatpush.msra.mxu0 %v292
    %558 = vmatpush.msra.mxu0 %v288
    %559 = vmatpush.msra.mxu0 %v284
    %560 = vmatpush.msra.mxu0 %v280
    %561 = vmatmul.f32.gmra.mxu0 %v145
    %v562 = vpop.f32.mrf.mxu0
    %v563 = vadd.f32 %v540, %v562
    %564 = vmatmul.f32.gmra.mxu0 %v149
    %v565 = vpop.f32.mrf.mxu0
    %v566 = vadd.f32 %v543, %v565
    %567 = vdwg.mxu0
    %568 = vmatpush.msra.mxu0 %v404
    %569 = vmatpush.msra.mxu0 %v400
    %570 = vmatpush.msra.mxu0 %v396
    %571 = vmatpush.msra.mxu0 %v392
    %572 = vmatpush.msra.mxu0 %v388
    %573 = vmatpush.msra.mxu0 %v384
    %574 = vmatpush.msra.mxu0 %v380
    %575 = vmatpush.msra.mxu0 %v376
    %576 = vmatpush.msra.mxu0 %v372
    %577 = vmatpush.msra.mxu0 %v368
    %578 = vmatpush.msra.mxu0 %v364
    %579 = vmatpush.msra.mxu0 %v360
    %580 = vmatpush.msra.mxu0 %v356
    %581 = vmatpush.msra.mxu0 %v352
    %582 = vmatpush.msra.mxu0 %v348
    %583 = vmatpush.msra.mxu0 %v344
    %584 = vmatmul.f32.gmra.mxu0 %v146
    %v585 = vpop.f32.mrf.mxu0
    %v586 = vadd.f32 %v563, %v585
    %587 = vmatmul.f32.gmra.mxu0 %v150
    %v588 = vpop.f32.mrf.mxu0
    %v589 = vadd.f32 %v566, %v588
    %590 = vdwg.mxu0
    %591 = vmatpush.msra.mxu0 %v213
    %592 = vmatpush.msra.mxu0 %v209
    %593 = vmatpush.msra.mxu0 %v205
    %594 = vmatpush.msra.mxu0 %v201
    %595 = vmatpush.msra.mxu0 %v197
    %596 = vmatpush.msra.mxu0 %v193
    %597 = vmatpush.msra.mxu0 %v189
    %598 = vmatpush.msra.mxu0 %v185
    %599 = vmatpush.msra.mxu0 %v181
    %600 = vmatpush.msra.mxu0 %v177
    %601 = vmatpush.msra.mxu0 %v173
    %602 = vmatpush.msra.mxu0 %v169
    %603 = vmatpush.msra.mxu0 %v165
    %604 = vmatpush.msra.mxu0 %v161
    %605 = vmatpush.msra.mxu0 %v157
    %606 = vmatpush.msra.mxu0 %v153
    %607 = vmatmul.f32.gmra.mxu0 %v143
    %v608 = vpop.f32.mrf.mxu0
    %v609 = vadd.f32 0.0, %v608
    %610 = vmatmul.f32.gmra.mxu0 %v147
    %v611 = vpop.f32.mrf.mxu0
    %v612 = vadd.f32 0.0, %v611
    %613 = vdwg.mxu0
    %614 = vmatpush.msra.mxu0 %v277
    %615 = vmatpush.msra.mxu0 %v273
    %616 = vmatpush.msra.mxu0 %v269
    %617 = vmatpush.msra.mxu0 %v265
    %618 = vmatpush.msra.mxu0 %v261
    %619 = vmatpush.msra.mxu0 %v257
    %620 = vmatpush.msra.mxu0 %v253
    %621 = vmatpush.msra.mxu0 %v249
    %622 = vmatpush.msra.mxu0 %v245
    %623 = vmatpush.msra.mxu0 %v241
    %624 = vmatpush.msra.mxu0 %v237
    %625 = vmatpush.msra.mxu0 %v233
    %626 = vmatpush.msra.mxu0 %v229
    %627 = vmatpush.msra.mxu0 %v225
    %628 = vmatpush.msra.mxu0 %v221
    %629 = vmatpush.msra.mxu0 %v217
    %630 = vmatmul.f32.gmra.mxu0 %v144
    %v631 = vpop.f32.mrf.mxu0
    %v632 = vadd.f32 %v609, %v631
    %633 = vmatmul.f32.gmra.mxu0 %v148
    %v634 = vpop.f32.mrf.mxu0
    %v635 = vadd.f32 %v612, %v634
    %636 = vdwg.mxu0
    %637 = vmatpush.msra.mxu0 %v341
    %638 = vmatpush.msra.mxu0 %v337
    %639 = vmatpush.msra.mxu0 %v333
    %640 = vmatpush.msra.mxu0 %v329
    %641 = vmatpush.msra.mxu0 %v325
    %642 = vmatpush.msra.mxu0 %v321
    %643 = vmatpush.msra.mxu0 %v317
    %644 = vmatpush.msra.mxu0 %v313
    %645 = vmatpush.msra.mxu0 %v309
    %646 = vmatpush.msra.mxu0 %v305
    %647 = vmatpush.msra.mxu0 %v301
    %648 = vmatpush.msra.mxu0 %v297
    %649 = vmatpush.msra.mxu0 %v293
    %650 = vmatpush.msra.mxu0 %v289
    %651 = vmatpush.msra.mxu0 %v285
    %652 = vmatpush.msra.mxu0 %v281
    %653 = vmatmul.f32.gmra.mxu0 %v145
    %v654 = vpop.f32.mrf.mxu0
    %v655 = vadd.f32 %v632, %v654
    %656 = vmatmul.f32.gmra.mxu0 %v149
    %v657 = vpop.f32.mrf.mxu0
    %v658 = vadd.f32 %v635, %v657
    %659 = vdwg.mxu0
    %660 = vmatpush.msra.mxu0 %v405
    %661 = vmatpush.msra.mxu0 %v401
    %662 = vmatpush.msra.mxu0 %v397
    %663 = vmatpush.msra.mxu0 %v393
    %664 = vmatpush.msra.mxu0 %v389
    %665 = vmatpush.msra.mxu0 %v385
    %666 = vmatpush.msra.mxu0 %v381
    %667 = vmatpush.msra.mxu0 %v377
    %668 = vmatpush.msra.mxu0 %v373
    %669 = vmatpush.msra.mxu0 %v369
    %670 = vmatpush.msra.mxu0 %v365
    %671 = vmatpush.msra.mxu0 %v361
    %672 = vmatpush.msra.mxu0 %v357
    %673 = vmatpush.msra.mxu0 %v353
    %674 = vmatpush.msra.mxu0 %v349
    %675 = vmatpush.msra.mxu0 %v345
    %676 = vmatmul.f32.gmra.mxu0 %v146
    %v677 = vpop.f32.mrf.mxu0
    %v678 = vadd.f32 %v655, %v677
    %679 = vmatmul.f32.gmra.mxu0 %v150
    %v680 = vpop.f32.mrf.mxu0
    %v681 = vadd.f32 %v658, %v680
    %682 = vdwg.mxu0
    %683 = vmatpush.msra.mxu0 %v214
    %684 = vmatpush.msra.mxu0 %v210
    %685 = vmatpush.msra.mxu0 %v206
    %686 = vmatpush.msra.mxu0 %v202
    %687 = vmatpush.msra.mxu0 %v198
    %688 = vmatpush.msra.mxu0 %v194
    %689 = vmatpush.msra.mxu0 %v190
    %690 = vmatpush.msra.mxu0 %v186
    %691 = vmatpush.msra.mxu0 %v182
    %692 = vmatpush.msra.mxu0 %v178
    %693 = vmatpush.msra.mxu0 %v174
    %694 = vmatpush.msra.mxu0 %v170
    %695 = vmatpush.msra.mxu0 %v166
    %696 = vmatpush.msra.mxu0 %v162
    %697 = vmatpush.msra.mxu0 %v158
    %698 = vmatpush.msra.mxu0 %v154
    %699 = vmatmul.f32.gmra.mxu0 %v143
    %v700 = vpop.f32.mrf.mxu0
    %v701 = vadd.f32 0.0, %v700
    %702 = vmatmul.f32.gmra.mxu0 %v147
    %v703 = vpop.f32.mrf.mxu0
    %v704 = vadd.f32 0.0, %v703
    %705 = vdwg.mxu0
    %706 = vmatpush.msra.mxu0 %v278
    %707 = vmatpush.msra.mxu0 %v274
    %708 = vmatpush.msra.mxu0 %v270
    %709 = vmatpush.msra.mxu0 %v266
    %710 = vmatpush.msra.mxu0 %v262
    %711 = vmatpush.msra.mxu0 %v258
    %712 = vmatpush.msra.mxu0 %v254
    %713 = vmatpush.msra.mxu0 %v250
    %714 = vmatpush.msra.mxu0 %v246
    %715 = vmatpush.msra.mxu0 %v242
    %716 = vmatpush.msra.mxu0 %v238
    %717 = vmatpush.msra.mxu0 %v234
    %718 = vmatpush.msra.mxu0 %v230
    %719 = vmatpush.msra.mxu0 %v226
    %720 = vmatpush.msra.mxu0 %v222
    %721 = vmatpush.msra.mxu0 %v218
    %722 = vmatmul.f32.gmra.mxu0 %v144
    %v723 = vpop.f32.mrf.mxu0
    %v724 = vadd.f32 %v701, %v723
    %725 = vmatmul.f32.gmra.mxu0 %v148
    %v726 = vpop.f32.mrf.mxu0
    %v727 = vadd.f32 %v704, %v726
    %728 = vdwg.mxu0
    %729 = vmatpush.msra.mxu0 %v342
    %730 = vmatpush.msra.mxu0 %v338
    %731 = vmatpush.msra.mxu0 %v334
    %732 = vmatpush.msra.mxu0 %v330
    %733 = vmatpush.msra.mxu0 %v326
    %734 = vmatpush.msra.mxu0 %v322
    %735 = vmatpush.msra.mxu0 %v318
    %736 = vmatpush.msra.mxu0 %v314
    %737 = vmatpush.msra.mxu0 %v310
    %738 = vmatpush.msra.mxu0 %v306
    %739 = vmatpush.msra.mxu0 %v302
    %740 = vmatpush.msra.mxu0 %v298
    %741 = vmatpush.msra.mxu0 %v294
    %742 = vmatpush.msra.mxu0 %v290
    %743 = vmatpush.msra.mxu0 %v286
    %744 = vmatpush.msra.mxu0 %v282
    %745 = vmatmul.f32.gmra.mxu0 %v145
    %v746 = vpop.f32.mrf.mxu0
    %v747 = vadd.f32 %v724, %v746
    %748 = vmatmul.f32.gmra.mxu0 %v149
    %v749 = vpop.f32.mrf.mxu0
    %v750 = vadd.f32 %v727, %v749
    %751 = vdwg.mxu0
    %752 = vmatpush.msra.mxu0 %v406
    %753 = vmatpush.msra.mxu0 %v402
    %754 = vmatpush.msra.mxu0 %v398
    %755 = vmatpush.msra.mxu0 %v394
    %756 = vmatpush.msra.mxu0 %v390
    %757 = vmatpush.msra.mxu0 %v386
    %758 = vmatpush.msra.mxu0 %v382
    %759 = vmatpush.msra.mxu0 %v378
    %760 = vmatpush.msra.mxu0 %v374
    %761 = vmatpush.msra.mxu0 %v370
    %762 = vmatpush.msra.mxu0 %v366
    %763 = vmatpush.msra.mxu0 %v362
    %764 = vmatpush.msra.mxu0 %v358
    %765 = vmatpush.msra.mxu0 %v354
    %766 = vmatpush.msra.mxu0 %v350
    %767 = vmatpush.msra.mxu0 %v346
    %768 = vmatmul.f32.gmra.mxu0 %v146
    %v769 = vpop.f32.mrf.mxu0
    %v770 = vadd.f32 %v747, %v769
    %771 = vmatmul.f32.gmra.mxu0 %v150
    %v772 = vpop.f32.mrf.mxu0
    %v773 = vadd.f32 %v750, %v772
    %774 = vdwg.mxu0
    %v775 = vld [vmem:[#allocation5] sm:$0xff]
    %v776 = vld [vmem:[#allocation5 + $0x8] sm:$0xff]
    %v777 = vld [vmem:[#allocation5 + $0x10] sm:$0xff]
    %v778 = vld [vmem:[#allocation5 + $0x18] sm:$0xff]
    %v779 = vld [vmem:[#allocation5 + $0x20] sm:$0xff]
    %v780 = vld [vmem:[#allocation5 + $0x28] sm:$0xff]
    %v781 = vld [vmem:[#allocation5 + $0x30] sm:$0xff]
    %v782 = vld [vmem:[#allocation5 + $0x38] sm:$0xff]
    %v783 = vld [vmem:[#allocation5 + $0x40] sm:$0xf]
    %v784 = vld [vmem:[#allocation5 + $0x48] sm:$0xf]
    %v785 = vld [vmem:[#allocation5 + $0x50] sm:$0xf]
    %v786 = vld [vmem:[#allocation5 + $0x58] sm:$0xf]
    %v787 = vld [vmem:[#allocation10] sm:$0xff]
    %v788 = vld [vmem:[#allocation10 + $0x8] sm:$0xff]
    %v789 = vld [vmem:[#allocation10 + $0x10] sm:$0xff]
    %v790 = vld [vmem:[#allocation10 + $0x18] sm:$0xff]
    %v791 = vld [vmem:[#allocation10 + $0x20] sm:$0xff]
    %v792 = vld [vmem:[#allocation10 + $0x28] sm:$0xff]
    %v793 = vld [vmem:[#allocation10 + $0x30] sm:$0xff]
    %v794 = vld [vmem:[#allocation10 + $0x38] sm:$0xff]
    %v795 = vld [vmem:[#allocation10 + $0x40] sm:$0xff]
    %v796 = vld [vmem:[#allocation10 + $0x48] sm:$0xff]
    %v797 = vld [vmem:[#allocation10 + $0x50] sm:$0xff]
    %v798 = vld [vmem:[#allocation10 + $0x58] sm:$0xff]
    %v799 = vld [vmem:[#allocation10 + $0x60] sm:$0xff]
    %v800 = vld [vmem:[#allocation10 + $0x68] sm:$0xff]
    %v801 = vld [vmem:[#allocation10 + $0x70] sm:$0xff]
    %v802 = vld [vmem:[#allocation10 + $0x78] sm:$0xff]
    %v803 = vld [vmem:[#allocation10 + $0x80] sm:$0xff]
    %v804 = vld [vmem:[#allocation10 + $0x88] sm:$0xff]
    %v805 = vld [vmem:[#allocation10 + $0x90] sm:$0xff]
    %v806 = vld [vmem:[#allocation10 + $0x98] sm:$0xff]
    %v807 = vld [vmem:[#allocation10 + $0xa0] sm:$0xff]
    %v808 = vld [vmem:[#allocation10 + $0xa8] sm:$0xff]
    %v809 = vld [vmem:[#allocation10 + $0xb0] sm:$0xff]
    %v810 = vld [vmem:[#allocation10 + $0xb8] sm:$0xff]
    %v811 = vld [vmem:[#allocation10 + $0xc0] sm:$0xff]
    %v812 = vld [vmem:[#allocation10 + $0xc8] sm:$0xff]
    %v813 = vld [vmem:[#allocation10 + $0xd0] sm:$0xff]
    %v814 = vld [vmem:[#allocation10 + $0xd8] sm:$0xff]
    %v815 = vld [vmem:[#allocation10 + $0xe0] sm:$0xff]
    %v816 = vld [vmem:[#allocation10 + $0xe8] sm:$0xff]
    %v817 = vld [vmem:[#allocation10 + $0xf0] sm:$0xff]
    %v818 = vld [vmem:[#allocation10 + $0xf8] sm:$0xff]
    %v819 = vld [vmem:[#allocation10 + $0x100] sm:$0xff]
    %v820 = vld [vmem:[#allocation10 + $0x108] sm:$0xff]
    %v821 = vld [vmem:[#allocation10 + $0x110] sm:$0xff]
    %v822 = vld [vmem:[#allocation10 + $0x118] sm:$0xff]
    %v823 = vld [vmem:[#allocation10 + $0x120] sm:$0xff]
    %v824 = vld [vmem:[#allocation10 + $0x128] sm:$0xff]
    %v825 = vld [vmem:[#allocation10 + $0x130] sm:$0xff]
    %v826 = vld [vmem:[#allocation10 + $0x138] sm:$0xff]
    %v827 = vld [vmem:[#allocation10 + $0x140] sm:$0xff]
    %v828 = vld [vmem:[#allocation10 + $0x148] sm:$0xff]
    %v829 = vld [vmem:[#allocation10 + $0x150] sm:$0xff]
    %v830 = vld [vmem:[#allocation10 + $0x158] sm:$0xff]
    %v831 = vld [vmem:[#allocation10 + $0x160] sm:$0xff]
    %v832 = vld [vmem:[#allocation10 + $0x168] sm:$0xff]
    %v833 = vld [vmem:[#allocation10 + $0x170] sm:$0xff]
    %v834 = vld [vmem:[#allocation10 + $0x178] sm:$0xff]
    %v835 = vld [vmem:[#allocation10 + $0x180] sm:$0xff]
    %v836 = vld [vmem:[#allocation10 + $0x188] sm:$0xff]
    %v837 = vld [vmem:[#allocation10 + $0x190] sm:$0xff]
    %v838 = vld [vmem:[#allocation10 + $0x198] sm:$0xff]
    %v839 = vld [vmem:[#allocation10 + $0x1a0] sm:$0xff]
    %v840 = vld [vmem:[#allocation10 + $0x1a8] sm:$0xff]
    %v841 = vld [vmem:[#allocation10 + $0x1b0] sm:$0xff]
    %v842 = vld [vmem:[#allocation10 + $0x1b8] sm:$0xff]
    %v843 = vld [vmem:[#allocation10 + $0x1c0] sm:$0xff]
    %v844 = vld [vmem:[#allocation10 + $0x1c8] sm:$0xff]
    %v845 = vld [vmem:[#allocation10 + $0x1d0] sm:$0xff]
    %v846 = vld [vmem:[#allocation10 + $0x1d8] sm:$0xff]
    %v847 = vld [vmem:[#allocation10 + $0x1e0] sm:$0xff]
    %v848 = vld [vmem:[#allocation10 + $0x1e8] sm:$0xff]
    %v849 = vld [vmem:[#allocation10 + $0x1f0] sm:$0xff]
    %v850 = vld [vmem:[#allocation10 + $0x1f8] sm:$0xff]
    %v851 = vld [vmem:[#allocation10 + $0x200] sm:$0xff]
    %v852 = vld [vmem:[#allocation10 + $0x208] sm:$0xff]
    %v853 = vld [vmem:[#allocation10 + $0x210] sm:$0xff]
    %v854 = vld [vmem:[#allocation10 + $0x218] sm:$0xff]
    %v855 = vld [vmem:[#allocation10 + $0x220] sm:$0xff]
    %v856 = vld [vmem:[#allocation10 + $0x228] sm:$0xff]
    %v857 = vld [vmem:[#allocation10 + $0x230] sm:$0xff]
    %v858 = vld [vmem:[#allocation10 + $0x238] sm:$0xff]
    %v859 = vld [vmem:[#allocation10 + $0x240] sm:$0xff]
    %v860 = vld [vmem:[#allocation10 + $0x248] sm:$0xff]
    %v861 = vld [vmem:[#allocation10 + $0x250] sm:$0xff]
    %v862 = vld [vmem:[#allocation10 + $0x258] sm:$0xff]
    %v863 = vld [vmem:[#allocation10 + $0x260] sm:$0xff]
    %v864 = vld [vmem:[#allocation10 + $0x268] sm:$0xff]
    %v865 = vld [vmem:[#allocation10 + $0x270] sm:$0xff]
    %v866 = vld [vmem:[#allocation10 + $0x278] sm:$0xff]
    %v867 = vld [vmem:[#allocation10 + $0x280] sm:$0xff]
    %v868 = vld [vmem:[#allocation10 + $0x288] sm:$0xff]
    %v869 = vld [vmem:[#allocation10 + $0x290] sm:$0xff]
    %v870 = vld [vmem:[#allocation10 + $0x298] sm:$0xff]
    %v871 = vld [vmem:[#allocation10 + $0x2a0] sm:$0xff]
    %v872 = vld [vmem:[#allocation10 + $0x2a8] sm:$0xff]
    %v873 = vld [vmem:[#allocation10 + $0x2b0] sm:$0xff]
    %v874 = vld [vmem:[#allocation10 + $0x2b8] sm:$0xff]
    %v875 = vld [vmem:[#allocation10 + $0x2c0] sm:$0xff]
    %v876 = vld [vmem:[#allocation10 + $0x2c8] sm:$0xff]
    %v877 = vld [vmem:[#allocation10 + $0x2d0] sm:$0xff]
    %v878 = vld [vmem:[#allocation10 + $0x2d8] sm:$0xff]
    %v879 = vld [vmem:[#allocation10 + $0x2e0] sm:$0xff]
    %v880 = vld [vmem:[#allocation10 + $0x2e8] sm:$0xff]
    %v881 = vld [vmem:[#allocation10 + $0x2f0] sm:$0xff]
    %v882 = vld [vmem:[#allocation10 + $0x2f8] sm:$0xff]
    %v883 = vld [vmem:[#allocation10 + $0x300] sm:$0xff]
    %v884 = vld [vmem:[#allocation10 + $0x308] sm:$0xff]
    %v885 = vld [vmem:[#allocation10 + $0x310] sm:$0xff]
    %v886 = vld [vmem:[#allocation10 + $0x318] sm:$0xff]
    %v887 = vld [vmem:[#allocation10 + $0x320] sm:$0xff]
    %v888 = vld [vmem:[#allocation10 + $0x328] sm:$0xff]
    %v889 = vld [vmem:[#allocation10 + $0x330] sm:$0xff]
    %v890 = vld [vmem:[#allocation10 + $0x338] sm:$0xff]
    %v891 = vld [vmem:[#allocation10 + $0x340] sm:$0xff]
    %v892 = vld [vmem:[#allocation10 + $0x348] sm:$0xff]
    %v893 = vld [vmem:[#allocation10 + $0x350] sm:$0xff]
    %v894 = vld [vmem:[#allocation10 + $0x358] sm:$0xff]
    %v895 = vld [vmem:[#allocation10 + $0x360] sm:$0xff]
    %v896 = vld [vmem:[#allocation10 + $0x368] sm:$0xff]
    %v897 = vld [vmem:[#allocation10 + $0x370] sm:$0xff]
    %v898 = vld [vmem:[#allocation10 + $0x378] sm:$0xff]
    %v899 = vld [vmem:[#allocation10 + $0x380] sm:$0xff]
    %v900 = vld [vmem:[#allocation10 + $0x388] sm:$0xff]
    %v901 = vld [vmem:[#allocation10 + $0x390] sm:$0xff]
    %v902 = vld [vmem:[#allocation10 + $0x398] sm:$0xff]
    %v903 = vld [vmem:[#allocation10 + $0x3a0] sm:$0xff]
    %v904 = vld [vmem:[#allocation10 + $0x3a8] sm:$0xff]
    %v905 = vld [vmem:[#allocation10 + $0x3b0] sm:$0xff]
    %v906 = vld [vmem:[#allocation10 + $0x3b8] sm:$0xff]
    %v907 = vld [vmem:[#allocation10 + $0x3c0] sm:$0xff]
    %v908 = vld [vmem:[#allocation10 + $0x3c8] sm:$0xff]
    %v909 = vld [vmem:[#allocation10 + $0x3d0] sm:$0xff]
    %v910 = vld [vmem:[#allocation10 + $0x3d8] sm:$0xff]
    %v911 = vld [vmem:[#allocation10 + $0x3e0] sm:$0xff]
    %v912 = vld [vmem:[#allocation10 + $0x3e8] sm:$0xff]
    %v913 = vld [vmem:[#allocation10 + $0x3f0] sm:$0xff]
    %v914 = vld [vmem:[#allocation10 + $0x3f8] sm:$0xff]
    %v915 = vld [vmem:[#allocation10 + $0x400] sm:$0xff]
    %v916 = vld [vmem:[#allocation10 + $0x408] sm:$0xff]
    %v917 = vld [vmem:[#allocation10 + $0x410] sm:$0xff]
    %v918 = vld [vmem:[#allocation10 + $0x418] sm:$0xff]
    %v919 = vld [vmem:[#allocation10 + $0x420] sm:$0xff]
    %v920 = vld [vmem:[#allocation10 + $0x428] sm:$0xff]
    %v921 = vld [vmem:[#allocation10 + $0x430] sm:$0xff]
    %v922 = vld [vmem:[#allocation10 + $0x438] sm:$0xff]
    %v923 = vld [vmem:[#allocation10 + $0x440] sm:$0xff]
    %v924 = vld [vmem:[#allocation10 + $0x448] sm:$0xff]
    %v925 = vld [vmem:[#allocation10 + $0x450] sm:$0xff]
    %v926 = vld [vmem:[#allocation10 + $0x458] sm:$0xff]
    %v927 = vld [vmem:[#allocation10 + $0x460] sm:$0xff]
    %v928 = vld [vmem:[#allocation10 + $0x468] sm:$0xff]
    %v929 = vld [vmem:[#allocation10 + $0x470] sm:$0xff]
    %v930 = vld [vmem:[#allocation10 + $0x478] sm:$0xff]
    %v931 = vld [vmem:[#allocation10 + $0x480] sm:$0xff]
    %v932 = vld [vmem:[#allocation10 + $0x488] sm:$0xff]
    %v933 = vld [vmem:[#allocation10 + $0x490] sm:$0xff]
    %v934 = vld [vmem:[#allocation10 + $0x498] sm:$0xff]
    %v935 = vld [vmem:[#allocation10 + $0x4a0] sm:$0xff]
    %v936 = vld [vmem:[#allocation10 + $0x4a8] sm:$0xff]
    %v937 = vld [vmem:[#allocation10 + $0x4b0] sm:$0xff]
    %v938 = vld [vmem:[#allocation10 + $0x4b8] sm:$0xff]
    %v939 = vld [vmem:[#allocation10 + $0x4c0] sm:$0xff]
    %v940 = vld [vmem:[#allocation10 + $0x4c8] sm:$0xff]
    %v941 = vld [vmem:[#allocation10 + $0x4d0] sm:$0xff]
    %v942 = vld [vmem:[#allocation10 + $0x4d8] sm:$0xff]
    %v943 = vld [vmem:[#allocation10 + $0x4e0] sm:$0xff]
    %v944 = vld [vmem:[#allocation10 + $0x4e8] sm:$0xff]
    %v945 = vld [vmem:[#allocation10 + $0x4f0] sm:$0xff]
    %v946 = vld [vmem:[#allocation10 + $0x4f8] sm:$0xff]
    %v947 = vld [vmem:[#allocation10 + $0x500] sm:$0xff]
    %v948 = vld [vmem:[#allocation10 + $0x508] sm:$0xff]
    %v949 = vld [vmem:[#allocation10 + $0x510] sm:$0xff]
    %v950 = vld [vmem:[#allocation10 + $0x518] sm:$0xff]
    %v951 = vld [vmem:[#allocation10 + $0x520] sm:$0xff]
    %v952 = vld [vmem:[#allocation10 + $0x528] sm:$0xff]
    %v953 = vld [vmem:[#allocation10 + $0x530] sm:$0xff]
    %v954 = vld [vmem:[#allocation10 + $0x538] sm:$0xff]
    %v955 = vld [vmem:[#allocation10 + $0x540] sm:$0xff]
    %v956 = vld [vmem:[#allocation10 + $0x548] sm:$0xff]
    %v957 = vld [vmem:[#allocation10 + $0x550] sm:$0xff]
    %v958 = vld [vmem:[#allocation10 + $0x558] sm:$0xff]
    %v959 = vld [vmem:[#allocation10 + $0x560] sm:$0xff]
    %v960 = vld [vmem:[#allocation10 + $0x568] sm:$0xff]
    %v961 = vld [vmem:[#allocation10 + $0x570] sm:$0xff]
    %v962 = vld [vmem:[#allocation10 + $0x578] sm:$0xff]
    %v963 = vld [vmem:[#allocation10 + $0x580] sm:$0xff]
    %v964 = vld [vmem:[#allocation10 + $0x588] sm:$0xff]
    %v965 = vld [vmem:[#allocation10 + $0x590] sm:$0xff]
    %v966 = vld [vmem:[#allocation10 + $0x598] sm:$0xff]
    %v967 = vld [vmem:[#allocation10 + $0x5a0] sm:$0xff]
    %v968 = vld [vmem:[#allocation10 + $0x5a8] sm:$0xff]
    %v969 = vld [vmem:[#allocation10 + $0x5b0] sm:$0xff]
    %v970 = vld [vmem:[#allocation10 + $0x5b8] sm:$0xff]
    %v971 = vld [vmem:[#allocation10 + $0x5c0] sm:$0xff]
    %v972 = vld [vmem:[#allocation10 + $0x5c8] sm:$0xff]
    %v973 = vld [vmem:[#allocation10 + $0x5d0] sm:$0xff]
    %v974 = vld [vmem:[#allocation10 + $0x5d8] sm:$0xff]
    %v975 = vld [vmem:[#allocation10 + $0x5e0] sm:$0xff]
    %v976 = vld [vmem:[#allocation10 + $0x5e8] sm:$0xff]
    %v977 = vld [vmem:[#allocation10 + $0x5f0] sm:$0xff]
    %v978 = vld [vmem:[#allocation10 + $0x5f8] sm:$0xff]
    %v979 = vld [vmem:[#allocation10 + $0x600] sm:$0xff]
    %v980 = vld [vmem:[#allocation10 + $0x608] sm:$0xff]
    %v981 = vld [vmem:[#allocation10 + $0x610] sm:$0xff]
    %v982 = vld [vmem:[#allocation10 + $0x618] sm:$0xff]
    %v983 = vld [vmem:[#allocation10 + $0x620] sm:$0xff]
    %v984 = vld [vmem:[#allocation10 + $0x628] sm:$0xff]
    %v985 = vld [vmem:[#allocation10 + $0x630] sm:$0xff]
    %v986 = vld [vmem:[#allocation10 + $0x638] sm:$0xff]
    %v987 = vld [vmem:[#allocation10 + $0x640] sm:$0xff]
    %v988 = vld [vmem:[#allocation10 + $0x648] sm:$0xff]
    %v989 = vld [vmem:[#allocation10 + $0x650] sm:$0xff]
    %v990 = vld [vmem:[#allocation10 + $0x658] sm:$0xff]
    %v991 = vld [vmem:[#allocation10 + $0x660] sm:$0xff]
    %v992 = vld [vmem:[#allocation10 + $0x668] sm:$0xff]
    %v993 = vld [vmem:[#allocation10 + $0x670] sm:$0xff]
    %v994 = vld [vmem:[#allocation10 + $0x678] sm:$0xff]
    %v995 = vld [vmem:[#allocation10 + $0x680] sm:$0xff]
    %v996 = vld [vmem:[#allocation10 + $0x688] sm:$0xff]
    %v997 = vld [vmem:[#allocation10 + $0x690] sm:$0xff]
    %v998 = vld [vmem:[#allocation10 + $0x698] sm:$0xff]
    %v999 = vld [vmem:[#allocation10 + $0x6a0] sm:$0xff]
    %v1000 = vld [vmem:[#allocation10 + $0x6a8] sm:$0xff]
    %v1001 = vld [vmem:[#allocation10 + $0x6b0] sm:$0xff]
    %v1002 = vld [vmem:[#allocation10 + $0x6b8] sm:$0xff]
    %v1003 = vld [vmem:[#allocation10 + $0x6c0] sm:$0xff]
    %v1004 = vld [vmem:[#allocation10 + $0x6c8] sm:$0xff]
    %v1005 = vld [vmem:[#allocation10 + $0x6d0] sm:$0xff]
    %v1006 = vld [vmem:[#allocation10 + $0x6d8] sm:$0xff]
    %v1007 = vld [vmem:[#allocation10 + $0x6e0] sm:$0xff]
    %v1008 = vld [vmem:[#allocation10 + $0x6e8] sm:$0xff]
    %v1009 = vld [vmem:[#allocation10 + $0x6f0] sm:$0xff]
    %v1010 = vld [vmem:[#allocation10 + $0x6f8] sm:$0xff]
    %v1011 = vld [vmem:[#allocation10 + $0x700] sm:$0xff]
    %v1012 = vld [vmem:[#allocation10 + $0x708] sm:$0xff]
    %v1013 = vld [vmem:[#allocation10 + $0x710] sm:$0xff]
    %v1014 = vld [vmem:[#allocation10 + $0x718] sm:$0xff]
    %v1015 = vld [vmem:[#allocation10 + $0x720] sm:$0xff]
    %v1016 = vld [vmem:[#allocation10 + $0x728] sm:$0xff]
    %v1017 = vld [vmem:[#allocation10 + $0x730] sm:$0xff]
    %v1018 = vld [vmem:[#allocation10 + $0x738] sm:$0xff]
    %v1019 = vld [vmem:[#allocation10 + $0x740] sm:$0xff]
    %v1020 = vld [vmem:[#allocation10 + $0x748] sm:$0xff]
    %v1021 = vld [vmem:[#allocation10 + $0x750] sm:$0xff]
    %v1022 = vld [vmem:[#allocation10 + $0x758] sm:$0xff]
    %v1023 = vld [vmem:[#allocation10 + $0x760] sm:$0xff]
    %v1024 = vld [vmem:[#allocation10 + $0x768] sm:$0xff]
    %v1025 = vld [vmem:[#allocation10 + $0x770] sm:$0xff]
    %v1026 = vld [vmem:[#allocation10 + $0x778] sm:$0xff]
    %v1027 = vld [vmem:[#allocation10 + $0x780] sm:$0xff]
    %v1028 = vld [vmem:[#allocation10 + $0x788] sm:$0xff]
    %v1029 = vld [vmem:[#allocation10 + $0x790] sm:$0xff]
    %v1030 = vld [vmem:[#allocation10 + $0x798] sm:$0xff]
    %v1031 = vld [vmem:[#allocation10 + $0x7a0] sm:$0xff]
    %v1032 = vld [vmem:[#allocation10 + $0x7a8] sm:$0xff]
    %v1033 = vld [vmem:[#allocation10 + $0x7b0] sm:$0xff]
    %v1034 = vld [vmem:[#allocation10 + $0x7b8] sm:$0xff]
    %v1035 = vld [vmem:[#allocation10 + $0x7c0] sm:$0xff]
    %v1036 = vld [vmem:[#allocation10 + $0x7c8] sm:$0xff]
    %v1037 = vld [vmem:[#allocation10 + $0x7d0] sm:$0xff]
    %v1038 = vld [vmem:[#allocation10 + $0x7d8] sm:$0xff]
    %v1039 = vld [vmem:[#allocation10 + $0x7e0] sm:$0xff]
    %v1040 = vld [vmem:[#allocation10 + $0x7e8] sm:$0xff]
    %v1041 = vld [vmem:[#allocation10 + $0x7f0] sm:$0xff]
    %v1042 = vld [vmem:[#allocation10 + $0x7f8] sm:$0xff]
    %1043 = vmatpush.msra.mxu0 %v847
    %1044 = vmatpush.msra.mxu0 %v843
    %1045 = vmatpush.msra.mxu0 %v839
    %1046 = vmatpush.msra.mxu0 %v835
    %1047 = vmatpush.msra.mxu0 %v831
    %1048 = vmatpush.msra.mxu0 %v827
    %1049 = vmatpush.msra.mxu0 %v823
    %1050 = vmatpush.msra.mxu0 %v819
    %1051 = vmatpush.msra.mxu0 %v815
    %1052 = vmatpush.msra.mxu0 %v811
    %1053 = vmatpush.msra.mxu0 %v807
    %1054 = vmatpush.msra.mxu0 %v803
    %1055 = vmatpush.msra.mxu0 %v799
    %1056 = vmatpush.msra.mxu0 %v795
    %1057 = vmatpush.msra.mxu0 %v791
    %1058 = vmatpush.msra.mxu0 %v787
    %1059 = vmatmul.f32.gmra.mxu0 %v775
    %v1060 = vpop.f32.mrf.mxu0
    %v1061 = vadd.f32 0.0, %v1060
    %1062 = vmatmul.f32.gmra.mxu0 %v779
    %v1063 = vpop.f32.mrf.mxu0
    %v1064 = vadd.f32 0.0, %v1063
    %1065 = vmatmul.f32.gmra.mxu0 %v783
    %v1066 = vpop.f32.mrf.mxu0
    %v1067 = vadd.f32 0.0, %v1066
    %1068 = vdwg.mxu0
    %1069 = vmatpush.msra.mxu0 %v911
    %1070 = vmatpush.msra.mxu0 %v907
    %1071 = vmatpush.msra.mxu0 %v903
    %1072 = vmatpush.msra.mxu0 %v899
    %1073 = vmatpush.msra.mxu0 %v895
    %1074 = vmatpush.msra.mxu0 %v891
    %1075 = vmatpush.msra.mxu0 %v887
    %1076 = vmatpush.msra.mxu0 %v883
    %1077 = vmatpush.msra.mxu0 %v879
    %1078 = vmatpush.msra.mxu0 %v875
    %1079 = vmatpush.msra.mxu0 %v871
    %1080 = vmatpush.msra.mxu0 %v867
    %1081 = vmatpush.msra.mxu0 %v863
    %1082 = vmatpush.msra.mxu0 %v859
    %1083 = vmatpush.msra.mxu0 %v855
    %1084 = vmatpush.msra.mxu0 %v851
    %1085 = vmatmul.f32.gmra.mxu0 %v776
    %v1086 = vpop.f32.mrf.mxu0
    %v1087 = vadd.f32 %v1061, %v1086
    %1088 = vmatmul.f32.gmra.mxu0 %v780
    %v1089 = vpop.f32.mrf.mxu0
    %v1090 = vadd.f32 %v1064, %v1089
    %1091 = vmatmul.f32.gmra.mxu0 %v784
    %v1092 = vpop.f32.mrf.mxu0
    %v1093 = vadd.f32 %v1067, %v1092
    %1094 = vdwg.mxu0
    %1095 = vmatpush.msra.mxu0 %v975
    %1096 = vmatpush.msra.mxu0 %v971
    %1097 = vmatpush.msra.mxu0 %v967
    %1098 = vmatpush.msra.mxu0 %v963
    %1099 = vmatpush.msra.mxu0 %v959
    %1100 = vmatpush.msra.mxu0 %v955
    %1101 = vmatpush.msra.mxu0 %v951
    %1102 = vmatpush.msra.mxu0 %v947
    %1103 = vmatpush.msra.mxu0 %v943
    %1104 = vmatpush.msra.mxu0 %v939
    %1105 = vmatpush.msra.mxu0 %v935
    %1106 = vmatpush.msra.mxu0 %v931
    %1107 = vmatpush.msra.mxu0 %v927
    %1108 = vmatpush.msra.mxu0 %v923
    %1109 = vmatpush.msra.mxu0 %v919
    %1110 = vmatpush.msra.mxu0 %v915
    %1111 = vmatmul.f32.gmra.mxu0 %v777
    %v1112 = vpop.f32.mrf.mxu0
    %v1113 = vadd.f32 %v1087, %v1112
    %1114 = vmatmul.f32.gmra.mxu0 %v781
    %v1115 = vpop.f32.mrf.mxu0
    %v1116 = vadd.f32 %v1090, %v1115
    %1117 = vmatmul.f32.gmra.mxu0 %v785
    %v1118 = vpop.f32.mrf.mxu0
    %v1119 = vadd.f32 %v1093, %v1118
    %1120 = vdwg.mxu0
    %1121 = vmatpush.msra.mxu0 %v1039
    %1122 = vmatpush.msra.mxu0 %v1035
    %1123 = vmatpush.msra.mxu0 %v1031
    %1124 = vmatpush.msra.mxu0 %v1027
    %1125 = vmatpush.msra.mxu0 %v1023
    %1126 = vmatpush.msra.mxu0 %v1019
    %1127 = vmatpush.msra.mxu0 %v1015
    %1128 = vmatpush.msra.mxu0 %v1011
    %1129 = vmatpush.msra.mxu0 %v1007
    %1130 = vmatpush.msra.mxu0 %v1003
    %1131 = vmatpush.msra.mxu0 %v999
    %1132 = vmatpush.msra.mxu0 %v995
    %1133 = vmatpush.msra.mxu0 %v991
    %1134 = vmatpush.msra.mxu0 %v987
    %1135 = vmatpush.msra.mxu0 %v983
    %1136 = vmatpush.msra.mxu0 %v979
    %1137 = vmatmul.f32.gmra.mxu0 %v778
    %v1138 = vpop.f32.mrf.mxu0
    %v1139 = vadd.f32 %v1113, %v1138
    %1140 = vmatmul.f32.gmra.mxu0 %v782
    %v1141 = vpop.f32.mrf.mxu0
    %v1142 = vadd.f32 %v1116, %v1141
    %1143 = vmatmul.f32.gmra.mxu0 %v786
    %v1144 = vpop.f32.mrf.mxu0
    %v1145 = vadd.f32 %v1119, %v1144
    %1146 = vdwg.mxu0
    %1147 = vmatpush.msra.mxu0 %v848
    %1148 = vmatpush.msra.mxu0 %v844
    %1149 = vmatpush.msra.mxu0 %v840
    %1150 = vmatpush.msra.mxu0 %v836
    %1151 = vmatpush.msra.mxu0 %v832
    %1152 = vmatpush.msra.mxu0 %v828
    %1153 = vmatpush.msra.mxu0 %v824
    %1154 = vmatpush.msra.mxu0 %v820
    %1155 = vmatpush.msra.mxu0 %v816
    %1156 = vmatpush.msra.mxu0 %v812
    %1157 = vmatpush.msra.mxu0 %v808
    %1158 = vmatpush.msra.mxu0 %v804
    %1159 = vmatpush.msra.mxu0 %v800
    %1160 = vmatpush.msra.mxu0 %v796
    %1161 = vmatpush.msra.mxu0 %v792
    %1162 = vmatpush.msra.mxu0 %v788
    %1163 = vmatmul.f32.gmra.mxu0 %v775
    %v1164 = vpop.f32.mrf.mxu0
    %v1165 = vadd.f32 0.0, %v1164
    %1166 = vmatmul.f32.gmra.mxu0 %v779
    %v1167 = vpop.f32.mrf.mxu0
    %v1168 = vadd.f32 0.0, %v1167
    %1169 = vmatmul.f32.gmra.mxu0 %v783
    %v1170 = vpop.f32.mrf.mxu0
    %v1171 = vadd.f32 0.0, %v1170
    %1172 = vdwg.mxu0
    %1173 = vmatpush.msra.mxu0 %v912
    %1174 = vmatpush.msra.mxu0 %v908
    %1175 = vmatpush.msra.mxu0 %v904
    %1176 = vmatpush.msra.mxu0 %v900
    %1177 = vmatpush.msra.mxu0 %v896
    %1178 = vmatpush.msra.mxu0 %v892
    %1179 = vmatpush.msra.mxu0 %v888
    %1180 = vmatpush.msra.mxu0 %v884
    %1181 = vmatpush.msra.mxu0 %v880
    %1182 = vmatpush.msra.mxu0 %v876
    %1183 = vmatpush.msra.mxu0 %v872
    %1184 = vmatpush.msra.mxu0 %v868
    %1185 = vmatpush.msra.mxu0 %v864
    %1186 = vmatpush.msra.mxu0 %v860
    %1187 = vmatpush.msra.mxu0 %v856
    %1188 = vmatpush.msra.mxu0 %v852
    %1189 = vmatmul.f32.gmra.mxu0 %v776
    %v1190 = vpop.f32.mrf.mxu0
    %v1191 = vadd.f32 %v1165, %v1190
    %1192 = vmatmul.f32.gmra.mxu0 %v780
    %v1193 = vpop.f32.mrf.mxu0
    %v1194 = vadd.f32 %v1168, %v1193
    %1195 = vmatmul.f32.gmra.mxu0 %v784
    %v1196 = vpop.f32.mrf.mxu0
    %v1197 = vadd.f32 %v1171, %v1196
    %1198 = vdwg.mxu0
    %1199 = vmatpush.msra.mxu0 %v976
    %1200 = vmatpush.msra.mxu0 %v972
    %1201 = vmatpush.msra.mxu0 %v968
    %1202 = vmatpush.msra.mxu0 %v964
    %1203 = vmatpush.msra.mxu0 %v960
    %1204 = vmatpush.msra.mxu0 %v956
    %1205 = vmatpush.msra.mxu0 %v952
    %1206 = vmatpush.msra.mxu0 %v948
    %1207 = vmatpush.msra.mxu0 %v944
    %1208 = vmatpush.msra.mxu0 %v940
    %1209 = vmatpush.msra.mxu0 %v936
    %1210 = vmatpush.msra.mxu0 %v932
    %1211 = vmatpush.msra.mxu0 %v928
    %1212 = vmatpush.msra.mxu0 %v924
    %1213 = vmatpush.msra.mxu0 %v920
    %1214 = vmatpush.msra.mxu0 %v916
    %1215 = vmatmul.f32.gmra.mxu0 %v777
    %v1216 = vpop.f32.mrf.mxu0
    %v1217 = vadd.f32 %v1191, %v1216
    %1218 = vmatmul.f32.gmra.mxu0 %v781
    %v1219 = vpop.f32.mrf.mxu0
    %v1220 = vadd.f32 %v1194, %v1219
    %1221 = vmatmul.f32.gmra.mxu0 %v785
    %v1222 = vpop.f32.mrf.mxu0
    %v1223 = vadd.f32 %v1197, %v1222
    %1224 = vdwg.mxu0
    %1225 = vmatpush.msra.mxu0 %v1040
    %1226 = vmatpush.msra.mxu0 %v1036
    %1227 = vmatpush.msra.mxu0 %v1032
    %1228 = vmatpush.msra.mxu0 %v1028
    %1229 = vmatpush.msra.mxu0 %v1024
    %1230 = vmatpush.msra.mxu0 %v1020
    %1231 = vmatpush.msra.mxu0 %v1016
    %1232 = vmatpush.msra.mxu0 %v1012
    %1233 = vmatpush.msra.mxu0 %v1008
    %1234 = vmatpush.msra.mxu0 %v1004
    %1235 = vmatpush.msra.mxu0 %v1000
    %1236 = vmatpush.msra.mxu0 %v996
    %1237 = vmatpush.msra.mxu0 %v992
    %1238 = vmatpush.msra.mxu0 %v988
    %1239 = vmatpush.msra.mxu0 %v984
    %1240 = vmatpush.msra.mxu0 %v980
    %1241 = vmatmul.f32.gmra.mxu0 %v778
    %v1242 = vpop.f32.mrf.mxu0
    %v1243 = vadd.f32 %v1217, %v1242
    %1244 = vmatmul.f32.gmra.mxu0 %v782
    %v1245 = vpop.f32.mrf.mxu0
    %v1246 = vadd.f32 %v1220, %v1245
    %1247 = vmatmul.f32.gmra.mxu0 %v786
    %v1248 = vpop.f32.mrf.mxu0
    %v1249 = vadd.f32 %v1223, %v1248
    %1250 = vdwg.mxu0
    %1251 = vmatpush.msra.mxu0 %v849
    %1252 = vmatpush.msra.mxu0 %v845
    %1253 = vmatpush.msra.mxu0 %v841
    %1254 = vmatpush.msra.mxu0 %v837
    %1255 = vmatpush.msra.mxu0 %v833
    %1256 = vmatpush.msra.mxu0 %v829
    %1257 = vmatpush.msra.mxu0 %v825
    %1258 = vmatpush.msra.mxu0 %v821
    %1259 = vmatpush.msra.mxu0 %v817
    %1260 = vmatpush.msra.mxu0 %v813
    %1261 = vmatpush.msra.mxu0 %v809
    %1262 = vmatpush.msra.mxu0 %v805
    %1263 = vmatpush.msra.mxu0 %v801
    %1264 = vmatpush.msra.mxu0 %v797
    %1265 = vmatpush.msra.mxu0 %v793
    %1266 = vmatpush.msra.mxu0 %v789
    %1267 = vmatmul.f32.gmra.mxu0 %v775
    %v1268 = vpop.f32.mrf.mxu0
    %v1269 = vadd.f32 0.0, %v1268
    %1270 = vmatmul.f32.gmra.mxu0 %v779
    %v1271 = vpop.f32.mrf.mxu0
    %v1272 = vadd.f32 0.0, %v1271
    %1273 = vmatmul.f32.gmra.mxu0 %v783
    %v1274 = vpop.f32.mrf.mxu0
    %v1275 = vadd.f32 0.0, %v1274
    %1276 = vdwg.mxu0
    %1277 = vmatpush.msra.mxu0 %v913
    %1278 = vmatpush.msra.mxu0 %v909
    %1279 = vmatpush.msra.mxu0 %v905
    %1280 = vmatpush.msra.mxu0 %v901
    %1281 = vmatpush.msra.mxu0 %v897
    %1282 = vmatpush.msra.mxu0 %v893
    %1283 = vmatpush.msra.mxu0 %v889
    %1284 = vmatpush.msra.mxu0 %v885
    %1285 = vmatpush.msra.mxu0 %v881
    %1286 = vmatpush.msra.mxu0 %v877
    %1287 = vmatpush.msra.mxu0 %v873
    %1288 = vmatpush.msra.mxu0 %v869
    %1289 = vmatpush.msra.mxu0 %v865
    %1290 = vmatpush.msra.mxu0 %v861
    %1291 = vmatpush.msra.mxu0 %v857
    %1292 = vmatpush.msra.mxu0 %v853
    %1293 = vmatmul.f32.gmra.mxu0 %v776
    %v1294 = vpop.f32.mrf.mxu0
    %v1295 = vadd.f32 %v1269, %v1294
    %1296 = vmatmul.f32.gmra.mxu0 %v780
    %v1297 = vpop.f32.mrf.mxu0
    %v1298 = vadd.f32 %v1272, %v1297
    %1299 = vmatmul.f32.gmra.mxu0 %v784
    %v1300 = vpop.f32.mrf.mxu0
    %v1301 = vadd.f32 %v1275, %v1300
    %1302 = vdwg.mxu0
    %1303 = vmatpush.msra.mxu0 %v977
    %1304 = vmatpush.msra.mxu0 %v973
    %1305 = vmatpush.msra.mxu0 %v969
    %1306 = vmatpush.msra.mxu0 %v965
    %1307 = vmatpush.msra.mxu0 %v961
    %1308 = vmatpush.msra.mxu0 %v957
    %1309 = vmatpush.msra.mxu0 %v953
    %1310 = vmatpush.msra.mxu0 %v949
    %1311 = vmatpush.msra.mxu0 %v945
    %1312 = vmatpush.msra.mxu0 %v941
    %1313 = vmatpush.msra.mxu0 %v937
    %1314 = vmatpush.msra.mxu0 %v933
    %1315 = vmatpush.msra.mxu0 %v929
    %1316 = vmatpush.msra.mxu0 %v925
    %1317 = vmatpush.msra.mxu0 %v921
    %1318 = vmatpush.msra.mxu0 %v917
    %1319 = vmatmul.f32.gmra.mxu0 %v777
    %v1320 = vpop.f32.mrf.mxu0
    %v1321 = vadd.f32 %v1295, %v1320
    %1322 = vmatmul.f32.gmra.mxu0 %v781
    %v1323 = vpop.f32.mrf.mxu0
    %v1324 = vadd.f32 %v1298, %v1323
    %1325 = vmatmul.f32.gmra.mxu0 %v785
    %v1326 = vpop.f32.mrf.mxu0
    %v1327 = vadd.f32 %v1301, %v1326
    %1328 = vdwg.mxu0
    %1329 = vmatpush.msra.mxu0 %v1041
    %1330 = vmatpush.msra.mxu0 %v1037
    %1331 = vmatpush.msra.mxu0 %v1033
    %1332 = vmatpush.msra.mxu0 %v1029
    %1333 = vmatpush.msra.mxu0 %v1025
    %1334 = vmatpush.msra.mxu0 %v1021
    %1335 = vmatpush.msra.mxu0 %v1017
    %1336 = vmatpush.msra.mxu0 %v1013
    %1337 = vmatpush.msra.mxu0 %v1009
    %1338 = vmatpush.msra.mxu0 %v1005
    %1339 = vmatpush.msra.mxu0 %v1001
    %1340 = vmatpush.msra.mxu0 %v997
    %1341 = vmatpush.msra.mxu0 %v993
    %1342 = vmatpush.msra.mxu0 %v989
    %1343 = vmatpush.msra.mxu0 %v985
    %1344 = vmatpush.msra.mxu0 %v981
    %1345 = vmatmul.f32.gmra.mxu0 %v778
    %v1346 = vpop.f32.mrf.mxu0
    %v1347 = vadd.f32 %v1321, %v1346
    %1348 = vmatmul.f32.gmra.mxu0 %v782
    %v1349 = vpop.f32.mrf.mxu0
    %v1350 = vadd.f32 %v1324, %v1349
    %1351 = vmatmul.f32.gmra.mxu0 %v786
    %v1352 = vpop.f32.mrf.mxu0
    %v1353 = vadd.f32 %v1327, %v1352
    %1354 = vdwg.mxu0
    %1355 = vmatpush.msra.mxu0 %v850
    %1356 = vmatpush.msra.mxu0 %v846
    %1357 = vmatpush.msra.mxu0 %v842
    %1358 = vmatpush.msra.mxu0 %v838
    %1359 = vmatpush.msra.mxu0 %v834
    %1360 = vmatpush.msra.mxu0 %v830
    %1361 = vmatpush.msra.mxu0 %v826
    %1362 = vmatpush.msra.mxu0 %v822
    %1363 = vmatpush.msra.mxu0 %v818
    %1364 = vmatpush.msra.mxu0 %v814
    %1365 = vmatpush.msra.mxu0 %v810
    %1366 = vmatpush.msra.mxu0 %v806
    %1367 = vmatpush.msra.mxu0 %v802
    %1368 = vmatpush.msra.mxu0 %v798
    %1369 = vmatpush.msra.mxu0 %v794
    %1370 = vmatpush.msra.mxu0 %v790
    %1371 = vmatmul.f32.gmra.mxu0 %v775
    %v1372 = vpop.f32.mrf.mxu0
    %v1373 = vadd.f32 0.0, %v1372
    %1374 = vmatmul.f32.gmra.mxu0 %v779
    %v1375 = vpop.f32.mrf.mxu0
    %v1376 = vadd.f32 0.0, %v1375
    %1377 = vmatmul.f32.gmra.mxu0 %v783
    %v1378 = vpop.f32.mrf.mxu0
    %v1379 = vadd.f32 0.0, %v1378
    %1380 = vdwg.mxu0
    %1381 = vmatpush.msra.mxu0 %v914
    %1382 = vmatpush.msra.mxu0 %v910
    %1383 = vmatpush.msra.mxu0 %v906
    %1384 = vmatpush.msra.mxu0 %v902
    %1385 = vmatpush.msra.mxu0 %v898
    %1386 = vmatpush.msra.mxu0 %v894
    %1387 = vmatpush.msra.mxu0 %v890
    %1388 = vmatpush.msra.mxu0 %v886
    %1389 = vmatpush.msra.mxu0 %v882
    %1390 = vmatpush.msra.mxu0 %v878
    %1391 = vmatpush.msra.mxu0 %v874
    %1392 = vmatpush.msra.mxu0 %v870
    %1393 = vmatpush.msra.mxu0 %v866
    %1394 = vmatpush.msra.mxu0 %v862
    %1395 = vmatpush.msra.mxu0 %v858
    %1396 = vmatpush.msra.mxu0 %v854
    %1397 = vmatmul.f32.gmra.mxu0 %v776
    %v1398 = vpop.f32.mrf.mxu0
    %v1399 = vadd.f32 %v1373, %v1398
    %1400 = vmatmul.f32.gmra.mxu0 %v780
    %v1401 = vpop.f32.mrf.mxu0
    %v1402 = vadd.f32 %v1376, %v1401
    %1403 = vmatmul.f32.gmra.mxu0 %v784
    %v1404 = vpop.f32.mrf.mxu0
    %v1405 = vadd.f32 %v1379, %v1404
    %1406 = vdwg.mxu0
    %1407 = vmatpush.msra.mxu0 %v978
    %1408 = vmatpush.msra.mxu0 %v974
    %1409 = vmatpush.msra.mxu0 %v970
    %1410 = vmatpush.msra.mxu0 %v966
    %1411 = vmatpush.msra.mxu0 %v962
    %1412 = vmatpush.msra.mxu0 %v958
    %1413 = vmatpush.msra.mxu0 %v954
    %1414 = vmatpush.msra.mxu0 %v950
    %1415 = vmatpush.msra.mxu0 %v946
    %1416 = vmatpush.msra.mxu0 %v942
    %1417 = vmatpush.msra.mxu0 %v938
    %1418 = vmatpush.msra.mxu0 %v934
    %1419 = vmatpush.msra.mxu0 %v930
    %1420 = vmatpush.msra.mxu0 %v926
    %1421 = vmatpush.msra.mxu0 %v922
    %1422 = vmatpush.msra.mxu0 %v918
    %1423 = vmatmul.f32.gmra.mxu0 %v777
    %v1424 = vpop.f32.mrf.mxu0
    %v1425 = vadd.f32 %v1399, %v1424
    %1426 = vmatmul.f32.gmra.mxu0 %v781
    %v1427 = vpop.f32.mrf.mxu0
    %v1428 = vadd.f32 %v1402, %v1427
    %1429 = vmatmul.f32.gmra.mxu0 %v785
    %v1430 = vpop.f32.mrf.mxu0
    %v1431 = vadd.f32 %v1405, %v1430
    %1432 = vdwg.mxu0
    %1433 = vmatpush.msra.mxu0 %v1042
    %1434 = vmatpush.msra.mxu0 %v1038
    %1435 = vmatpush.msra.mxu0 %v1034
    %1436 = vmatpush.msra.mxu0 %v1030
    %1437 = vmatpush.msra.mxu0 %v1026
    %1438 = vmatpush.msra.mxu0 %v1022
    %1439 = vmatpush.msra.mxu0 %v1018
    %1440 = vmatpush.msra.mxu0 %v1014
    %1441 = vmatpush.msra.mxu0 %v1010
    %1442 = vmatpush.msra.mxu0 %v1006
    %1443 = vmatpush.msra.mxu0 %v1002
    %1444 = vmatpush.msra.mxu0 %v998
    %1445 = vmatpush.msra.mxu0 %v994
    %1446 = vmatpush.msra.mxu0 %v990
    %1447 = vmatpush.msra.mxu0 %v986
    %1448 = vmatpush.msra.mxu0 %v982
    %1449 = vmatmul.f32.gmra.mxu0 %v778
    %v1450 = vpop.f32.mrf.mxu0
    %v1451 = vadd.f32 %v1425, %v1450
    %1452 = vmatmul.f32.gmra.mxu0 %v782
    %v1453 = vpop.f32.mrf.mxu0
    %v1454 = vadd.f32 %v1428, %v1453
    %1455 = vmatmul.f32.gmra.mxu0 %v786
    %v1456 = vpop.f32.mrf.mxu0
    %v1457 = vadd.f32 %v1431, %v1456
    %1458 = vdwg.mxu0
    %v1459 = vld [vmem:[#allocation7] sm:$0xff]
    %v1460 = vld [vmem:[#allocation7 + $0x8] sm:$0xff]
    %v1461 = vld [vmem:[#allocation7 + $0x10] sm:$0xff]
    %v1462 = vld [vmem:[#allocation7 + $0x18] sm:$0xff]
    %v1463 = vld [vmem:[#allocation7 + $0x20] sm:$0xff]
    %v1464 = vld [vmem:[#allocation7 + $0x28] sm:$0xff]
    %v1465 = vld [vmem:[#allocation7 + $0x30] sm:$0xff]
    %v1466 = vld [vmem:[#allocation7 + $0x38] sm:$0xff]
    %v1467 = vld [vmem:[#allocation7 + $0x40] sm:$0xf]
    %v1468 = vld [vmem:[#allocation7 + $0x48] sm:$0xf]
    %v1469 = vld [vmem:[#allocation7 + $0x50] sm:$0xf]
    %v1470 = vld [vmem:[#allocation7 + $0x58] sm:$0xf]
    %v1471 = vld [vmem:[#allocation11] sm:$0xff]
    %v1472 = vld [vmem:[#allocation11 + $0x8] sm:$0xff]
    %v1473 = vld [vmem:[#allocation11 + $0x10] sm:$0xff]
    %v1474 = vld [vmem:[#allocation11 + $0x18] sm:$0xff]
    %v1475 = vld [vmem:[#allocation11 + $0x20] sm:$0xff]
    %v1476 = vld [vmem:[#allocation11 + $0x28] sm:$0xff]
    %v1477 = vld [vmem:[#allocation11 + $0x30] sm:$0xff]
    %v1478 = vld [vmem:[#allocation11 + $0x38] sm:$0xff]
    %v1479 = vld [vmem:[#allocation11 + $0x40] sm:$0xff]
    %v1480 = vld [vmem:[#allocation11 + $0x48] sm:$0xff]
    %v1481 = vld [vmem:[#allocation11 + $0x50] sm:$0xff]
    %v1482 = vld [vmem:[#allocation11 + $0x58] sm:$0xff]
    %v1483 = vld [vmem:[#allocation11 + $0x60] sm:$0xff]
    %v1484 = vld [vmem:[#allocation11 + $0x68] sm:$0xff]
    %v1485 = vld [vmem:[#allocation11 + $0x70] sm:$0xff]
    %v1486 = vld [vmem:[#allocation11 + $0x78] sm:$0xff]
    %v1487 = vld [vmem:[#allocation11 + $0x80] sm:$0xff]
    %v1488 = vld [vmem:[#allocation11 + $0x88] sm:$0xff]
    %v1489 = vld [vmem:[#allocation11 + $0x90] sm:$0xff]
    %v1490 = vld [vmem:[#allocation11 + $0x98] sm:$0xff]
    %v1491 = vld [vmem:[#allocation11 + $0xa0] sm:$0xff]
    %v1492 = vld [vmem:[#allocation11 + $0xa8] sm:$0xff]
    %v1493 = vld [vmem:[#allocation11 + $0xb0] sm:$0xff]
    %v1494 = vld [vmem:[#allocation11 + $0xb8] sm:$0xff]
    %v1495 = vld [vmem:[#allocation11 + $0xc0] sm:$0xff]
    %v1496 = vld [vmem:[#allocation11 + $0xc8] sm:$0xff]
    %v1497 = vld [vmem:[#allocation11 + $0xd0] sm:$0xff]
    %v1498 = vld [vmem:[#allocation11 + $0xd8] sm:$0xff]
    %v1499 = vld [vmem:[#allocation11 + $0xe0] sm:$0xff]
    %v1500 = vld [vmem:[#allocation11 + $0xe8] sm:$0xff]
    %v1501 = vld [vmem:[#allocation11 + $0xf0] sm:$0xff]
    %v1502 = vld [vmem:[#allocation11 + $0xf8] sm:$0xff]
    %v1503 = vld [vmem:[#allocation11 + $0x100] sm:$0xff]
    %v1504 = vld [vmem:[#allocation11 + $0x108] sm:$0xff]
    %v1505 = vld [vmem:[#allocation11 + $0x110] sm:$0xff]
    %v1506 = vld [vmem:[#allocation11 + $0x118] sm:$0xff]
    %v1507 = vld [vmem:[#allocation11 + $0x120] sm:$0xff]
    %v1508 = vld [vmem:[#allocation11 + $0x128] sm:$0xff]
    %v1509 = vld [vmem:[#allocation11 + $0x130] sm:$0xff]
    %v1510 = vld [vmem:[#allocation11 + $0x138] sm:$0xff]
    %v1511 = vld [vmem:[#allocation11 + $0x140] sm:$0xff]
    %v1512 = vld [vmem:[#allocation11 + $0x148] sm:$0xff]
    %v1513 = vld [vmem:[#allocation11 + $0x150] sm:$0xff]
    %v1514 = vld [vmem:[#allocation11 + $0x158] sm:$0xff]
    %v1515 = vld [vmem:[#allocation11 + $0x160] sm:$0xff]
    %v1516 = vld [vmem:[#allocation11 + $0x168] sm:$0xff]
    %v1517 = vld [vmem:[#allocation11 + $0x170] sm:$0xff]
    %v1518 = vld [vmem:[#allocation11 + $0x178] sm:$0xff]
    %v1519 = vld [vmem:[#allocation11 + $0x180] sm:$0xff]
    %v1520 = vld [vmem:[#allocation11 + $0x188] sm:$0xff]
    %v1521 = vld [vmem:[#allocation11 + $0x190] sm:$0xff]
    %v1522 = vld [vmem:[#allocation11 + $0x198] sm:$0xff]
    %v1523 = vld [vmem:[#allocation11 + $0x1a0] sm:$0xff]
    %v1524 = vld [vmem:[#allocation11 + $0x1a8] sm:$0xff]
    %v1525 = vld [vmem:[#allocation11 + $0x1b0] sm:$0xff]
    %v1526 = vld [vmem:[#allocation11 + $0x1b8] sm:$0xff]
    %v1527 = vld [vmem:[#allocation11 + $0x1c0] sm:$0xff]
    %v1528 = vld [vmem:[#allocation11 + $0x1c8] sm:$0xff]
    %v1529 = vld [vmem:[#allocation11 + $0x1d0] sm:$0xff]
    %v1530 = vld [vmem:[#allocation11 + $0x1d8] sm:$0xff]
    %v1531 = vld [vmem:[#allocation11 + $0x1e0] sm:$0xff]
    %v1532 = vld [vmem:[#allocation11 + $0x1e8] sm:$0xff]
    %v1533 = vld [vmem:[#allocation11 + $0x1f0] sm:$0xff]
    %v1534 = vld [vmem:[#allocation11 + $0x1f8] sm:$0xff]
    %v1535 = vld [vmem:[#allocation11 + $0x200] sm:$0xff]
    %v1536 = vld [vmem:[#allocation11 + $0x208] sm:$0xff]
    %v1537 = vld [vmem:[#allocation11 + $0x210] sm:$0xff]
    %v1538 = vld [vmem:[#allocation11 + $0x218] sm:$0xff]
    %v1539 = vld [vmem:[#allocation11 + $0x220] sm:$0xff]
    %v1540 = vld [vmem:[#allocation11 + $0x228] sm:$0xff]
    %v1541 = vld [vmem:[#allocation11 + $0x230] sm:$0xff]
    %v1542 = vld [vmem:[#allocation11 + $0x238] sm:$0xff]
    %v1543 = vld [vmem:[#allocation11 + $0x240] sm:$0xff]
    %v1544 = vld [vmem:[#allocation11 + $0x248] sm:$0xff]
    %v1545 = vld [vmem:[#allocation11 + $0x250] sm:$0xff]
    %v1546 = vld [vmem:[#allocation11 + $0x258] sm:$0xff]
    %v1547 = vld [vmem:[#allocation11 + $0x260] sm:$0xff]
    %v1548 = vld [vmem:[#allocation11 + $0x268] sm:$0xff]
    %v1549 = vld [vmem:[#allocation11 + $0x270] sm:$0xff]
    %v1550 = vld [vmem:[#allocation11 + $0x278] sm:$0xff]
    %v1551 = vld [vmem:[#allocation11 + $0x280] sm:$0xff]
    %v1552 = vld [vmem:[#allocation11 + $0x288] sm:$0xff]
    %v1553 = vld [vmem:[#allocation11 + $0x290] sm:$0xff]
    %v1554 = vld [vmem:[#allocation11 + $0x298] sm:$0xff]
    %v1555 = vld [vmem:[#allocation11 + $0x2a0] sm:$0xff]
    %v1556 = vld [vmem:[#allocation11 + $0x2a8] sm:$0xff]
    %v1557 = vld [vmem:[#allocation11 + $0x2b0] sm:$0xff]
    %v1558 = vld [vmem:[#allocation11 + $0x2b8] sm:$0xff]
    %v1559 = vld [vmem:[#allocation11 + $0x2c0] sm:$0xff]
    %v1560 = vld [vmem:[#allocation11 + $0x2c8] sm:$0xff]
    %v1561 = vld [vmem:[#allocation11 + $0x2d0] sm:$0xff]
    %v1562 = vld [vmem:[#allocation11 + $0x2d8] sm:$0xff]
    %v1563 = vld [vmem:[#allocation11 + $0x2e0] sm:$0xff]
    %v1564 = vld [vmem:[#allocation11 + $0x2e8] sm:$0xff]
    %v1565 = vld [vmem:[#allocation11 + $0x2f0] sm:$0xff]
    %v1566 = vld [vmem:[#allocation11 + $0x2f8] sm:$0xff]
    %v1567 = vld [vmem:[#allocation11 + $0x300] sm:$0xff]
    %v1568 = vld [vmem:[#allocation11 + $0x308] sm:$0xff]
    %v1569 = vld [vmem:[#allocation11 + $0x310] sm:$0xff]
    %v1570 = vld [vmem:[#allocation11 + $0x318] sm:$0xff]
    %v1571 = vld [vmem:[#allocation11 + $0x320] sm:$0xff]
    %v1572 = vld [vmem:[#allocation11 + $0x328] sm:$0xff]
    %v1573 = vld [vmem:[#allocation11 + $0x330] sm:$0xff]
    %v1574 = vld [vmem:[#allocation11 + $0x338] sm:$0xff]
    %v1575 = vld [vmem:[#allocation11 + $0x340] sm:$0xff]
    %v1576 = vld [vmem:[#allocation11 + $0x348] sm:$0xff]
    %v1577 = vld [vmem:[#allocation11 + $0x350] sm:$0xff]
    %v1578 = vld [vmem:[#allocation11 + $0x358] sm:$0xff]
    %v1579 = vld [vmem:[#allocation11 + $0x360] sm:$0xff]
    %v1580 = vld [vmem:[#allocation11 + $0x368] sm:$0xff]
    %v1581 = vld [vmem:[#allocation11 + $0x370] sm:$0xff]
    %v1582 = vld [vmem:[#allocation11 + $0x378] sm:$0xff]
    %v1583 = vld [vmem:[#allocation11 + $0x380] sm:$0xff]
    %v1584 = vld [vmem:[#allocation11 + $0x388] sm:$0xff]
    %v1585 = vld [vmem:[#allocation11 + $0x390] sm:$0xff]
    %v1586 = vld [vmem:[#allocation11 + $0x398] sm:$0xff]
    %v1587 = vld [vmem:[#allocation11 + $0x3a0] sm:$0xff]
    %v1588 = vld [vmem:[#allocation11 + $0x3a8] sm:$0xff]
    %v1589 = vld [vmem:[#allocation11 + $0x3b0] sm:$0xff]
    %v1590 = vld [vmem:[#allocation11 + $0x3b8] sm:$0xff]
    %v1591 = vld [vmem:[#allocation11 + $0x3c0] sm:$0xff]
    %v1592 = vld [vmem:[#allocation11 + $0x3c8] sm:$0xff]
    %v1593 = vld [vmem:[#allocation11 + $0x3d0] sm:$0xff]
    %v1594 = vld [vmem:[#allocation11 + $0x3d8] sm:$0xff]
    %v1595 = vld [vmem:[#allocation11 + $0x3e0] sm:$0xff]
    %v1596 = vld [vmem:[#allocation11 + $0x3e8] sm:$0xff]
    %v1597 = vld [vmem:[#allocation11 + $0x3f0] sm:$0xff]
    %v1598 = vld [vmem:[#allocation11 + $0x3f8] sm:$0xff]
    %v1599 = vld [vmem:[#allocation11 + $0x400] sm:$0xff]
    %v1600 = vld [vmem:[#allocation11 + $0x408] sm:$0xff]
    %v1601 = vld [vmem:[#allocation11 + $0x410] sm:$0xff]
    %v1602 = vld [vmem:[#allocation11 + $0x418] sm:$0xff]
    %v1603 = vld [vmem:[#allocation11 + $0x420] sm:$0xff]
    %v1604 = vld [vmem:[#allocation11 + $0x428] sm:$0xff]
    %v1605 = vld [vmem:[#allocation11 + $0x430] sm:$0xff]
    %v1606 = vld [vmem:[#allocation11 + $0x438] sm:$0xff]
    %v1607 = vld [vmem:[#allocation11 + $0x440] sm:$0xff]
    %v1608 = vld [vmem:[#allocation11 + $0x448] sm:$0xff]
    %v1609 = vld [vmem:[#allocation11 + $0x450] sm:$0xff]
    %v1610 = vld [vmem:[#allocation11 + $0x458] sm:$0xff]
    %v1611 = vld [vmem:[#allocation11 + $0x460] sm:$0xff]
    %v1612 = vld [vmem:[#allocation11 + $0x468] sm:$0xff]
    %v1613 = vld [vmem:[#allocation11 + $0x470] sm:$0xff]
    %v1614 = vld [vmem:[#allocation11 + $0x478] sm:$0xff]
    %v1615 = vld [vmem:[#allocation11 + $0x480] sm:$0xff]
    %v1616 = vld [vmem:[#allocation11 + $0x488] sm:$0xff]
    %v1617 = vld [vmem:[#allocation11 + $0x490] sm:$0xff]
    %v1618 = vld [vmem:[#allocation11 + $0x498] sm:$0xff]
    %v1619 = vld [vmem:[#allocation11 + $0x4a0] sm:$0xff]
    %v1620 = vld [vmem:[#allocation11 + $0x4a8] sm:$0xff]
    %v1621 = vld [vmem:[#allocation11 + $0x4b0] sm:$0xff]
    %v1622 = vld [vmem:[#allocation11 + $0x4b8] sm:$0xff]
    %v1623 = vld [vmem:[#allocation11 + $0x4c0] sm:$0xff]
    %v1624 = vld [vmem:[#allocation11 + $0x4c8] sm:$0xff]
    %v1625 = vld [vmem:[#allocation11 + $0x4d0] sm:$0xff]
    %v1626 = vld [vmem:[#allocation11 + $0x4d8] sm:$0xff]
    %v1627 = vld [vmem:[#allocation11 + $0x4e0] sm:$0xff]
    %v1628 = vld [vmem:[#allocation11 + $0x4e8] sm:$0xff]
    %v1629 = vld [vmem:[#allocation11 + $0x4f0] sm:$0xff]
    %v1630 = vld [vmem:[#allocation11 + $0x4f8] sm:$0xff]
    %v1631 = vld [vmem:[#allocation11 + $0x500] sm:$0xff]
    %v1632 = vld [vmem:[#allocation11 + $0x508] sm:$0xff]
    %v1633 = vld [vmem:[#allocation11 + $0x510] sm:$0xff]
    %v1634 = vld [vmem:[#allocation11 + $0x518] sm:$0xff]
    %v1635 = vld [vmem:[#allocation11 + $0x520] sm:$0xff]
    %v1636 = vld [vmem:[#allocation11 + $0x528] sm:$0xff]
    %v1637 = vld [vmem:[#allocation11 + $0x530] sm:$0xff]
    %v1638 = vld [vmem:[#allocation11 + $0x538] sm:$0xff]
    %v1639 = vld [vmem:[#allocation11 + $0x540] sm:$0xff]
    %v1640 = vld [vmem:[#allocation11 + $0x548] sm:$0xff]
    %v1641 = vld [vmem:[#allocation11 + $0x550] sm:$0xff]
    %v1642 = vld [vmem:[#allocation11 + $0x558] sm:$0xff]
    %v1643 = vld [vmem:[#allocation11 + $0x560] sm:$0xff]
    %v1644 = vld [vmem:[#allocation11 + $0x568] sm:$0xff]
    %v1645 = vld [vmem:[#allocation11 + $0x570] sm:$0xff]
    %v1646 = vld [vmem:[#allocation11 + $0x578] sm:$0xff]
    %v1647 = vld [vmem:[#allocation11 + $0x580] sm:$0xff]
    %v1648 = vld [vmem:[#allocation11 + $0x588] sm:$0xff]
    %v1649 = vld [vmem:[#allocation11 + $0x590] sm:$0xff]
    %v1650 = vld [vmem:[#allocation11 + $0x598] sm:$0xff]
    %v1651 = vld [vmem:[#allocation11 + $0x5a0] sm:$0xff]
    %v1652 = vld [vmem:[#allocation11 + $0x5a8] sm:$0xff]
    %v1653 = vld [vmem:[#allocation11 + $0x5b0] sm:$0xff]
    %v1654 = vld [vmem:[#allocation11 + $0x5b8] sm:$0xff]
    %v1655 = vld [vmem:[#allocation11 + $0x5c0] sm:$0xff]
    %v1656 = vld [vmem:[#allocation11 + $0x5c8] sm:$0xff]
    %v1657 = vld [vmem:[#allocation11 + $0x5d0] sm:$0xff]
    %v1658 = vld [vmem:[#allocation11 + $0x5d8] sm:$0xff]
    %v1659 = vld [vmem:[#allocation11 + $0x5e0] sm:$0xff]
    %v1660 = vld [vmem:[#allocation11 + $0x5e8] sm:$0xff]
    %v1661 = vld [vmem:[#allocation11 + $0x5f0] sm:$0xff]
    %v1662 = vld [vmem:[#allocation11 + $0x5f8] sm:$0xff]
    %v1663 = vld [vmem:[#allocation11 + $0x600] sm:$0xff]
    %v1664 = vld [vmem:[#allocation11 + $0x608] sm:$0xff]
    %v1665 = vld [vmem:[#allocation11 + $0x610] sm:$0xff]
    %v1666 = vld [vmem:[#allocation11 + $0x618] sm:$0xff]
    %v1667 = vld [vmem:[#allocation11 + $0x620] sm:$0xff]
    %v1668 = vld [vmem:[#allocation11 + $0x628] sm:$0xff]
    %v1669 = vld [vmem:[#allocation11 + $0x630] sm:$0xff]
    %v1670 = vld [vmem:[#allocation11 + $0x638] sm:$0xff]
    %v1671 = vld [vmem:[#allocation11 + $0x640] sm:$0xff]
    %v1672 = vld [vmem:[#allocation11 + $0x648] sm:$0xff]
    %v1673 = vld [vmem:[#allocation11 + $0x650] sm:$0xff]
    %v1674 = vld [vmem:[#allocation11 + $0x658] sm:$0xff]
    %v1675 = vld [vmem:[#allocation11 + $0x660] sm:$0xff]
    %v1676 = vld [vmem:[#allocation11 + $0x668] sm:$0xff]
    %v1677 = vld [vmem:[#allocation11 + $0x670] sm:$0xff]
    %v1678 = vld [vmem:[#allocation11 + $0x678] sm:$0xff]
    %v1679 = vld [vmem:[#allocation11 + $0x680] sm:$0xff]
    %v1680 = vld [vmem:[#allocation11 + $0x688] sm:$0xff]
    %v1681 = vld [vmem:[#allocation11 + $0x690] sm:$0xff]
    %v1682 = vld [vmem:[#allocation11 + $0x698] sm:$0xff]
    %v1683 = vld [vmem:[#allocation11 + $0x6a0] sm:$0xff]
    %v1684 = vld [vmem:[#allocation11 + $0x6a8] sm:$0xff]
    %v1685 = vld [vmem:[#allocation11 + $0x6b0] sm:$0xff]
    %v1686 = vld [vmem:[#allocation11 + $0x6b8] sm:$0xff]
    %v1687 = vld [vmem:[#allocation11 + $0x6c0] sm:$0xff]
    %v1688 = vld [vmem:[#allocation11 + $0x6c8] sm:$0xff]
    %v1689 = vld [vmem:[#allocation11 + $0x6d0] sm:$0xff]
    %v1690 = vld [vmem:[#allocation11 + $0x6d8] sm:$0xff]
    %v1691 = vld [vmem:[#allocation11 + $0x6e0] sm:$0xff]
    %v1692 = vld [vmem:[#allocation11 + $0x6e8] sm:$0xff]
    %v1693 = vld [vmem:[#allocation11 + $0x6f0] sm:$0xff]
    %v1694 = vld [vmem:[#allocation11 + $0x6f8] sm:$0xff]
    %v1695 = vld [vmem:[#allocation11 + $0x700] sm:$0xff]
    %v1696 = vld [vmem:[#allocation11 + $0x708] sm:$0xff]
    %v1697 = vld [vmem:[#allocation11 + $0x710] sm:$0xff]
    %v1698 = vld [vmem:[#allocation11 + $0x718] sm:$0xff]
    %v1699 = vld [vmem:[#allocation11 + $0x720] sm:$0xff]
    %v1700 = vld [vmem:[#allocation11 + $0x728] sm:$0xff]
    %v1701 = vld [vmem:[#allocation11 + $0x730] sm:$0xff]
    %v1702 = vld [vmem:[#allocation11 + $0x738] sm:$0xff]
    %v1703 = vld [vmem:[#allocation11 + $0x740] sm:$0xff]
    %v1704 = vld [vmem:[#allocation11 + $0x748] sm:$0xff]
    %v1705 = vld [vmem:[#allocation11 + $0x750] sm:$0xff]
    %v1706 = vld [vmem:[#allocation11 + $0x758] sm:$0xff]
    %v1707 = vld [vmem:[#allocation11 + $0x760] sm:$0xff]
    %v1708 = vld [vmem:[#allocation11 + $0x768] sm:$0xff]
    %v1709 = vld [vmem:[#allocation11 + $0x770] sm:$0xff]
    %v1710 = vld [vmem:[#allocation11 + $0x778] sm:$0xff]
    %v1711 = vld [vmem:[#allocation11 + $0x780] sm:$0xff]
    %v1712 = vld [vmem:[#allocation11 + $0x788] sm:$0xff]
    %v1713 = vld [vmem:[#allocation11 + $0x790] sm:$0xff]
    %v1714 = vld [vmem:[#allocation11 + $0x798] sm:$0xff]
    %v1715 = vld [vmem:[#allocation11 + $0x7a0] sm:$0xff]
    %v1716 = vld [vmem:[#allocation11 + $0x7a8] sm:$0xff]
    %v1717 = vld [vmem:[#allocation11 + $0x7b0] sm:$0xff]
    %v1718 = vld [vmem:[#allocation11 + $0x7b8] sm:$0xff]
    %v1719 = vld [vmem:[#allocation11 + $0x7c0] sm:$0xff]
    %v1720 = vld [vmem:[#allocation11 + $0x7c8] sm:$0xff]
    %v1721 = vld [vmem:[#allocation11 + $0x7d0] sm:$0xff]
    %v1722 = vld [vmem:[#allocation11 + $0x7d8] sm:$0xff]
    %v1723 = vld [vmem:[#allocation11 + $0x7e0] sm:$0xff]
    %v1724 = vld [vmem:[#allocation11 + $0x7e8] sm:$0xff]
    %v1725 = vld [vmem:[#allocation11 + $0x7f0] sm:$0xff]
    %v1726 = vld [vmem:[#allocation11 + $0x7f8] sm:$0xff]
    %1727 = vmatpush.msra.mxu0 %v1531
    %1728 = vmatpush.msra.mxu0 %v1527
    %1729 = vmatpush.msra.mxu0 %v1523
    %1730 = vmatpush.msra.mxu0 %v1519
    %1731 = vmatpush.msra.mxu0 %v1515
    %1732 = vmatpush.msra.mxu0 %v1511
    %1733 = vmatpush.msra.mxu0 %v1507
    %1734 = vmatpush.msra.mxu0 %v1503
    %1735 = vmatpush.msra.mxu0 %v1499
    %1736 = vmatpush.msra.mxu0 %v1495
    %1737 = vmatpush.msra.mxu0 %v1491
    %1738 = vmatpush.msra.mxu0 %v1487
    %1739 = vmatpush.msra.mxu0 %v1483
    %1740 = vmatpush.msra.mxu0 %v1479
    %1741 = vmatpush.msra.mxu0 %v1475
    %1742 = vmatpush.msra.mxu0 %v1471
    %1743 = vmatmul.f32.gmra.mxu0 %v1459
    %v1744 = vpop.f32.mrf.mxu0
    %v1745 = vadd.f32 0.0, %v1744
    %1746 = vmatmul.f32.gmra.mxu0 %v1463
    %v1747 = vpop.f32.mrf.mxu0
    %v1748 = vadd.f32 0.0, %v1747
    %1749 = vmatmul.f32.gmra.mxu0 %v1467
    %v1750 = vpop.f32.mrf.mxu0
    %v1751 = vadd.f32 0.0, %v1750
    %1752 = vdwg.mxu0
    %1753 = vmatpush.msra.mxu0 %v1595
    %1754 = vmatpush.msra.mxu0 %v1591
    %1755 = vmatpush.msra.mxu0 %v1587
    %1756 = vmatpush.msra.mxu0 %v1583
    %1757 = vmatpush.msra.mxu0 %v1579
    %1758 = vmatpush.msra.mxu0 %v1575
    %1759 = vmatpush.msra.mxu0 %v1571
    %1760 = vmatpush.msra.mxu0 %v1567
    %1761 = vmatpush.msra.mxu0 %v1563
    %1762 = vmatpush.msra.mxu0 %v1559
    %1763 = vmatpush.msra.mxu0 %v1555
    %1764 = vmatpush.msra.mxu0 %v1551
    %1765 = vmatpush.msra.mxu0 %v1547
    %1766 = vmatpush.msra.mxu0 %v1543
    %1767 = vmatpush.msra.mxu0 %v1539
    %1768 = vmatpush.msra.mxu0 %v1535
    %1769 = vmatmul.f32.gmra.mxu0 %v1460
    %v1770 = vpop.f32.mrf.mxu0
    %v1771 = vadd.f32 %v1745, %v1770
    %1772 = vmatmul.f32.gmra.mxu0 %v1464
    %v1773 = vpop.f32.mrf.mxu0
    %v1774 = vadd.f32 %v1748, %v1773
    %1775 = vmatmul.f32.gmra.mxu0 %v1468
    %v1776 = vpop.f32.mrf.mxu0
    %v1777 = vadd.f32 %v1751, %v1776
    %1778 = vdwg.mxu0
    %1779 = vmatpush.msra.mxu0 %v1659
    %1780 = vmatpush.msra.mxu0 %v1655
    %1781 = vmatpush.msra.mxu0 %v1651
    %1782 = vmatpush.msra.mxu0 %v1647
    %1783 = vmatpush.msra.mxu0 %v1643
    %1784 = vmatpush.msra.mxu0 %v1639
    %1785 = vmatpush.msra.mxu0 %v1635
    %1786 = vmatpush.msra.mxu0 %v1631
    %1787 = vmatpush.msra.mxu0 %v1627
    %1788 = vmatpush.msra.mxu0 %v1623
    %1789 = vmatpush.msra.mxu0 %v1619
    %1790 = vmatpush.msra.mxu0 %v1615
    %1791 = vmatpush.msra.mxu0 %v1611
    %1792 = vmatpush.msra.mxu0 %v1607
    %1793 = vmatpush.msra.mxu0 %v1603
    %1794 = vmatpush.msra.mxu0 %v1599
    %1795 = vmatmul.f32.gmra.mxu0 %v1461
    %v1796 = vpop.f32.mrf.mxu0
    %v1797 = vadd.f32 %v1771, %v1796
    %1798 = vmatmul.f32.gmra.mxu0 %v1465
    %v1799 = vpop.f32.mrf.mxu0
    %v1800 = vadd.f32 %v1774, %v1799
    %1801 = vmatmul.f32.gmra.mxu0 %v1469
    %v1802 = vpop.f32.mrf.mxu0
    %v1803 = vadd.f32 %v1777, %v1802
    %1804 = vdwg.mxu0
    %1805 = vmatpush.msra.mxu0 %v1723
    %1806 = vmatpush.msra.mxu0 %v1719
    %1807 = vmatpush.msra.mxu0 %v1715
    %1808 = vmatpush.msra.mxu0 %v1711
    %1809 = vmatpush.msra.mxu0 %v1707
    %1810 = vmatpush.msra.mxu0 %v1703
    %1811 = vmatpush.msra.mxu0 %v1699
    %1812 = vmatpush.msra.mxu0 %v1695
    %1813 = vmatpush.msra.mxu0 %v1691
    %1814 = vmatpush.msra.mxu0 %v1687
    %1815 = vmatpush.msra.mxu0 %v1683
    %1816 = vmatpush.msra.mxu0 %v1679
    %1817 = vmatpush.msra.mxu0 %v1675
    %1818 = vmatpush.msra.mxu0 %v1671
    %1819 = vmatpush.msra.mxu0 %v1667
    %1820 = vmatpush.msra.mxu0 %v1663
    %1821 = vmatmul.f32.gmra.mxu0 %v1462
    %v1822 = vpop.f32.mrf.mxu0
    %v1823 = vadd.f32 %v1797, %v1822
    %1824 = vmatmul.f32.gmra.mxu0 %v1466
    %v1825 = vpop.f32.mrf.mxu0
    %v1826 = vadd.f32 %v1800, %v1825
    %1827 = vmatmul.f32.gmra.mxu0 %v1470
    %v1828 = vpop.f32.mrf.mxu0
    %v1829 = vadd.f32 %v1803, %v1828
    %1830 = vdwg.mxu0
    %1831 = vmatpush.msra.mxu0 %v1532
    %1832 = vmatpush.msra.mxu0 %v1528
    %1833 = vmatpush.msra.mxu0 %v1524
    %1834 = vmatpush.msra.mxu0 %v1520
    %1835 = vmatpush.msra.mxu0 %v1516
    %1836 = vmatpush.msra.mxu0 %v1512
    %1837 = vmatpush.msra.mxu0 %v1508
    %1838 = vmatpush.msra.mxu0 %v1504
    %1839 = vmatpush.msra.mxu0 %v1500
    %1840 = vmatpush.msra.mxu0 %v1496
    %1841 = vmatpush.msra.mxu0 %v1492
    %1842 = vmatpush.msra.mxu0 %v1488
    %1843 = vmatpush.msra.mxu0 %v1484
    %1844 = vmatpush.msra.mxu0 %v1480
    %1845 = vmatpush.msra.mxu0 %v1476
    %1846 = vmatpush.msra.mxu0 %v1472
    %1847 = vmatmul.f32.gmra.mxu0 %v1459
    %v1848 = vpop.f32.mrf.mxu0
    %v1849 = vadd.f32 0.0, %v1848
    %1850 = vmatmul.f32.gmra.mxu0 %v1463
    %v1851 = vpop.f32.mrf.mxu0
    %v1852 = vadd.f32 0.0, %v1851
    %1853 = vmatmul.f32.gmra.mxu0 %v1467
    %v1854 = vpop.f32.mrf.mxu0
    %v1855 = vadd.f32 0.0, %v1854
    %1856 = vdwg.mxu0
    %1857 = vmatpush.msra.mxu0 %v1596
    %1858 = vmatpush.msra.mxu0 %v1592
    %1859 = vmatpush.msra.mxu0 %v1588
    %1860 = vmatpush.msra.mxu0 %v1584
    %1861 = vmatpush.msra.mxu0 %v1580
    %1862 = vmatpush.msra.mxu0 %v1576
    %1863 = vmatpush.msra.mxu0 %v1572
    %1864 = vmatpush.msra.mxu0 %v1568
    %1865 = vmatpush.msra.mxu0 %v1564
    %1866 = vmatpush.msra.mxu0 %v1560
    %1867 = vmatpush.msra.mxu0 %v1556
    %1868 = vmatpush.msra.mxu0 %v1552
    %1869 = vmatpush.msra.mxu0 %v1548
    %1870 = vmatpush.msra.mxu0 %v1544
    %1871 = vmatpush.msra.mxu0 %v1540
    %1872 = vmatpush.msra.mxu0 %v1536
    %1873 = vmatmul.f32.gmra.mxu0 %v1460
    %v1874 = vpop.f32.mrf.mxu0
    %v1875 = vadd.f32 %v1849, %v1874
    %1876 = vmatmul.f32.gmra.mxu0 %v1464
    %v1877 = vpop.f32.mrf.mxu0
    %v1878 = vadd.f32 %v1852, %v1877
    %1879 = vmatmul.f32.gmra.mxu0 %v1468
    %v1880 = vpop.f32.mrf.mxu0
    %v1881 = vadd.f32 %v1855, %v1880
    %1882 = vdwg.mxu0
    %1883 = vmatpush.msra.mxu0 %v1660
    %1884 = vmatpush.msra.mxu0 %v1656
    %1885 = vmatpush.msra.mxu0 %v1652
    %1886 = vmatpush.msra.mxu0 %v1648
    %1887 = vmatpush.msra.mxu0 %v1644
    %1888 = vmatpush.msra.mxu0 %v1640
    %1889 = vmatpush.msra.mxu0 %v1636
    %1890 = vmatpush.msra.mxu0 %v1632
    %1891 = vmatpush.msra.mxu0 %v1628
    %1892 = vmatpush.msra.mxu0 %v1624
    %1893 = vmatpush.msra.mxu0 %v1620
    %1894 = vmatpush.msra.mxu0 %v1616
    %1895 = vmatpush.msra.mxu0 %v1612
    %1896 = vmatpush.msra.mxu0 %v1608
    %1897 = vmatpush.msra.mxu0 %v1604
    %1898 = vmatpush.msra.mxu0 %v1600
    %1899 = vmatmul.f32.gmra.mxu0 %v1461
    %v1900 = vpop.f32.mrf.mxu0
    %v1901 = vadd.f32 %v1875, %v1900
    %1902 = vmatmul.f32.gmra.mxu0 %v1465
    %v1903 = vpop.f32.mrf.mxu0
    %v1904 = vadd.f32 %v1878, %v1903
    %1905 = vmatmul.f32.gmra.mxu0 %v1469
    %v1906 = vpop.f32.mrf.mxu0
    %v1907 = vadd.f32 %v1881, %v1906
    %1908 = vdwg.mxu0
    %1909 = vmatpush.msra.mxu0 %v1724
    %1910 = vmatpush.msra.mxu0 %v1720
    %1911 = vmatpush.msra.mxu0 %v1716
    %1912 = vmatpush.msra.mxu0 %v1712
    %1913 = vmatpush.msra.mxu0 %v1708
    %1914 = vmatpush.msra.mxu0 %v1704
    %1915 = vmatpush.msra.mxu0 %v1700
    %1916 = vmatpush.msra.mxu0 %v1696
    %1917 = vmatpush.msra.mxu0 %v1692
    %1918 = vmatpush.msra.mxu0 %v1688
    %1919 = vmatpush.msra.mxu0 %v1684
    %1920 = vmatpush.msra.mxu0 %v1680
    %1921 = vmatpush.msra.mxu0 %v1676
    %1922 = vmatpush.msra.mxu0 %v1672
    %1923 = vmatpush.msra.mxu0 %v1668
    %1924 = vmatpush.msra.mxu0 %v1664
    %1925 = vmatmul.f32.gmra.mxu0 %v1462
    %v1926 = vpop.f32.mrf.mxu0
    %v1927 = vadd.f32 %v1901, %v1926
    %1928 = vmatmul.f32.gmra.mxu0 %v1466
    %v1929 = vpop.f32.mrf.mxu0
    %v1930 = vadd.f32 %v1904, %v1929
    %1931 = vmatmul.f32.gmra.mxu0 %v1470
    %v1932 = vpop.f32.mrf.mxu0
    %v1933 = vadd.f32 %v1907, %v1932
    %1934 = vdwg.mxu0
    %1935 = vmatpush.msra.mxu0 %v1533
    %1936 = vmatpush.msra.mxu0 %v1529
    %1937 = vmatpush.msra.mxu0 %v1525
    %1938 = vmatpush.msra.mxu0 %v1521
    %1939 = vmatpush.msra.mxu0 %v1517
    %1940 = vmatpush.msra.mxu0 %v1513
    %1941 = vmatpush.msra.mxu0 %v1509
    %1942 = vmatpush.msra.mxu0 %v1505
    %1943 = vmatpush.msra.mxu0 %v1501
    %1944 = vmatpush.msra.mxu0 %v1497
    %1945 = vmatpush.msra.mxu0 %v1493
    %1946 = vmatpush.msra.mxu0 %v1489
    %1947 = vmatpush.msra.mxu0 %v1485
    %1948 = vmatpush.msra.mxu0 %v1481
    %1949 = vmatpush.msra.mxu0 %v1477
    %1950 = vmatpush.msra.mxu0 %v1473
    %1951 = vmatmul.f32.gmra.mxu0 %v1459
    %v1952 = vpop.f32.mrf.mxu0
    %v1953 = vadd.f32 0.0, %v1952
    %1954 = vmatmul.f32.gmra.mxu0 %v1463
    %v1955 = vpop.f32.mrf.mxu0
    %v1956 = vadd.f32 0.0, %v1955
    %1957 = vmatmul.f32.gmra.mxu0 %v1467
    %v1958 = vpop.f32.mrf.mxu0
    %v1959 = vadd.f32 0.0, %v1958
    %1960 = vdwg.mxu0
    %1961 = vmatpush.msra.mxu0 %v1597
    %1962 = vmatpush.msra.mxu0 %v1593
    %1963 = vmatpush.msra.mxu0 %v1589
    %1964 = vmatpush.msra.mxu0 %v1585
    %1965 = vmatpush.msra.mxu0 %v1581
    %1966 = vmatpush.msra.mxu0 %v1577
    %1967 = vmatpush.msra.mxu0 %v1573
    %1968 = vmatpush.msra.mxu0 %v1569
    %1969 = vmatpush.msra.mxu0 %v1565
    %1970 = vmatpush.msra.mxu0 %v1561
    %1971 = vmatpush.msra.mxu0 %v1557
    %1972 = vmatpush.msra.mxu0 %v1553
    %1973 = vmatpush.msra.mxu0 %v1549
    %1974 = vmatpush.msra.mxu0 %v1545
    %1975 = vmatpush.msra.mxu0 %v1541
    %1976 = vmatpush.msra.mxu0 %v1537
    %1977 = vmatmul.f32.gmra.mxu0 %v1460
    %v1978 = vpop.f32.mrf.mxu0
    %v1979 = vadd.f32 %v1953, %v1978
    %1980 = vmatmul.f32.gmra.mxu0 %v1464
    %v1981 = vpop.f32.mrf.mxu0
    %v1982 = vadd.f32 %v1956, %v1981
    %1983 = vmatmul.f32.gmra.mxu0 %v1468
    %v1984 = vpop.f32.mrf.mxu0
    %v1985 = vadd.f32 %v1959, %v1984
    %1986 = vdwg.mxu0
    %1987 = vmatpush.msra.mxu0 %v1661
    %1988 = vmatpush.msra.mxu0 %v1657
    %1989 = vmatpush.msra.mxu0 %v1653
    %1990 = vmatpush.msra.mxu0 %v1649
    %1991 = vmatpush.msra.mxu0 %v1645
    %1992 = vmatpush.msra.mxu0 %v1641
    %1993 = vmatpush.msra.mxu0 %v1637
    %1994 = vmatpush.msra.mxu0 %v1633
    %1995 = vmatpush.msra.mxu0 %v1629
    %1996 = vmatpush.msra.mxu0 %v1625
    %1997 = vmatpush.msra.mxu0 %v1621
    %1998 = vmatpush.msra.mxu0 %v1617
    %1999 = vmatpush.msra.mxu0 %v1613
    %2000 = vmatpush.msra.mxu0 %v1609
    %2001 = vmatpush.msra.mxu0 %v1605
    %2002 = vmatpush.msra.mxu0 %v1601
    %2003 = vmatmul.f32.gmra.mxu0 %v1461
    %v2004 = vpop.f32.mrf.mxu0
    %v2005 = vadd.f32 %v1979, %v2004
    %2006 = vmatmul.f32.gmra.mxu0 %v1465
    %v2007 = vpop.f32.mrf.mxu0
    %v2008 = vadd.f32 %v1982, %v2007
    %2009 = vmatmul.f32.gmra.mxu0 %v1469
    %v2010 = vpop.f32.mrf.mxu0
    %v2011 = vadd.f32 %v1985, %v2010
    %2012 = vdwg.mxu0
    %2013 = vmatpush.msra.mxu0 %v1725
    %2014 = vmatpush.msra.mxu0 %v1721
    %2015 = vmatpush.msra.mxu0 %v1717
    %2016 = vmatpush.msra.mxu0 %v1713
    %2017 = vmatpush.msra.mxu0 %v1709
    %2018 = vmatpush.msra.mxu0 %v1705
    %2019 = vmatpush.msra.mxu0 %v1701
    %2020 = vmatpush.msra.mxu0 %v1697
    %2021 = vmatpush.msra.mxu0 %v1693
    %2022 = vmatpush.msra.mxu0 %v1689
    %2023 = vmatpush.msra.mxu0 %v1685
    %2024 = vmatpush.msra.mxu0 %v1681
    %2025 = vmatpush.msra.mxu0 %v1677
    %2026 = vmatpush.msra.mxu0 %v1673
    %2027 = vmatpush.msra.mxu0 %v1669
    %2028 = vmatpush.msra.mxu0 %v1665
    %2029 = vmatmul.f32.gmra.mxu0 %v1462
    %v2030 = vpop.f32.mrf.mxu0
    %v2031 = vadd.f32 %v2005, %v2030
    %2032 = vmatmul.f32.gmra.mxu0 %v1466
    %v2033 = vpop.f32.mrf.mxu0
    %v2034 = vadd.f32 %v2008, %v2033
    %2035 = vmatmul.f32.gmra.mxu0 %v1470
    %v2036 = vpop.f32.mrf.mxu0
    %v2037 = vadd.f32 %v2011, %v2036
    %2038 = vdwg.mxu0
    %2039 = vmatpush.msra.mxu0 %v1534
    %2040 = vmatpush.msra.mxu0 %v1530
    %2041 = vmatpush.msra.mxu0 %v1526
    %2042 = vmatpush.msra.mxu0 %v1522
    %2043 = vmatpush.msra.mxu0 %v1518
    %2044 = vmatpush.msra.mxu0 %v1514
    %2045 = vmatpush.msra.mxu0 %v1510
    %2046 = vmatpush.msra.mxu0 %v1506
    %2047 = vmatpush.msra.mxu0 %v1502
    %2048 = vmatpush.msra.mxu0 %v1498
    %2049 = vmatpush.msra.mxu0 %v1494
    %2050 = vmatpush.msra.mxu0 %v1490
    %2051 = vmatpush.msra.mxu0 %v1486
    %2052 = vmatpush.msra.mxu0 %v1482
    %2053 = vmatpush.msra.mxu0 %v1478
    %2054 = vmatpush.msra.mxu0 %v1474
    %2055 = vmatmul.f32.gmra.mxu0 %v1459
    %v2056 = vpop.f32.mrf.mxu0
    %v2057 = vadd.f32 0.0, %v2056
    %2058 = vmatmul.f32.gmra.mxu0 %v1463
    %v2059 = vpop.f32.mrf.mxu0
    %v2060 = vadd.f32 0.0, %v2059
    %2061 = vmatmul.f32.gmra.mxu0 %v1467
    %v2062 = vpop.f32.mrf.mxu0
    %v2063 = vadd.f32 0.0, %v2062
    %2064 = vdwg.mxu0
    %2065 = vmatpush.msra.mxu0 %v1598
    %2066 = vmatpush.msra.mxu0 %v1594
    %2067 = vmatpush.msra.mxu0 %v1590
    %2068 = vmatpush.msra.mxu0 %v1586
    %2069 = vmatpush.msra.mxu0 %v1582
    %2070 = vmatpush.msra.mxu0 %v1578
    %2071 = vmatpush.msra.mxu0 %v1574
    %2072 = vmatpush.msra.mxu0 %v1570
    %2073 = vmatpush.msra.mxu0 %v1566
    %2074 = vmatpush.msra.mxu0 %v1562
    %2075 = vmatpush.msra.mxu0 %v1558
    %2076 = vmatpush.msra.mxu0 %v1554
    %2077 = vmatpush.msra.mxu0 %v1550
    %2078 = vmatpush.msra.mxu0 %v1546
    %2079 = vmatpush.msra.mxu0 %v1542
    %2080 = vmatpush.msra.mxu0 %v1538
    %2081 = vmatmul.f32.gmra.mxu0 %v1460
    %v2082 = vpop.f32.mrf.mxu0
    %v2083 = vadd.f32 %v2057, %v2082
    %2084 = vmatmul.f32.gmra.mxu0 %v1464
    %v2085 = vpop.f32.mrf.mxu0
    %v2086 = vadd.f32 %v2060, %v2085
    %2087 = vmatmul.f32.gmra.mxu0 %v1468
    %v2088 = vpop.f32.mrf.mxu0
    %v2089 = vadd.f32 %v2063, %v2088
    %2090 = vdwg.mxu0
    %2091 = vmatpush.msra.mxu0 %v1662
    %2092 = vmatpush.msra.mxu0 %v1658
    %2093 = vmatpush.msra.mxu0 %v1654
    %2094 = vmatpush.msra.mxu0 %v1650
    %2095 = vmatpush.msra.mxu0 %v1646
    %2096 = vmatpush.msra.mxu0 %v1642
    %2097 = vmatpush.msra.mxu0 %v1638
    %2098 = vmatpush.msra.mxu0 %v1634
    %2099 = vmatpush.msra.mxu0 %v1630
    %2100 = vmatpush.msra.mxu0 %v1626
    %2101 = vmatpush.msra.mxu0 %v1622
    %2102 = vmatpush.msra.mxu0 %v1618
    %2103 = vmatpush.msra.mxu0 %v1614
    %2104 = vmatpush.msra.mxu0 %v1610
    %2105 = vmatpush.msra.mxu0 %v1606
    %2106 = vmatpush.msra.mxu0 %v1602
    %2107 = vmatmul.f32.gmra.mxu0 %v1461
    %v2108 = vpop.f32.mrf.mxu0
    %v2109 = vadd.f32 %v2083, %v2108
    %2110 = vmatmul.f32.gmra.mxu0 %v1465
    %v2111 = vpop.f32.mrf.mxu0
    %v2112 = vadd.f32 %v2086, %v2111
    %2113 = vmatmul.f32.gmra.mxu0 %v1469
    %v2114 = vpop.f32.mrf.mxu0
    %v2115 = vadd.f32 %v2089, %v2114
    %2116 = vdwg.mxu0
    %2117 = vmatpush.msra.mxu0 %v1726
    %2118 = vmatpush.msra.mxu0 %v1722
    %2119 = vmatpush.msra.mxu0 %v1718
    %2120 = vmatpush.msra.mxu0 %v1714
    %2121 = vmatpush.msra.mxu0 %v1710
    %2122 = vmatpush.msra.mxu0 %v1706
    %2123 = vmatpush.msra.mxu0 %v1702
    %2124 = vmatpush.msra.mxu0 %v1698
    %2125 = vmatpush.msra.mxu0 %v1694
    %2126 = vmatpush.msra.mxu0 %v1690
    %2127 = vmatpush.msra.mxu0 %v1686
    %2128 = vmatpush.msra.mxu0 %v1682
    %2129 = vmatpush.msra.mxu0 %v1678
    %2130 = vmatpush.msra.mxu0 %v1674
    %2131 = vmatpush.msra.mxu0 %v1670
    %2132 = vmatpush.msra.mxu0 %v1666
    %2133 = vmatmul.f32.gmra.mxu0 %v1462
    %v2134 = vpop.f32.mrf.mxu0
    %v2135 = vadd.f32 %v2109, %v2134
    %2136 = vmatmul.f32.gmra.mxu0 %v1466
    %v2137 = vpop.f32.mrf.mxu0
    %v2138 = vadd.f32 %v2112, %v2137
    %2139 = vmatmul.f32.gmra.mxu0 %v1470
    %v2140 = vpop.f32.mrf.mxu0
    %v2141 = vadd.f32 %v2115, %v2140
    %2142 = vdwg.mxu0
    %2145 = vrot.lane.b32.xlu0 %v494, 64
    %v2146 = vpop.permute.xlu0 %2145
    %2147 = vrot.lane.b32.xlu0 %v497, 64
    %v2148 = vpop.permute.xlu0 %2147
    %2153 = vrot.lane.b32.xlu0 %v586, 64
    %v2154 = vpop.permute.xlu0 %2153
    %2155 = vrot.lane.b32.xlu0 %v589, 64
    %v2156 = vpop.permute.xlu0 %2155
    %2161 = vrot.lane.b32.xlu0 %v678, 64
    %v2162 = vpop.permute.xlu0 %2161
    %2163 = vrot.lane.b32.xlu0 %v681, 64
    %v2164 = vpop.permute.xlu0 %2163
    %2169 = vrot.lane.b32.xlu0 %v770, 64
    %v2170 = vpop.permute.xlu0 %2169
    %2171 = vrot.lane.b32.xlu0 %v773, 64
    %v2172 = vpop.permute.xlu0 %2171
    %v2175 = vrot.slane %v586, 4
    %vm2176 = vcmask 1047556
    %v2177 = vsel %vm2176, %v2175, %v494
    %v2178 = vrot.slane %v494, 4
    %v2179 = vsel %vm2176, %v586, %v2178
    %v2181 = vunpack.c.l.s4 1983009808
    %v2182 = vunpack.c.0.s8 %v2181
    %v2183 = vperm.slane %v2177, %v2182
    %v2185 = vunpack.c.l.s4 1983009808
    %v2186 = vunpack.c.0.s8 %v2185
    %v2187 = vperm.slane %v2179, %v2186
    %v2188 = vrot.slane %v2154, 4
    %v2189 = vsel %vm2176, %v2188, %v2146
    %v2190 = vrot.slane %v2146, 4
    %v2191 = vsel %vm2176, %v2154, %v2190
    %v2193 = vunpack.c.l.s4 1983009808
    %v2194 = vunpack.c.0.s8 %v2193
    %v2195 = vperm.slane %v2189, %v2194
    %v2197 = vunpack.c.l.s4 1983009808
    %v2198 = vunpack.c.0.s8 %v2197
    %v2199 = vperm.slane %v2191, %v2198
    %v2200 = vrot.slane %v770, 4
    %v2201 = vsel %vm2176, %v2200, %v678
    %v2202 = vrot.slane %v678, 4
    %v2203 = vsel %vm2176, %v770, %v2202
    %v2205 = vunpack.c.l.s4 1983009808
    %v2206 = vunpack.c.0.s8 %v2205
    %v2207 = vperm.slane %v2201, %v2206
    %v2209 = vunpack.c.l.s4 1983009808
    %v2210 = vunpack.c.0.s8 %v2209
    %v2211 = vperm.slane %v2203, %v2210
    %v2212 = vrot.slane %v2170, 4
    %v2213 = vsel %vm2176, %v2212, %v2162
    %v2214 = vrot.slane %v2162, 4
    %v2215 = vsel %vm2176, %v2170, %v2214
    %v2217 = vunpack.c.l.s4 1983009808
    %v2218 = vunpack.c.0.s8 %v2217
    %v2219 = vperm.slane %v2213, %v2218
    %v2221 = vunpack.c.l.s4 1983009808
    %v2222 = vunpack.c.0.s8 %v2221
    %v2223 = vperm.slane %v2215, %v2222
    %v2224 = vrot.slane %v2195, 4
    %v2225 = vsel %vm2176, %v2224, %v2183
    %v2226 = vrot.slane %v2183, 4
    %v2227 = vsel %vm2176, %v2195, %v2226
    %v2229 = vunpack.c.l.s4 1934713408
    %v2230 = vunpack.c.0.s8 %v2229
    %v2231 = vperm.slane %v2225, %v2230
    %v2233 = vunpack.c.l.s4 1934713408
    %v2234 = vunpack.c.0.s8 %v2233
    %v2235 = vperm.slane %v2227, %v2234
    %v2236 = vrot.slane %v2199, 4
    %v2237 = vsel %vm2176, %v2236, %v2187
    %v2238 = vrot.slane %v2187, 4
    %v2239 = vsel %vm2176, %v2199, %v2238
    %v2241 = vunpack.c.l.s4 1934713408
    %v2242 = vunpack.c.0.s8 %v2241
    %v2243 = vperm.slane %v2237, %v2242
    %v2245 = vunpack.c.l.s4 1934713408
    %v2246 = vunpack.c.0.s8 %v2245
    %v2247 = vperm.slane %v2239, %v2246
    %v2248 = vrot.slane %v2219, 4
    %v2249 = vsel %vm2176, %v2248, %v2207
    %v2250 = vrot.slane %v2207, 4
    %v2251 = vsel %vm2176, %v2219, %v2250
    %v2253 = vunpack.c.l.s4 1934713408
    %v2254 = vunpack.c.0.s8 %v2253
    %v2255 = vperm.slane %v2249, %v2254
    %v2257 = vunpack.c.l.s4 1934713408
    %v2258 = vunpack.c.0.s8 %v2257
    %v2259 = vperm.slane %v2251, %v2258
    %v2260 = vrot.slane %v2223, 4
    %v2261 = vsel %vm2176, %v2260, %v2211
    %v2262 = vrot.slane %v2211, 4
    %v2263 = vsel %vm2176, %v2223, %v2262
    %v2265 = vunpack.c.l.s4 1934713408
    %v2266 = vunpack.c.0.s8 %v2265
    %v2267 = vperm.slane %v2261, %v2266
    %v2269 = vunpack.c.l.s4 1934713408
    %v2270 = vunpack.c.0.s8 %v2269
    %v2271 = vperm.slane %v2263, %v2270
    %v2272 = vrot.slane %v2255, 4
    %v2273 = vsel %vm2176, %v2272, %v2231
    %v2274 = vrot.slane %v2231, 4
    %v2275 = vsel %vm2176, %v2255, %v2274
    %v2276 = vrot.slane %v2259, 4
    %v2277 = vsel %vm2176, %v2276, %v2235
    %v2278 = vrot.slane %v2235, 4
    %v2279 = vsel %vm2176, %v2259, %v2278
    %v2280 = vrot.slane %v2267, 4
    %v2281 = vsel %vm2176, %v2280, %v2243
    %v2282 = vrot.slane %v2243, 4
    %v2283 = vsel %vm2176, %v2267, %v2282
    %v2284 = vrot.slane %v2271, 4
    %v2285 = vsel %vm2176, %v2284, %v2247
    %v2286 = vrot.slane %v2247, 4
    %v2287 = vsel %vm2176, %v2271, %v2286
    %v2288 = vrot.slane %v589, 4
    %v2289 = vsel %vm2176, %v2288, %v497
    %v2291 = vunpack.c.l.s4 1983009808
    %v2292 = vunpack.c.0.s8 %v2291
    %v2293 = vperm.slane %v2289, %v2292
    %v2294 = vrot.slane %v2156, 4
    %v2295 = vsel %vm2176, %v2294, %v2148
    %v2297 = vunpack.c.l.s4 1983009808
    %v2298 = vunpack.c.0.s8 %v2297
    %v2299 = vperm.slane %v2295, %v2298
    %v2300 = vrot.slane %v773, 4
    %v2301 = vsel %vm2176, %v2300, %v681
    %v2303 = vunpack.c.l.s4 1983009808
    %v2304 = vunpack.c.0.s8 %v2303
    %v2305 = vperm.slane %v2301, %v2304
    %v2306 = vrot.slane %v2172, 4
    %v2307 = vsel %vm2176, %v2306, %v2164
    %v2309 = vunpack.c.l.s4 1983009808
    %v2310 = vunpack.c.0.s8 %v2309
    %v2311 = vperm.slane %v2307, %v2310
    %v2312 = vrot.slane %v2299, 4
    %v2313 = vsel %vm2176, %v2312, %v2293
    %v2315 = vunpack.c.l.s4 1934713408
    %v2316 = vunpack.c.0.s8 %v2315
    %v2317 = vperm.slane %v2313, %v2316
    %v2318 = vrot.slane %v2311, 4
    %v2319 = vsel %vm2176, %v2318, %v2305
    %v2321 = vunpack.c.l.s4 1934713408
    %v2322 = vunpack.c.0.s8 %v2321
    %v2323 = vperm.slane %v2319, %v2322
    %v2324 = vrot.slane %v2323, 4
    %v2325 = vsel %vm2176, %v2324, %v2317
    %v2326 = vrot.slane %v2317, 4
    %v2327 = vsel %vm2176, %v2323, %v2326
    %v2328 = vrot.slane %v2277, 4
    %v2329 = vsel %vm2176, %v2328, %v2273
    %v2330 = vrot.slane %v2273, 4
    %v2331 = vsel %vm2176, %v2277, %v2330
    %v2333 = vunpack.c.l.s4 1983009808
    %v2334 = vunpack.c.0.s8 %v2333
    %v2335 = vperm.slane %v2329, %v2334
    %v2337 = vunpack.c.l.s4 1983009808
    %v2338 = vunpack.c.0.s8 %v2337
    %v2339 = vperm.slane %v2331, %v2338
    %v2340 = vrot.slane %v2279, 4
    %v2341 = vsel %vm2176, %v2340, %v2275
    %v2342 = vrot.slane %v2275, 4
    %v2343 = vsel %vm2176, %v2279, %v2342
    %v2345 = vunpack.c.l.s4 1983009808
    %v2346 = vunpack.c.0.s8 %v2345
    %v2347 = vperm.slane %v2341, %v2346
    %v2349 = vunpack.c.l.s4 1983009808
    %v2350 = vunpack.c.0.s8 %v2349
    %v2351 = vperm.slane %v2343, %v2350
    %v2352 = vrot.slane %v2281, 4
    %v2353 = vsel %vm2176, 0.0, %v2352
    %v2355 = vunpack.c.l.s4 1983009808
    %v2356 = vunpack.c.0.s8 %v2355
    %v2357 = vperm.slane %v2281, %v2356
    %v2359 = vunpack.c.l.s4 1983009808
    %v2360 = vunpack.c.0.s8 %v2359
    %v2361 = vperm.slane %v2353, %v2360
    %v2362 = vrot.slane %v2347, 4
    %v2363 = vsel %vm2176, %v2362, %v2335
    %v2364 = vrot.slane %v2335, 4
    %v2365 = vsel %vm2176, %v2347, %v2364
    %v2367 = vunpack.c.l.s4 1934713408
    %v2368 = vunpack.c.0.s8 %v2367
    %v2369 = vperm.slane %v2363, %v2368
    %v2371 = vunpack.c.l.s4 1934713408
    %v2372 = vunpack.c.0.s8 %v2371
    %v2373 = vperm.slane %v2365, %v2372
    %v2374 = vrot.slane %v2351, 4
    %v2375 = vsel %vm2176, %v2374, %v2339
    %v2376 = vrot.slane %v2339, 4
    %v2377 = vsel %vm2176, %v2351, %v2376
    %v2379 = vunpack.c.l.s4 1934713408
    %v2380 = vunpack.c.0.s8 %v2379
    %v2381 = vperm.slane %v2375, %v2380
    %v2383 = vunpack.c.l.s4 1934713408
    %v2384 = vunpack.c.0.s8 %v2383
    %v2385 = vperm.slane %v2377, %v2384
    %v2386 = vrot.slane %v2357, 4
    %v2387 = vsel %vm2176, 0.0, %v2386
    %v2389 = vunpack.c.l.s4 1934713408
    %v2390 = vunpack.c.0.s8 %v2389
    %v2391 = vperm.slane %v2357, %v2390
    %v2393 = vunpack.c.l.s4 1934713408
    %v2394 = vunpack.c.0.s8 %v2393
    %v2395 = vperm.slane %v2387, %v2394
    %v2396 = vrot.slane %v2361, 4
    %v2397 = vsel %vm2176, 0.0, %v2396
    %v2399 = vunpack.c.l.s4 1934713408
    %v2400 = vunpack.c.0.s8 %v2399
    %v2401 = vperm.slane %v2361, %v2400
    %v2403 = vunpack.c.l.s4 1934713408
    %v2404 = vunpack.c.0.s8 %v2403
    %v2405 = vperm.slane %v2397, %v2404
    %v2406 = vrot.slane %v2391, 4
    %v2407 = vsel %vm2176, %v2406, %v2369
    %v2408 = vrot.slane %v2369, 4
    %v2409 = vsel %vm2176, %v2391, %v2408
    %v2410 = vrot.slane %v2395, 4
    %v2411 = vsel %vm2176, %v2410, %v2373
    %v2412 = vrot.slane %v2373, 4
    %v2413 = vsel %vm2176, %v2395, %v2412
    %v2414 = vrot.slane %v2401, 4
    %v2415 = vsel %vm2176, %v2414, %v2381
    %v2416 = vrot.slane %v2381, 4
    %v2417 = vsel %vm2176, %v2401, %v2416
    %v2418 = vrot.slane %v2405, 4
    %v2419 = vsel %vm2176, %v2418, %v2385
    %v2420 = vrot.slane %v2385, 4
    %v2421 = vsel %vm2176, %v2405, %v2420
    %v2422 = vrot.slane %v2287, 4
    %v2423 = vsel %vm2176, %v2422, %v2283
    %v2424 = vrot.slane %v2283, 4
    %v2425 = vsel %vm2176, %v2287, %v2424
    %v2427 = vunpack.c.l.s4 1983009808
    %v2428 = vunpack.c.0.s8 %v2427
    %v2429 = vperm.slane %v2423, %v2428
    %v2431 = vunpack.c.l.s4 1983009808
    %v2432 = vunpack.c.0.s8 %v2431
    %v2433 = vperm.slane %v2425, %v2432
    %v2434 = vrot.slane %v2325, 4
    %v2435 = vsel %vm2176, %v2434, %v2285
    %v2436 = vrot.slane %v2285, 4
    %v2437 = vsel %vm2176, %v2325, %v2436
    %v2439 = vunpack.c.l.s4 1983009808
    %v2440 = vunpack.c.0.s8 %v2439
    %v2441 = vperm.slane %v2435, %v2440
    %v2443 = vunpack.c.l.s4 1983009808
    %v2444 = vunpack.c.0.s8 %v2443
    %v2445 = vperm.slane %v2437, %v2444
    %v2446 = vrot.slane %v2327, 4
    %v2447 = vsel %vm2176, 0.0, %v2446
    %v2449 = vunpack.c.l.s4 1983009808
    %v2450 = vunpack.c.0.s8 %v2449
    %v2451 = vperm.slane %v2327, %v2450
    %v2453 = vunpack.c.l.s4 1983009808
    %v2454 = vunpack.c.0.s8 %v2453
    %v2455 = vperm.slane %v2447, %v2454
    %v2456 = vrot.slane %v2441, 4
    %v2457 = vsel %vm2176, %v2456, %v2429
    %v2458 = vrot.slane %v2429, 4
    %v2459 = vsel %vm2176, %v2441, %v2458
    %v2461 = vunpack.c.l.s4 1934713408
    %v2462 = vunpack.c.0.s8 %v2461
    %v2463 = vperm.slane %v2457, %v2462
    %v2465 = vunpack.c.l.s4 1934713408
    %v2466 = vunpack.c.0.s8 %v2465
    %v2467 = vperm.slane %v2459, %v2466
    %v2468 = vrot.slane %v2445, 4
    %v2469 = vsel %vm2176, %v2468, %v2433
    %v2470 = vrot.slane %v2433, 4
    %v2471 = vsel %vm2176, %v2445, %v2470
    %v2473 = vunpack.c.l.s4 1934713408
    %v2474 = vunpack.c.0.s8 %v2473
    %v2475 = vperm.slane %v2469, %v2474
    %v2477 = vunpack.c.l.s4 1934713408
    %v2478 = vunpack.c.0.s8 %v2477
    %v2479 = vperm.slane %v2471, %v2478
    %v2480 = vrot.slane %v2451, 4
    %v2481 = vsel %vm2176, 0.0, %v2480
    %v2483 = vunpack.c.l.s4 1934713408
    %v2484 = vunpack.c.0.s8 %v2483
    %v2485 = vperm.slane %v2451, %v2484
    %v2487 = vunpack.c.l.s4 1934713408
    %v2488 = vunpack.c.0.s8 %v2487
    %v2489 = vperm.slane %v2481, %v2488
    %v2490 = vrot.slane %v2455, 4
    %v2491 = vsel %vm2176, 0.0, %v2490
    %v2493 = vunpack.c.l.s4 1934713408
    %v2494 = vunpack.c.0.s8 %v2493
    %v2495 = vperm.slane %v2455, %v2494
    %v2497 = vunpack.c.l.s4 1934713408
    %v2498 = vunpack.c.0.s8 %v2497
    %v2499 = vperm.slane %v2491, %v2498
    %v2500 = vrot.slane %v2485, 4
    %v2501 = vsel %vm2176, %v2500, %v2463
    %v2502 = vrot.slane %v2463, 4
    %v2503 = vsel %vm2176, %v2485, %v2502
    %v2504 = vrot.slane %v2489, 4
    %v2505 = vsel %vm2176, %v2504, %v2467
    %v2506 = vrot.slane %v2467, 4
    %v2507 = vsel %vm2176, %v2489, %v2506
    %v2508 = vrot.slane %v2495, 4
    %v2509 = vsel %vm2176, %v2508, %v2475
    %v2510 = vrot.slane %v2475, 4
    %v2511 = vsel %vm2176, %v2495, %v2510
    %v2512 = vrot.slane %v2499, 4
    %v2513 = vsel %vm2176, %v2512, %v2479
    %v2514 = vrot.slane %v2479, 4
    %v2515 = vsel %vm2176, %v2499, %v2514
    %2519 = vrot.lane.b32.xlu0 %v1139, 64
    %v2520 = vpop.permute.xlu0 %2519
    %2521 = vrot.lane.b32.xlu0 %v1142, 64
    %v2522 = vpop.permute.xlu0 %2521
    %2523 = vrot.lane.b32.xlu0 %v1145, 64
    %v2524 = vpop.permute.xlu0 %2523
    %2531 = vrot.lane.b32.xlu0 %v1243, 64
    %v2532 = vpop.permute.xlu0 %2531
    %2533 = vrot.lane.b32.xlu0 %v1246, 64
    %v2534 = vpop.permute.xlu0 %2533
    %2535 = vrot.lane.b32.xlu0 %v1249, 64
    %v2536 = vpop.permute.xlu0 %2535
    %2543 = vrot.lane.b32.xlu0 %v1347, 64
    %v2544 = vpop.permute.xlu0 %2543
    %2545 = vrot.lane.b32.xlu0 %v1350, 64
    %v2546 = vpop.permute.xlu0 %2545
    %2547 = vrot.lane.b32.xlu0 %v1353, 64
    %v2548 = vpop.permute.xlu0 %2547
    %2555 = vrot.lane.b32.xlu0 %v1451, 64
    %v2556 = vpop.permute.xlu0 %2555
    %2557 = vrot.lane.b32.xlu0 %v1454, 64
    %v2558 = vpop.permute.xlu0 %2557
    %2559 = vrot.lane.b32.xlu0 %v1457, 64
    %v2560 = vpop.permute.xlu0 %2559
    %v2564 = vrot.slane %v1243, 4
    %v2565 = vsel %vm2176, %v2564, %v1139
    %v2566 = vrot.slane %v1139, 4
    %v2567 = vsel %vm2176, %v1243, %v2566
    %v2569 = vunpack.c.l.s4 1983009808
    %v2570 = vunpack.c.0.s8 %v2569
    %v2571 = vperm.slane %v2565, %v2570
    %v2573 = vunpack.c.l.s4 1983009808
    %v2574 = vunpack.c.0.s8 %v2573
    %v2575 = vperm.slane %v2567, %v2574
    %v2576 = vrot.slane %v2532, 4
    %v2577 = vsel %vm2176, %v2576, %v2520
    %v2578 = vrot.slane %v2520, 4
    %v2579 = vsel %vm2176, %v2532, %v2578
    %v2581 = vunpack.c.l.s4 1983009808
    %v2582 = vunpack.c.0.s8 %v2581
    %v2583 = vperm.slane %v2577, %v2582
    %v2585 = vunpack.c.l.s4 1983009808
    %v2586 = vunpack.c.0.s8 %v2585
    %v2587 = vperm.slane %v2579, %v2586
    %v2588 = vrot.slane %v1451, 4
    %v2589 = vsel %vm2176, %v2588, %v1347
    %v2590 = vrot.slane %v1347, 4
    %v2591 = vsel %vm2176, %v1451, %v2590
    %v2593 = vunpack.c.l.s4 1983009808
    %v2594 = vunpack.c.0.s8 %v2593
    %v2595 = vperm.slane %v2589, %v2594
    %v2597 = vunpack.c.l.s4 1983009808
    %v2598 = vunpack.c.0.s8 %v2597
    %v2599 = vperm.slane %v2591, %v2598
    %v2600 = vrot.slane %v2556, 4
    %v2601 = vsel %vm2176, %v2600, %v2544
    %v2602 = vrot.slane %v2544, 4
    %v2603 = vsel %vm2176, %v2556, %v2602
    %v2605 = vunpack.c.l.s4 1983009808
    %v2606 = vunpack.c.0.s8 %v2605
    %v2607 = vperm.slane %v2601, %v2606
    %v2609 = vunpack.c.l.s4 1983009808
    %v2610 = vunpack.c.0.s8 %v2609
    %v2611 = vperm.slane %v2603, %v2610
    %v2612 = vrot.slane %v2583, 4
    %v2613 = vsel %vm2176, %v2612, %v2571
    %v2614 = vrot.slane %v2571, 4
    %v2615 = vsel %vm2176, %v2583, %v2614
    %v2617 = vunpack.c.l.s4 1934713408
    %v2618 = vunpack.c.0.s8 %v2617
    %v2619 = vperm.slane %v2613, %v2618
    %v2621 = vunpack.c.l.s4 1934713408
    %v2622 = vunpack.c.0.s8 %v2621
    %v2623 = vperm.slane %v2615, %v2622
    %v2624 = vrot.slane %v2587, 4
    %v2625 = vsel %vm2176, %v2624, %v2575
    %v2626 = vrot.slane %v2575, 4
    %v2627 = vsel %vm2176, %v2587, %v2626
    %v2629 = vunpack.c.l.s4 1934713408
    %v2630 = vunpack.c.0.s8 %v2629
    %v2631 = vperm.slane %v2625, %v2630
    %v2633 = vunpack.c.l.s4 1934713408
    %v2634 = vunpack.c.0.s8 %v2633
    %v2635 = vperm.slane %v2627, %v2634
    %v2636 = vrot.slane %v2607, 4
    %v2637 = vsel %vm2176, %v2636, %v2595
    %v2638 = vrot.slane %v2595, 4
    %v2639 = vsel %vm2176, %v2607, %v2638
    %v2641 = vunpack.c.l.s4 1934713408
    %v2642 = vunpack.c.0.s8 %v2641
    %v2643 = vperm.slane %v2637, %v2642
    %v2645 = vunpack.c.l.s4 1934713408
    %v2646 = vunpack.c.0.s8 %v2645
    %v2647 = vperm.slane %v2639, %v2646
    %v2648 = vrot.slane %v2611, 4
    %v2649 = vsel %vm2176, %v2648, %v2599
    %v2650 = vrot.slane %v2599, 4
    %v2651 = vsel %vm2176, %v2611, %v2650
    %v2653 = vunpack.c.l.s4 1934713408
    %v2654 = vunpack.c.0.s8 %v2653
    %v2655 = vperm.slane %v2649, %v2654
    %v2657 = vunpack.c.l.s4 1934713408
    %v2658 = vunpack.c.0.s8 %v2657
    %v2659 = vperm.slane %v2651, %v2658
    %v2660 = vrot.slane %v2643, 4
    %v2661 = vsel %vm2176, %v2660, %v2619
    %v2662 = vrot.slane %v2619, 4
    %v2663 = vsel %vm2176, %v2643, %v2662
    %v2664 = vrot.slane %v2647, 4
    %v2665 = vsel %vm2176, %v2664, %v2623
    %v2666 = vrot.slane %v2623, 4
    %v2667 = vsel %vm2176, %v2647, %v2666
    %v2668 = vrot.slane %v2655, 4
    %v2669 = vsel %vm2176, %v2668, %v2631
    %v2670 = vrot.slane %v2631, 4
    %v2671 = vsel %vm2176, %v2655, %v2670
    %v2672 = vrot.slane %v2659, 4
    %v2673 = vsel %vm2176, %v2672, %v2635
    %v2674 = vrot.slane %v2635, 4
    %v2675 = vsel %vm2176, %v2659, %v2674
    %v2676 = vrot.slane %v1246, 4
    %v2677 = vsel %vm2176, %v2676, %v1142
    %v2678 = vrot.slane %v1142, 4
    %v2679 = vsel %vm2176, %v1246, %v2678
    %v2681 = vunpack.c.l.s4 1983009808
    %v2682 = vunpack.c.0.s8 %v2681
    %v2683 = vperm.slane %v2677, %v2682
    %v2685 = vunpack.c.l.s4 1983009808
    %v2686 = vunpack.c.0.s8 %v2685
    %v2687 = vperm.slane %v2679, %v2686
    %v2688 = vrot.slane %v2534, 4
    %v2689 = vsel %vm2176, %v2688, %v2522
    %v2690 = vrot.slane %v2522, 4
    %v2691 = vsel %vm2176, %v2534, %v2690
    %v2693 = vunpack.c.l.s4 1983009808
    %v2694 = vunpack.c.0.s8 %v2693
    %v2695 = vperm.slane %v2689, %v2694
    %v2697 = vunpack.c.l.s4 1983009808
    %v2698 = vunpack.c.0.s8 %v2697
    %v2699 = vperm.slane %v2691, %v2698
    %v2700 = vrot.slane %v1454, 4
    %v2701 = vsel %vm2176, %v2700, %v1350
    %v2702 = vrot.slane %v1350, 4
    %v2703 = vsel %vm2176, %v1454, %v2702
    %v2705 = vunpack.c.l.s4 1983009808
    %v2706 = vunpack.c.0.s8 %v2705
    %v2707 = vperm.slane %v2701, %v2706
    %v2709 = vunpack.c.l.s4 1983009808
    %v2710 = vunpack.c.0.s8 %v2709
    %v2711 = vperm.slane %v2703, %v2710
    %v2712 = vrot.slane %v2558, 4
    %v2713 = vsel %vm2176, %v2712, %v2546
    %v2714 = vrot.slane %v2546, 4
    %v2715 = vsel %vm2176, %v2558, %v2714
    %v2717 = vunpack.c.l.s4 1983009808
    %v2718 = vunpack.c.0.s8 %v2717
    %v2719 = vperm.slane %v2713, %v2718
    %v2721 = vunpack.c.l.s4 1983009808
    %v2722 = vunpack.c.0.s8 %v2721
    %v2723 = vperm.slane %v2715, %v2722
    %v2724 = vrot.slane %v2695, 4
    %v2725 = vsel %vm2176, %v2724, %v2683
    %v2726 = vrot.slane %v2683, 4
    %v2727 = vsel %vm2176, %v2695, %v2726
    %v2729 = vunpack.c.l.s4 1934713408
    %v2730 = vunpack.c.0.s8 %v2729
    %v2731 = vperm.slane %v2725, %v2730
    %v2733 = vunpack.c.l.s4 1934713408
    %v2734 = vunpack.c.0.s8 %v2733
    %v2735 = vperm.slane %v2727, %v2734
    %v2736 = vrot.slane %v2699, 4
    %v2737 = vsel %vm2176, %v2736, %v2687
    %v2738 = vrot.slane %v2687, 4
    %v2739 = vsel %vm2176, %v2699, %v2738
    %v2741 = vunpack.c.l.s4 1934713408
    %v2742 = vunpack.c.0.s8 %v2741
    %v2743 = vperm.slane %v2737, %v2742
    %v2745 = vunpack.c.l.s4 1934713408
    %v2746 = vunpack.c.0.s8 %v2745
    %v2747 = vperm.slane %v2739, %v2746
    %v2748 = vrot.slane %v2719, 4
    %v2749 = vsel %vm2176, %v2748, %v2707
    %v2750 = vrot.slane %v2707, 4
    %v2751 = vsel %vm2176, %v2719, %v2750
    %v2753 = vunpack.c.l.s4 1934713408
    %v2754 = vunpack.c.0.s8 %v2753
    %v2755 = vperm.slane %v2749, %v2754
    %v2757 = vunpack.c.l.s4 1934713408
    %v2758 = vunpack.c.0.s8 %v2757
    %v2759 = vperm.slane %v2751, %v2758
    %v2760 = vrot.slane %v2723, 4
    %v2761 = vsel %vm2176, %v2760, %v2711
    %v2762 = vrot.slane %v2711, 4
    %v2763 = vsel %vm2176, %v2723, %v2762
    %v2765 = vunpack.c.l.s4 1934713408
    %v2766 = vunpack.c.0.s8 %v2765
    %v2767 = vperm.slane %v2761, %v2766
    %v2769 = vunpack.c.l.s4 1934713408
    %v2770 = vunpack.c.0.s8 %v2769
    %v2771 = vperm.slane %v2763, %v2770
    %v2772 = vrot.slane %v2755, 4
    %v2773 = vsel %vm2176, %v2772, %v2731
    %v2774 = vrot.slane %v2731, 4
    %v2775 = vsel %vm2176, %v2755, %v2774
    %v2776 = vrot.slane %v2759, 4
    %v2777 = vsel %vm2176, %v2776, %v2735
    %v2778 = vrot.slane %v2735, 4
    %v2779 = vsel %vm2176, %v2759, %v2778
    %v2780 = vrot.slane %v2767, 4
    %v2781 = vsel %vm2176, %v2780, %v2743
    %v2782 = vrot.slane %v2743, 4
    %v2783 = vsel %vm2176, %v2767, %v2782
    %v2784 = vrot.slane %v2771, 4
    %v2785 = vsel %vm2176, %v2784, %v2747
    %v2786 = vrot.slane %v2747, 4
    %v2787 = vsel %vm2176, %v2771, %v2786
    %v2788 = vrot.slane %v1249, 4
    %v2789 = vsel %vm2176, %v2788, %v1145
    %v2791 = vunpack.c.l.s4 1983009808
    %v2792 = vunpack.c.0.s8 %v2791
    %v2793 = vperm.slane %v2789, %v2792
    %v2794 = vrot.slane %v2536, 4
    %v2795 = vsel %vm2176, %v2794, %v2524
    %v2797 = vunpack.c.l.s4 1983009808
    %v2798 = vunpack.c.0.s8 %v2797
    %v2799 = vperm.slane %v2795, %v2798
    %v2800 = vrot.slane %v1457, 4
    %v2801 = vsel %vm2176, %v2800, %v1353
    %v2803 = vunpack.c.l.s4 1983009808
    %v2804 = vunpack.c.0.s8 %v2803
    %v2805 = vperm.slane %v2801, %v2804
    %v2806 = vrot.slane %v2560, 4
    %v2807 = vsel %vm2176, %v2806, %v2548
    %v2809 = vunpack.c.l.s4 1983009808
    %v2810 = vunpack.c.0.s8 %v2809
    %v2811 = vperm.slane %v2807, %v2810
    %v2812 = vrot.slane %v2799, 4
    %v2813 = vsel %vm2176, %v2812, %v2793
    %v2814 = vrot.slane %v2793, 4
    %v2815 = vsel %vm2176, %v2799, %v2814
    %v2817 = vunpack.c.l.s4 1934713408
    %v2818 = vunpack.c.0.s8 %v2817
    %v2819 = vperm.slane %v2813, %v2818
    %v2821 = vunpack.c.l.s4 1934713408
    %v2822 = vunpack.c.0.s8 %v2821
    %v2823 = vperm.slane %v2815, %v2822
    %v2824 = vrot.slane %v2811, 4
    %v2825 = vsel %vm2176, %v2824, %v2805
    %v2826 = vrot.slane %v2805, 4
    %v2827 = vsel %vm2176, %v2811, %v2826
    %v2829 = vunpack.c.l.s4 1934713408
    %v2830 = vunpack.c.0.s8 %v2829
    %v2831 = vperm.slane %v2825, %v2830
    %v2833 = vunpack.c.l.s4 1934713408
    %v2834 = vunpack.c.0.s8 %v2833
    %v2835 = vperm.slane %v2827, %v2834
    %v2836 = vrot.slane %v2831, 4
    %v2837 = vsel %vm2176, %v2836, %v2819
    %v2838 = vrot.slane %v2819, 4
    %v2839 = vsel %vm2176, %v2831, %v2838
    %v2840 = vrot.slane %v2835, 4
    %v2841 = vsel %vm2176, %v2840, %v2823
    %v2842 = vrot.slane %v2823, 4
    %v2843 = vsel %vm2176, %v2835, %v2842
    %v2844 = vrot.slane %v2665, 4
    %v2845 = vsel %vm2176, %v2844, %v2661
    %v2846 = vrot.slane %v2661, 4
    %v2847 = vsel %vm2176, %v2665, %v2846
    %v2849 = vunpack.c.l.s4 1983009808
    %v2850 = vunpack.c.0.s8 %v2849
    %v2851 = vperm.slane %v2845, %v2850
    %v2853 = vunpack.c.l.s4 1983009808
    %v2854 = vunpack.c.0.s8 %v2853
    %v2855 = vperm.slane %v2847, %v2854
    %v2856 = vrot.slane %v2667, 4
    %v2857 = vsel %vm2176, %v2856, %v2663
    %v2858 = vrot.slane %v2663, 4
    %v2859 = vsel %vm2176, %v2667, %v2858
    %v2861 = vunpack.c.l.s4 1983009808
    %v2862 = vunpack.c.0.s8 %v2861
    %v2863 = vperm.slane %v2857, %v2862
    %v2865 = vunpack.c.l.s4 1983009808
    %v2866 = vunpack.c.0.s8 %v2865
    %v2867 = vperm.slane %v2859, %v2866
    %v2868 = vrot.slane %v2673, 4
    %v2869 = vsel %vm2176, %v2868, %v2669
    %v2870 = vrot.slane %v2669, 4
    %v2871 = vsel %vm2176, %v2673, %v2870
    %v2873 = vunpack.c.l.s4 1983009808
    %v2874 = vunpack.c.0.s8 %v2873
    %v2875 = vperm.slane %v2869, %v2874
    %v2877 = vunpack.c.l.s4 1983009808
    %v2878 = vunpack.c.0.s8 %v2877
    %v2879 = vperm.slane %v2871, %v2878
    %v2880 = vrot.slane %v2675, 4
    %v2881 = vsel %vm2176, %v2880, %v2671
    %v2882 = vrot.slane %v2671, 4
    %v2883 = vsel %vm2176, %v2675, %v2882
    %v2885 = vunpack.c.l.s4 1983009808
    %v2886 = vunpack.c.0.s8 %v2885
    %v2887 = vperm.slane %v2881, %v2886
    %v2889 = vunpack.c.l.s4 1983009808
    %v2890 = vunpack.c.0.s8 %v2889
    %v2891 = vperm.slane %v2883, %v2890
    %v2892 = vrot.slane %v2863, 4
    %v2893 = vsel %vm2176, %v2892, %v2851
    %v2894 = vrot.slane %v2851, 4
    %v2895 = vsel %vm2176, %v2863, %v2894
    %v2897 = vunpack.c.l.s4 1934713408
    %v2898 = vunpack.c.0.s8 %v2897
    %v2899 = vperm.slane %v2893, %v2898
    %v2901 = vunpack.c.l.s4 1934713408
    %v2902 = vunpack.c.0.s8 %v2901
    %v2903 = vperm.slane %v2895, %v2902
    %v2904 = vrot.slane %v2867, 4
    %v2905 = vsel %vm2176, %v2904, %v2855
    %v2906 = vrot.slane %v2855, 4
    %v2907 = vsel %vm2176, %v2867, %v2906
    %v2909 = vunpack.c.l.s4 1934713408
    %v2910 = vunpack.c.0.s8 %v2909
    %v2911 = vperm.slane %v2905, %v2910
    %v2913 = vunpack.c.l.s4 1934713408
    %v2914 = vunpack.c.0.s8 %v2913
    %v2915 = vperm.slane %v2907, %v2914
    %v2916 = vrot.slane %v2887, 4
    %v2917 = vsel %vm2176, %v2916, %v2875
    %v2918 = vrot.slane %v2875, 4
    %v2919 = vsel %vm2176, %v2887, %v2918
    %v2921 = vunpack.c.l.s4 1934713408
    %v2922 = vunpack.c.0.s8 %v2921
    %v2923 = vperm.slane %v2917, %v2922
    %v2925 = vunpack.c.l.s4 1934713408
    %v2926 = vunpack.c.0.s8 %v2925
    %v2927 = vperm.slane %v2919, %v2926
    %v2928 = vrot.slane %v2891, 4
    %v2929 = vsel %vm2176, %v2928, %v2879
    %v2930 = vrot.slane %v2879, 4
    %v2931 = vsel %vm2176, %v2891, %v2930
    %v2933 = vunpack.c.l.s4 1934713408
    %v2934 = vunpack.c.0.s8 %v2933
    %v2935 = vperm.slane %v2929, %v2934
    %v2937 = vunpack.c.l.s4 1934713408
    %v2938 = vunpack.c.0.s8 %v2937
    %v2939 = vperm.slane %v2931, %v2938
    %v2940 = vrot.slane %v2923, 4
    %v2941 = vsel %vm2176, %v2940, %v2899
    %v2942 = vrot.slane %v2899, 4
    %v2943 = vsel %vm2176, %v2923, %v2942
    %v2944 = vrot.slane %v2927, 4
    %v2945 = vsel %vm2176, %v2944, %v2903
    %v2946 = vrot.slane %v2903, 4
    %v2947 = vsel %vm2176, %v2927, %v2946
    %v2948 = vrot.slane %v2935, 4
    %v2949 = vsel %vm2176, %v2948, %v2911
    %v2950 = vrot.slane %v2911, 4
    %v2951 = vsel %vm2176, %v2935, %v2950
    %v2952 = vrot.slane %v2939, 4
    %v2953 = vsel %vm2176, %v2952, %v2915
    %v2954 = vrot.slane %v2915, 4
    %v2955 = vsel %vm2176, %v2939, %v2954
    %v2956 = vrot.slane %v2773, 4
    %v2957 = vsel %vm2176, 0.0, %v2956
    %v2959 = vunpack.c.l.s4 1983009808
    %v2960 = vunpack.c.0.s8 %v2959
    %v2961 = vperm.slane %v2773, %v2960
    %v2963 = vunpack.c.l.s4 1983009808
    %v2964 = vunpack.c.0.s8 %v2963
    %v2965 = vperm.slane %v2957, %v2964
    %v2966 = vrot.slane %v2775, 4
    %v2967 = vsel %vm2176, 0.0, %v2966
    %v2969 = vunpack.c.l.s4 1983009808
    %v2970 = vunpack.c.0.s8 %v2969
    %v2971 = vperm.slane %v2775, %v2970
    %v2973 = vunpack.c.l.s4 1983009808
    %v2974 = vunpack.c.0.s8 %v2973
    %v2975 = vperm.slane %v2967, %v2974
    %v2976 = vrot.slane %v2971, 4
    %v2977 = vsel %vm2176, %v2976, %v2961
    %v2978 = vrot.slane %v2961, 4
    %v2979 = vsel %vm2176, %v2971, %v2978
    %v2981 = vunpack.c.l.s4 1934713408
    %v2982 = vunpack.c.0.s8 %v2981
    %v2983 = vperm.slane %v2977, %v2982
    %v2985 = vunpack.c.l.s4 1934713408
    %v2986 = vunpack.c.0.s8 %v2985
    %v2987 = vperm.slane %v2979, %v2986
    %v2988 = vrot.slane %v2975, 4
    %v2989 = vsel %vm2176, %v2988, %v2965
    %v2990 = vrot.slane %v2965, 4
    %v2991 = vsel %vm2176, %v2975, %v2990
    %v2993 = vunpack.c.l.s4 1934713408
    %v2994 = vunpack.c.0.s8 %v2993
    %v2995 = vperm.slane %v2989, %v2994
    %v2997 = vunpack.c.l.s4 1934713408
    %v2998 = vunpack.c.0.s8 %v2997
    %v2999 = vperm.slane %v2991, %v2998
    %v3000 = vrot.slane %v2983, 4
    %v3001 = vsel %vm2176, 0.0, %v3000
    %v3002 = vrot.slane %v2987, 4
    %v3003 = vsel %vm2176, 0.0, %v3002
    %v3004 = vrot.slane %v2995, 4
    %v3005 = vsel %vm2176, 0.0, %v3004
    %v3006 = vrot.slane %v2999, 4
    %v3007 = vsel %vm2176, 0.0, %v3006
    %v3008 = vrot.slane %v2781, 4
    %v3009 = vsel %vm2176, %v3008, %v2777
    %v3010 = vrot.slane %v2777, 4
    %v3011 = vsel %vm2176, %v2781, %v3010
    %v3013 = vunpack.c.l.s4 1983009808
    %v3014 = vunpack.c.0.s8 %v3013
    %v3015 = vperm.slane %v3009, %v3014
    %v3017 = vunpack.c.l.s4 1983009808
    %v3018 = vunpack.c.0.s8 %v3017
    %v3019 = vperm.slane %v3011, %v3018
    %v3020 = vrot.slane %v2783, 4
    %v3021 = vsel %vm2176, %v3020, %v2779
    %v3022 = vrot.slane %v2779, 4
    %v3023 = vsel %vm2176, %v2783, %v3022
    %v3025 = vunpack.c.l.s4 1983009808
    %v3026 = vunpack.c.0.s8 %v3025
    %v3027 = vperm.slane %v3021, %v3026
    %v3029 = vunpack.c.l.s4 1983009808
    %v3030 = vunpack.c.0.s8 %v3029
    %v3031 = vperm.slane %v3023, %v3030
    %v3032 = vrot.slane %v2837, 4
    %v3033 = vsel %vm2176, %v3032, %v2785
    %v3034 = vrot.slane %v2785, 4
    %v3035 = vsel %vm2176, %v2837, %v3034
    %v3037 = vunpack.c.l.s4 1983009808
    %v3038 = vunpack.c.0.s8 %v3037
    %v3039 = vperm.slane %v3033, %v3038
    %v3041 = vunpack.c.l.s4 1983009808
    %v3042 = vunpack.c.0.s8 %v3041
    %v3043 = vperm.slane %v3035, %v3042
    %v3044 = vrot.slane %v2839, 4
    %v3045 = vsel %vm2176, %v3044, %v2787
    %v3046 = vrot.slane %v2787, 4
    %v3047 = vsel %vm2176, %v2839, %v3046
    %v3049 = vunpack.c.l.s4 1983009808
    %v3050 = vunpack.c.0.s8 %v3049
    %v3051 = vperm.slane %v3045, %v3050
    %v3053 = vunpack.c.l.s4 1983009808
    %v3054 = vunpack.c.0.s8 %v3053
    %v3055 = vperm.slane %v3047, %v3054
    %v3056 = vrot.slane %v3027, 4
    %v3057 = vsel %vm2176, %v3056, %v3015
    %v3058 = vrot.slane %v3015, 4
    %v3059 = vsel %vm2176, %v3027, %v3058
    %v3061 = vunpack.c.l.s4 1934713408
    %v3062 = vunpack.c.0.s8 %v3061
    %v3063 = vperm.slane %v3057, %v3062
    %v3065 = vunpack.c.l.s4 1934713408
    %v3066 = vunpack.c.0.s8 %v3065
    %v3067 = vperm.slane %v3059, %v3066
    %v3068 = vrot.slane %v3031, 4
    %v3069 = vsel %vm2176, %v3068, %v3019
    %v3070 = vrot.slane %v3019, 4
    %v3071 = vsel %vm2176, %v3031, %v3070
    %v3073 = vunpack.c.l.s4 1934713408
    %v3074 = vunpack.c.0.s8 %v3073
    %v3075 = vperm.slane %v3069, %v3074
    %v3077 = vunpack.c.l.s4 1934713408
    %v3078 = vunpack.c.0.s8 %v3077
    %v3079 = vperm.slane %v3071, %v3078
    %v3080 = vrot.slane %v3051, 4
    %v3081 = vsel %vm2176, %v3080, %v3039
    %v3082 = vrot.slane %v3039, 4
    %v3083 = vsel %vm2176, %v3051, %v3082
    %v3085 = vunpack.c.l.s4 1934713408
    %v3086 = vunpack.c.0.s8 %v3085
    %v3087 = vperm.slane %v3081, %v3086
    %v3089 = vunpack.c.l.s4 1934713408
    %v3090 = vunpack.c.0.s8 %v3089
    %v3091 = vperm.slane %v3083, %v3090
    %v3092 = vrot.slane %v3055, 4
    %v3093 = vsel %vm2176, %v3092, %v3043
    %v3094 = vrot.slane %v3043, 4
    %v3095 = vsel %vm2176, %v3055, %v3094
    %v3097 = vunpack.c.l.s4 1934713408
    %v3098 = vunpack.c.0.s8 %v3097
    %v3099 = vperm.slane %v3093, %v3098
    %v3101 = vunpack.c.l.s4 1934713408
    %v3102 = vunpack.c.0.s8 %v3101
    %v3103 = vperm.slane %v3095, %v3102
    %v3104 = vrot.slane %v3087, 4
    %v3105 = vsel %vm2176, %v3104, %v3063
    %v3106 = vrot.slane %v3063, 4
    %v3107 = vsel %vm2176, %v3087, %v3106
    %v3108 = vrot.slane %v3091, 4
    %v3109 = vsel %vm2176, %v3108, %v3067
    %v3110 = vrot.slane %v3067, 4
    %v3111 = vsel %vm2176, %v3091, %v3110
    %v3112 = vrot.slane %v3099, 4
    %v3113 = vsel %vm2176, %v3112, %v3075
    %v3114 = vrot.slane %v3075, 4
    %v3115 = vsel %vm2176, %v3099, %v3114
    %v3116 = vrot.slane %v3103, 4
    %v3117 = vsel %vm2176, %v3116, %v3079
    %v3118 = vrot.slane %v3079, 4
    %v3119 = vsel %vm2176, %v3103, %v3118
    %v3120 = vrot.slane %v2841, 4
    %v3121 = vsel %vm2176, 0.0, %v3120
    %v3123 = vunpack.c.l.s4 1983009808
    %v3124 = vunpack.c.0.s8 %v3123
    %v3125 = vperm.slane %v2841, %v3124
    %v3127 = vunpack.c.l.s4 1983009808
    %v3128 = vunpack.c.0.s8 %v3127
    %v3129 = vperm.slane %v3121, %v3128
    %v3130 = vrot.slane %v2843, 4
    %v3131 = vsel %vm2176, 0.0, %v3130
    %v3133 = vunpack.c.l.s4 1983009808
    %v3134 = vunpack.c.0.s8 %v3133
    %v3135 = vperm.slane %v2843, %v3134
    %v3137 = vunpack.c.l.s4 1983009808
    %v3138 = vunpack.c.0.s8 %v3137
    %v3139 = vperm.slane %v3131, %v3138
    %v3140 = vrot.slane %v3135, 4
    %v3141 = vsel %vm2176, %v3140, %v3125
    %v3142 = vrot.slane %v3125, 4
    %v3143 = vsel %vm2176, %v3135, %v3142
    %v3145 = vunpack.c.l.s4 1934713408
    %v3146 = vunpack.c.0.s8 %v3145
    %v3147 = vperm.slane %v3141, %v3146
    %v3149 = vunpack.c.l.s4 1934713408
    %v3150 = vunpack.c.0.s8 %v3149
    %v3151 = vperm.slane %v3143, %v3150
    %v3152 = vrot.slane %v3139, 4
    %v3153 = vsel %vm2176, %v3152, %v3129
    %v3154 = vrot.slane %v3129, 4
    %v3155 = vsel %vm2176, %v3139, %v3154
    %v3157 = vunpack.c.l.s4 1934713408
    %v3158 = vunpack.c.0.s8 %v3157
    %v3159 = vperm.slane %v3153, %v3158
    %v3161 = vunpack.c.l.s4 1934713408
    %v3162 = vunpack.c.0.s8 %v3161
    %v3163 = vperm.slane %v3155, %v3162
    %v3164 = vrot.slane %v3147, 4
    %v3165 = vsel %vm2176, 0.0, %v3164
    %v3166 = vrot.slane %v3151, 4
    %v3167 = vsel %vm2176, 0.0, %v3166
    %v3168 = vrot.slane %v3159, 4
    %v3169 = vsel %vm2176, 0.0, %v3168
    %v3170 = vrot.slane %v3163, 4
    %v3171 = vsel %vm2176, 0.0, %v3170
    %3175 = vrot.lane.b32.xlu0 %v1823, 64
    %v3176 = vpop.permute.xlu0 %3175
    %3177 = vrot.lane.b32.xlu0 %v1826, 64
    %v3178 = vpop.permute.xlu0 %3177
    %3179 = vrot.lane.b32.xlu0 %v1829, 64
    %v3180 = vpop.permute.xlu0 %3179
    %3187 = vrot.lane.b32.xlu0 %v1927, 64
    %v3188 = vpop.permute.xlu0 %3187
    %3189 = vrot.lane.b32.xlu0 %v1930, 64
    %v3190 = vpop.permute.xlu0 %3189
    %3191 = vrot.lane.b32.xlu0 %v1933, 64
    %v3192 = vpop.permute.xlu0 %3191
    %3199 = vrot.lane.b32.xlu0 %v2031, 64
    %v3200 = vpop.permute.xlu0 %3199
    %3201 = vrot.lane.b32.xlu0 %v2034, 64
    %v3202 = vpop.permute.xlu0 %3201
    %3203 = vrot.lane.b32.xlu0 %v2037, 64
    %v3204 = vpop.permute.xlu0 %3203
    %3211 = vrot.lane.b32.xlu0 %v2135, 64
    %v3212 = vpop.permute.xlu0 %3211
    %3213 = vrot.lane.b32.xlu0 %v2138, 64
    %v3214 = vpop.permute.xlu0 %3213
    %3215 = vrot.lane.b32.xlu0 %v2141, 64
    %v3216 = vpop.permute.xlu0 %3215
    %v3220 = vrot.slane %v1927, 4
    %v3221 = vsel %vm2176, %v3220, %v1823
    %v3222 = vrot.slane %v1823, 4
    %v3223 = vsel %vm2176, %v1927, %v3222
    %v3225 = vunpack.c.l.s4 1983009808
    %v3226 = vunpack.c.0.s8 %v3225
    %v3227 = vperm.slane %v3221, %v3226
    %v3229 = vunpack.c.l.s4 1983009808
    %v3230 = vunpack.c.0.s8 %v3229
    %v3231 = vperm.slane %v3223, %v3230
    %v3232 = vrot.slane %v3188, 4
    %v3233 = vsel %vm2176, %v3232, %v3176
    %v3234 = vrot.slane %v3176, 4
    %v3235 = vsel %vm2176, %v3188, %v3234
    %v3237 = vunpack.c.l.s4 1983009808
    %v3238 = vunpack.c.0.s8 %v3237
    %v3239 = vperm.slane %v3233, %v3238
    %v3241 = vunpack.c.l.s4 1983009808
    %v3242 = vunpack.c.0.s8 %v3241
    %v3243 = vperm.slane %v3235, %v3242
    %v3244 = vrot.slane %v2135, 4
    %v3245 = vsel %vm2176, %v3244, %v2031
    %v3246 = vrot.slane %v2031, 4
    %v3247 = vsel %vm2176, %v2135, %v3246
    %v3249 = vunpack.c.l.s4 1983009808
    %v3250 = vunpack.c.0.s8 %v3249
    %v3251 = vperm.slane %v3245, %v3250
    %v3253 = vunpack.c.l.s4 1983009808
    %v3254 = vunpack.c.0.s8 %v3253
    %v3255 = vperm.slane %v3247, %v3254
    %v3256 = vrot.slane %v3212, 4
    %v3257 = vsel %vm2176, %v3256, %v3200
    %v3258 = vrot.slane %v3200, 4
    %v3259 = vsel %vm2176, %v3212, %v3258
    %v3261 = vunpack.c.l.s4 1983009808
    %v3262 = vunpack.c.0.s8 %v3261
    %v3263 = vperm.slane %v3257, %v3262
    %v3265 = vunpack.c.l.s4 1983009808
    %v3266 = vunpack.c.0.s8 %v3265
    %v3267 = vperm.slane %v3259, %v3266
    %v3268 = vrot.slane %v3239, 4
    %v3269 = vsel %vm2176, %v3268, %v3227
    %v3270 = vrot.slane %v3227, 4
    %v3271 = vsel %vm2176, %v3239, %v3270
    %v3273 = vunpack.c.l.s4 1934713408
    %v3274 = vunpack.c.0.s8 %v3273
    %v3275 = vperm.slane %v3269, %v3274
    %v3277 = vunpack.c.l.s4 1934713408
    %v3278 = vunpack.c.0.s8 %v3277
    %v3279 = vperm.slane %v3271, %v3278
    %v3280 = vrot.slane %v3243, 4
    %v3281 = vsel %vm2176, %v3280, %v3231
    %v3282 = vrot.slane %v3231, 4
    %v3283 = vsel %vm2176, %v3243, %v3282
    %v3285 = vunpack.c.l.s4 1934713408
    %v3286 = vunpack.c.0.s8 %v3285
    %v3287 = vperm.slane %v3281, %v3286
    %v3289 = vunpack.c.l.s4 1934713408
    %v3290 = vunpack.c.0.s8 %v3289
    %v3291 = vperm.slane %v3283, %v3290
    %v3292 = vrot.slane %v3263, 4
    %v3293 = vsel %vm2176, %v3292, %v3251
    %v3294 = vrot.slane %v3251, 4
    %v3295 = vsel %vm2176, %v3263, %v3294
    %v3297 = vunpack.c.l.s4 1934713408
    %v3298 = vunpack.c.0.s8 %v3297
    %v3299 = vperm.slane %v3293, %v3298
    %v3301 = vunpack.c.l.s4 1934713408
    %v3302 = vunpack.c.0.s8 %v3301
    %v3303 = vperm.slane %v3295, %v3302
    %v3304 = vrot.slane %v3267, 4
    %v3305 = vsel %vm2176, %v3304, %v3255
    %v3306 = vrot.slane %v3255, 4
    %v3307 = vsel %vm2176, %v3267, %v3306
    %v3309 = vunpack.c.l.s4 1934713408
    %v3310 = vunpack.c.0.s8 %v3309
    %v3311 = vperm.slane %v3305, %v3310
    %v3313 = vunpack.c.l.s4 1934713408
    %v3314 = vunpack.c.0.s8 %v3313
    %v3315 = vperm.slane %v3307, %v3314
    %v3316 = vrot.slane %v3299, 4
    %v3317 = vsel %vm2176, %v3316, %v3275
    %v3318 = vrot.slane %v3275, 4
    %v3319 = vsel %vm2176, %v3299, %v3318
    %v3320 = vrot.slane %v3303, 4
    %v3321 = vsel %vm2176, %v3320, %v3279
    %v3322 = vrot.slane %v3279, 4
    %v3323 = vsel %vm2176, %v3303, %v3322
    %v3324 = vrot.slane %v3311, 4
    %v3325 = vsel %vm2176, %v3324, %v3287
    %v3326 = vrot.slane %v3287, 4
    %v3327 = vsel %vm2176, %v3311, %v3326
    %v3328 = vrot.slane %v3315, 4
    %v3329 = vsel %vm2176, %v3328, %v3291
    %v3330 = vrot.slane %v3291, 4
    %v3331 = vsel %vm2176, %v3315, %v3330
    %v3332 = vrot.slane %v1930, 4
    %v3333 = vsel %vm2176, %v3332, %v1826
    %v3334 = vrot.slane %v1826, 4
    %v3335 = vsel %vm2176, %v1930, %v3334
    %v3337 = vunpack.c.l.s4 1983009808
    %v3338 = vunpack.c.0.s8 %v3337
    %v3339 = vperm.slane %v3333, %v3338
    %v3341 = vunpack.c.l.s4 1983009808
    %v3342 = vunpack.c.0.s8 %v3341
    %v3343 = vperm.slane %v3335, %v3342
    %v3344 = vrot.slane %v3190, 4
    %v3345 = vsel %vm2176, %v3344, %v3178
    %v3346 = vrot.slane %v3178, 4
    %v3347 = vsel %vm2176, %v3190, %v3346
    %v3349 = vunpack.c.l.s4 1983009808
    %v3350 = vunpack.c.0.s8 %v3349
    %v3351 = vperm.slane %v3345, %v3350
    %v3353 = vunpack.c.l.s4 1983009808
    %v3354 = vunpack.c.0.s8 %v3353
    %v3355 = vperm.slane %v3347, %v3354
    %v3356 = vrot.slane %v2138, 4
    %v3357 = vsel %vm2176, %v3356, %v2034
    %v3358 = vrot.slane %v2034, 4
    %v3359 = vsel %vm2176, %v2138, %v3358
    %v3361 = vunpack.c.l.s4 1983009808
    %v3362 = vunpack.c.0.s8 %v3361
    %v3363 = vperm.slane %v3357, %v3362
    %v3365 = vunpack.c.l.s4 1983009808
    %v3366 = vunpack.c.0.s8 %v3365
    %v3367 = vperm.slane %v3359, %v3366
    %v3368 = vrot.slane %v3214, 4
    %v3369 = vsel %vm2176, %v3368, %v3202
    %v3370 = vrot.slane %v3202, 4
    %v3371 = vsel %vm2176, %v3214, %v3370
    %v3373 = vunpack.c.l.s4 1983009808
    %v3374 = vunpack.c.0.s8 %v3373
    %v3375 = vperm.slane %v3369, %v3374
    %v3377 = vunpack.c.l.s4 1983009808
    %v3378 = vunpack.c.0.s8 %v3377
    %v3379 = vperm.slane %v3371, %v3378
    %v3380 = vrot.slane %v3351, 4
    %v3381 = vsel %vm2176, %v3380, %v3339
    %v3382 = vrot.slane %v3339, 4
    %v3383 = vsel %vm2176, %v3351, %v3382
    %v3385 = vunpack.c.l.s4 1934713408
    %v3386 = vunpack.c.0.s8 %v3385
    %v3387 = vperm.slane %v3381, %v3386
    %v3389 = vunpack.c.l.s4 1934713408
    %v3390 = vunpack.c.0.s8 %v3389
    %v3391 = vperm.slane %v3383, %v3390
    %v3392 = vrot.slane %v3355, 4
    %v3393 = vsel %vm2176, %v3392, %v3343
    %v3394 = vrot.slane %v3343, 4
    %v3395 = vsel %vm2176, %v3355, %v3394
    %v3397 = vunpack.c.l.s4 1934713408
    %v3398 = vunpack.c.0.s8 %v3397
    %v3399 = vperm.slane %v3393, %v3398
    %v3401 = vunpack.c.l.s4 1934713408
    %v3402 = vunpack.c.0.s8 %v3401
    %v3403 = vperm.slane %v3395, %v3402
    %v3404 = vrot.slane %v3375, 4
    %v3405 = vsel %vm2176, %v3404, %v3363
    %v3406 = vrot.slane %v3363, 4
    %v3407 = vsel %vm2176, %v3375, %v3406
    %v3409 = vunpack.c.l.s4 1934713408
    %v3410 = vunpack.c.0.s8 %v3409
    %v3411 = vperm.slane %v3405, %v3410
    %v3413 = vunpack.c.l.s4 1934713408
    %v3414 = vunpack.c.0.s8 %v3413
    %v3415 = vperm.slane %v3407, %v3414
    %v3416 = vrot.slane %v3379, 4
    %v3417 = vsel %vm2176, %v3416, %v3367
    %v3418 = vrot.slane %v3367, 4
    %v3419 = vsel %vm2176, %v3379, %v3418
    %v3421 = vunpack.c.l.s4 1934713408
    %v3422 = vunpack.c.0.s8 %v3421
    %v3423 = vperm.slane %v3417, %v3422
    %v3425 = vunpack.c.l.s4 1934713408
    %v3426 = vunpack.c.0.s8 %v3425
    %v3427 = vperm.slane %v3419, %v3426
    %v3428 = vrot.slane %v3411, 4
    %v3429 = vsel %vm2176, %v3428, %v3387
    %v3430 = vrot.slane %v3387, 4
    %v3431 = vsel %vm2176, %v3411, %v3430
    %v3432 = vrot.slane %v3415, 4
    %v3433 = vsel %vm2176, %v3432, %v3391
    %v3434 = vrot.slane %v3391, 4
    %v3435 = vsel %vm2176, %v3415, %v3434
    %v3436 = vrot.slane %v3423, 4
    %v3437 = vsel %vm2176, %v3436, %v3399
    %v3438 = vrot.slane %v3399, 4
    %v3439 = vsel %vm2176, %v3423, %v3438
    %v3440 = vrot.slane %v3427, 4
    %v3441 = vsel %vm2176, %v3440, %v3403
    %v3442 = vrot.slane %v3403, 4
    %v3443 = vsel %vm2176, %v3427, %v3442
    %v3444 = vrot.slane %v1933, 4
    %v3445 = vsel %vm2176, %v3444, %v1829
    %v3447 = vunpack.c.l.s4 1983009808
    %v3448 = vunpack.c.0.s8 %v3447
    %v3449 = vperm.slane %v3445, %v3448
    %v3450 = vrot.slane %v3192, 4
    %v3451 = vsel %vm2176, %v3450, %v3180
    %v3453 = vunpack.c.l.s4 1983009808
    %v3454 = vunpack.c.0.s8 %v3453
    %v3455 = vperm.slane %v3451, %v3454
    %v3456 = vrot.slane %v2141, 4
    %v3457 = vsel %vm2176, %v3456, %v2037
    %v3459 = vunpack.c.l.s4 1983009808
    %v3460 = vunpack.c.0.s8 %v3459
    %v3461 = vperm.slane %v3457, %v3460
    %v3462 = vrot.slane %v3216, 4
    %v3463 = vsel %vm2176, %v3462, %v3204
    %v3465 = vunpack.c.l.s4 1983009808
    %v3466 = vunpack.c.0.s8 %v3465
    %v3467 = vperm.slane %v3463, %v3466
    %v3468 = vrot.slane %v3455, 4
    %v3469 = vsel %vm2176, %v3468, %v3449
    %v3470 = vrot.slane %v3449, 4
    %v3471 = vsel %vm2176, %v3455, %v3470
    %v3473 = vunpack.c.l.s4 1934713408
    %v3474 = vunpack.c.0.s8 %v3473
    %v3475 = vperm.slane %v3469, %v3474
    %v3477 = vunpack.c.l.s4 1934713408
    %v3478 = vunpack.c.0.s8 %v3477
    %v3479 = vperm.slane %v3471, %v3478
    %v3480 = vrot.slane %v3467, 4
    %v3481 = vsel %vm2176, %v3480, %v3461
    %v3482 = vrot.slane %v3461, 4
    %v3483 = vsel %vm2176, %v3467, %v3482
    %v3485 = vunpack.c.l.s4 1934713408
    %v3486 = vunpack.c.0.s8 %v3485
    %v3487 = vperm.slane %v3481, %v3486
    %v3489 = vunpack.c.l.s4 1934713408
    %v3490 = vunpack.c.0.s8 %v3489
    %v3491 = vperm.slane %v3483, %v3490
    %v3492 = vrot.slane %v3487, 4
    %v3493 = vsel %vm2176, %v3492, %v3475
    %v3494 = vrot.slane %v3475, 4
    %v3495 = vsel %vm2176, %v3487, %v3494
    %v3496 = vrot.slane %v3491, 4
    %v3497 = vsel %vm2176, %v3496, %v3479
    %v3498 = vrot.slane %v3479, 4
    %v3499 = vsel %vm2176, %v3491, %v3498
    %v3500 = vrot.slane %v3321, 4
    %v3501 = vsel %vm2176, %v3500, %v3317
    %v3502 = vrot.slane %v3317, 4
    %v3503 = vsel %vm2176, %v3321, %v3502
    %v3505 = vunpack.c.l.s4 1983009808
    %v3506 = vunpack.c.0.s8 %v3505
    %v3507 = vperm.slane %v3501, %v3506
    %v3509 = vunpack.c.l.s4 1983009808
    %v3510 = vunpack.c.0.s8 %v3509
    %v3511 = vperm.slane %v3503, %v3510
    %v3512 = vrot.slane %v3323, 4
    %v3513 = vsel %vm2176, %v3512, %v3319
    %v3514 = vrot.slane %v3319, 4
    %v3515 = vsel %vm2176, %v3323, %v3514
    %v3517 = vunpack.c.l.s4 1983009808
    %v3518 = vunpack.c.0.s8 %v3517
    %v3519 = vperm.slane %v3513, %v3518
    %v3521 = vunpack.c.l.s4 1983009808
    %v3522 = vunpack.c.0.s8 %v3521
    %v3523 = vperm.slane %v3515, %v3522
    %v3524 = vrot.slane %v3329, 4
    %v3525 = vsel %vm2176, %v3524, %v3325
    %v3526 = vrot.slane %v3325, 4
    %v3527 = vsel %vm2176, %v3329, %v3526
    %v3529 = vunpack.c.l.s4 1983009808
    %v3530 = vunpack.c.0.s8 %v3529
    %v3531 = vperm.slane %v3525, %v3530
    %v3533 = vunpack.c.l.s4 1983009808
    %v3534 = vunpack.c.0.s8 %v3533
    %v3535 = vperm.slane %v3527, %v3534
    %v3536 = vrot.slane %v3331, 4
    %v3537 = vsel %vm2176, %v3536, %v3327
    %v3538 = vrot.slane %v3327, 4
    %v3539 = vsel %vm2176, %v3331, %v3538
    %v3541 = vunpack.c.l.s4 1983009808
    %v3542 = vunpack.c.0.s8 %v3541
    %v3543 = vperm.slane %v3537, %v3542
    %v3545 = vunpack.c.l.s4 1983009808
    %v3546 = vunpack.c.0.s8 %v3545
    %v3547 = vperm.slane %v3539, %v3546
    %v3548 = vrot.slane %v3519, 4
    %v3549 = vsel %vm2176, %v3548, %v3507
    %v3550 = vrot.slane %v3507, 4
    %v3551 = vsel %vm2176, %v3519, %v3550
    %v3553 = vunpack.c.l.s4 1934713408
    %v3554 = vunpack.c.0.s8 %v3553
    %v3555 = vperm.slane %v3549, %v3554
    %v3557 = vunpack.c.l.s4 1934713408
    %v3558 = vunpack.c.0.s8 %v3557
    %v3559 = vperm.slane %v3551, %v3558
    %v3560 = vrot.slane %v3523, 4
    %v3561 = vsel %vm2176, %v3560, %v3511
    %v3562 = vrot.slane %v3511, 4
    %v3563 = vsel %vm2176, %v3523, %v3562
    %v3565 = vunpack.c.l.s4 1934713408
    %v3566 = vunpack.c.0.s8 %v3565
    %v3567 = vperm.slane %v3561, %v3566
    %v3569 = vunpack.c.l.s4 1934713408
    %v3570 = vunpack.c.0.s8 %v3569
    %v3571 = vperm.slane %v3563, %v3570
    %v3572 = vrot.slane %v3543, 4
    %v3573 = vsel %vm2176, %v3572, %v3531
    %v3574 = vrot.slane %v3531, 4
    %v3575 = vsel %vm2176, %v3543, %v3574
    %v3577 = vunpack.c.l.s4 1934713408
    %v3578 = vunpack.c.0.s8 %v3577
    %v3579 = vperm.slane %v3573, %v3578
    %v3581 = vunpack.c.l.s4 1934713408
    %v3582 = vunpack.c.0.s8 %v3581
    %v3583 = vperm.slane %v3575, %v3582
    %v3584 = vrot.slane %v3547, 4
    %v3585 = vsel %vm2176, %v3584, %v3535
    %v3586 = vrot.slane %v3535, 4
    %v3587 = vsel %vm2176, %v3547, %v3586
    %v3589 = vunpack.c.l.s4 1934713408
    %v3590 = vunpack.c.0.s8 %v3589
    %v3591 = vperm.slane %v3585, %v3590
    %v3593 = vunpack.c.l.s4 1934713408
    %v3594 = vunpack.c.0.s8 %v3593
    %v3595 = vperm.slane %v3587, %v3594
    %v3596 = vrot.slane %v3579, 4
    %v3597 = vsel %vm2176, %v3596, %v3555
    %v3598 = vrot.slane %v3555, 4
    %v3599 = vsel %vm2176, %v3579, %v3598
    %v3600 = vrot.slane %v3583, 4
    %v3601 = vsel %vm2176, %v3600, %v3559
    %v3602 = vrot.slane %v3559, 4
    %v3603 = vsel %vm2176, %v3583, %v3602
    %v3604 = vrot.slane %v3591, 4
    %v3605 = vsel %vm2176, %v3604, %v3567
    %v3606 = vrot.slane %v3567, 4
    %v3607 = vsel %vm2176, %v3591, %v3606
    %v3608 = vrot.slane %v3595, 4
    %v3609 = vsel %vm2176, %v3608, %v3571
    %v3610 = vrot.slane %v3571, 4
    %v3611 = vsel %vm2176, %v3595, %v3610
    %v3612 = vrot.slane %v3429, 4
    %v3613 = vsel %vm2176, 0.0, %v3612
    %v3615 = vunpack.c.l.s4 1983009808
    %v3616 = vunpack.c.0.s8 %v3615
    %v3617 = vperm.slane %v3429, %v3616
    %v3619 = vunpack.c.l.s4 1983009808
    %v3620 = vunpack.c.0.s8 %v3619
    %v3621 = vperm.slane %v3613, %v3620
    %v3622 = vrot.slane %v3431, 4
    %v3623 = vsel %vm2176, 0.0, %v3622
    %v3625 = vunpack.c.l.s4 1983009808
    %v3626 = vunpack.c.0.s8 %v3625
    %v3627 = vperm.slane %v3431, %v3626
    %v3629 = vunpack.c.l.s4 1983009808
    %v3630 = vunpack.c.0.s8 %v3629
    %v3631 = vperm.slane %v3623, %v3630
    %v3632 = vrot.slane %v3627, 4
    %v3633 = vsel %vm2176, %v3632, %v3617
    %v3634 = vrot.slane %v3617, 4
    %v3635 = vsel %vm2176, %v3627, %v3634
    %v3637 = vunpack.c.l.s4 1934713408
    %v3638 = vunpack.c.0.s8 %v3637
    %v3639 = vperm.slane %v3633, %v3638
    %v3641 = vunpack.c.l.s4 1934713408
    %v3642 = vunpack.c.0.s8 %v3641
    %v3643 = vperm.slane %v3635, %v3642
    %v3644 = vrot.slane %v3631, 4
    %v3645 = vsel %vm2176, %v3644, %v3621
    %v3646 = vrot.slane %v3621, 4
    %v3647 = vsel %vm2176, %v3631, %v3646
    %v3649 = vunpack.c.l.s4 1934713408
    %v3650 = vunpack.c.0.s8 %v3649
    %v3651 = vperm.slane %v3645, %v3650
    %v3653 = vunpack.c.l.s4 1934713408
    %v3654 = vunpack.c.0.s8 %v3653
    %v3655 = vperm.slane %v3647, %v3654
    %v3656 = vrot.slane %v3639, 4
    %v3657 = vsel %vm2176, 0.0, %v3656
    %v3658 = vrot.slane %v3643, 4
    %v3659 = vsel %vm2176, 0.0, %v3658
    %v3660 = vrot.slane %v3651, 4
    %v3661 = vsel %vm2176, 0.0, %v3660
    %v3662 = vrot.slane %v3655, 4
    %v3663 = vsel %vm2176, 0.0, %v3662
    %v3664 = vrot.slane %v3437, 4
    %v3665 = vsel %vm2176, %v3664, %v3433
    %v3666 = vrot.slane %v3433, 4
    %v3667 = vsel %vm2176, %v3437, %v3666
    %v3669 = vunpack.c.l.s4 1983009808
    %v3670 = vunpack.c.0.s8 %v3669
    %v3671 = vperm.slane %v3665, %v3670
    %v3673 = vunpack.c.l.s4 1983009808
    %v3674 = vunpack.c.0.s8 %v3673
    %v3675 = vperm.slane %v3667, %v3674
    %v3676 = vrot.slane %v3439, 4
    %v3677 = vsel %vm2176, %v3676, %v3435
    %v3678 = vrot.slane %v3435, 4
    %v3679 = vsel %vm2176, %v3439, %v3678
    %v3681 = vunpack.c.l.s4 1983009808
    %v3682 = vunpack.c.0.s8 %v3681
    %v3683 = vperm.slane %v3677, %v3682
    %v3685 = vunpack.c.l.s4 1983009808
    %v3686 = vunpack.c.0.s8 %v3685
    %v3687 = vperm.slane %v3679, %v3686
    %v3688 = vrot.slane %v3493, 4
    %v3689 = vsel %vm2176, %v3688, %v3441
    %v3690 = vrot.slane %v3441, 4
    %v3691 = vsel %vm2176, %v3493, %v3690
    %v3693 = vunpack.c.l.s4 1983009808
    %v3694 = vunpack.c.0.s8 %v3693
    %v3695 = vperm.slane %v3689, %v3694
    %v3697 = vunpack.c.l.s4 1983009808
    %v3698 = vunpack.c.0.s8 %v3697
    %v3699 = vperm.slane %v3691, %v3698
    %v3700 = vrot.slane %v3495, 4
    %v3701 = vsel %vm2176, %v3700, %v3443
    %v3702 = vrot.slane %v3443, 4
    %v3703 = vsel %vm2176, %v3495, %v3702
    %v3705 = vunpack.c.l.s4 1983009808
    %v3706 = vunpack.c.0.s8 %v3705
    %v3707 = vperm.slane %v3701, %v3706
    %v3709 = vunpack.c.l.s4 1983009808
    %v3710 = vunpack.c.0.s8 %v3709
    %v3711 = vperm.slane %v3703, %v3710
    %v3712 = vrot.slane %v3683, 4
    %v3713 = vsel %vm2176, %v3712, %v3671
    %v3714 = vrot.slane %v3671, 4
    %v3715 = vsel %vm2176, %v3683, %v3714
    %v3717 = vunpack.c.l.s4 1934713408
    %v3718 = vunpack.c.0.s8 %v3717
    %v3719 = vperm.slane %v3713, %v3718
    %v3721 = vunpack.c.l.s4 1934713408
    %v3722 = vunpack.c.0.s8 %v3721
    %v3723 = vperm.slane %v3715, %v3722
    %v3724 = vrot.slane %v3687, 4
    %v3725 = vsel %vm2176, %v3724, %v3675
    %v3726 = vrot.slane %v3675, 4
    %v3727 = vsel %vm2176, %v3687, %v3726
    %v3729 = vunpack.c.l.s4 1934713408
    %v3730 = vunpack.c.0.s8 %v3729
    %v3731 = vperm.slane %v3725, %v3730
    %v3733 = vunpack.c.l.s4 1934713408
    %v3734 = vunpack.c.0.s8 %v3733
    %v3735 = vperm.slane %v3727, %v3734
    %v3736 = vrot.slane %v3707, 4
    %v3737 = vsel %vm2176, %v3736, %v3695
    %v3738 = vrot.slane %v3695, 4
    %v3739 = vsel %vm2176, %v3707, %v3738
    %v3741 = vunpack.c.l.s4 1934713408
    %v3742 = vunpack.c.0.s8 %v3741
    %v3743 = vperm.slane %v3737, %v3742
    %v3745 = vunpack.c.l.s4 1934713408
    %v3746 = vunpack.c.0.s8 %v3745
    %v3747 = vperm.slane %v3739, %v3746
    %v3748 = vrot.slane %v3711, 4
    %v3749 = vsel %vm2176, %v3748, %v3699
    %v3750 = vrot.slane %v3699, 4
    %v3751 = vsel %vm2176, %v3711, %v3750
    %v3753 = vunpack.c.l.s4 1934713408
    %v3754 = vunpack.c.0.s8 %v3753
    %v3755 = vperm.slane %v3749, %v3754
    %v3757 = vunpack.c.l.s4 1934713408
    %v3758 = vunpack.c.0.s8 %v3757
    %v3759 = vperm.slane %v3751, %v3758
    %v3760 = vrot.slane %v3743, 4
    %v3761 = vsel %vm2176, %v3760, %v3719
    %v3762 = vrot.slane %v3719, 4
    %v3763 = vsel %vm2176, %v3743, %v3762
    %v3764 = vrot.slane %v3747, 4
    %v3765 = vsel %vm2176, %v3764, %v3723
    %v3766 = vrot.slane %v3723, 4
    %v3767 = vsel %vm2176, %v3747, %v3766
    %v3768 = vrot.slane %v3755, 4
    %v3769 = vsel %vm2176, %v3768, %v3731
    %v3770 = vrot.slane %v3731, 4
    %v3771 = vsel %vm2176, %v3755, %v3770
    %v3772 = vrot.slane %v3759, 4
    %v3773 = vsel %vm2176, %v3772, %v3735
    %v3774 = vrot.slane %v3735, 4
    %v3775 = vsel %vm2176, %v3759, %v3774
    %v3776 = vrot.slane %v3497, 4
    %v3777 = vsel %vm2176, 0.0, %v3776
    %v3779 = vunpack.c.l.s4 1983009808
    %v3780 = vunpack.c.0.s8 %v3779
    %v3781 = vperm.slane %v3497, %v3780
    %v3783 = vunpack.c.l.s4 1983009808
    %v3784 = vunpack.c.0.s8 %v3783
    %v3785 = vperm.slane %v3777, %v3784
    %v3786 = vrot.slane %v3499, 4
    %v3787 = vsel %vm2176, 0.0, %v3786
    %v3789 = vunpack.c.l.s4 1983009808
    %v3790 = vunpack.c.0.s8 %v3789
    %v3791 = vperm.slane %v3499, %v3790
    %v3793 = vunpack.c.l.s4 1983009808
    %v3794 = vunpack.c.0.s8 %v3793
    %v3795 = vperm.slane %v3787, %v3794
    %v3796 = vrot.slane %v3791, 4
    %v3797 = vsel %vm2176, %v3796, %v3781
    %v3798 = vrot.slane %v3781, 4
    %v3799 = vsel %vm2176, %v3791, %v3798
    %v3801 = vunpack.c.l.s4 1934713408
    %v3802 = vunpack.c.0.s8 %v3801
    %v3803 = vperm.slane %v3797, %v3802
    %v3805 = vunpack.c.l.s4 1934713408
    %v3806 = vunpack.c.0.s8 %v3805
    %v3807 = vperm.slane %v3799, %v3806
    %v3808 = vrot.slane %v3795, 4
    %v3809 = vsel %vm2176, %v3808, %v3785
    %v3810 = vrot.slane %v3785, 4
    %v3811 = vsel %vm2176, %v3795, %v3810
    %v3813 = vunpack.c.l.s4 1934713408
    %v3814 = vunpack.c.0.s8 %v3813
    %v3815 = vperm.slane %v3809, %v3814
    %v3817 = vunpack.c.l.s4 1934713408
    %v3818 = vunpack.c.0.s8 %v3817
    %v3819 = vperm.slane %v3811, %v3818
    %v3820 = vrot.slane %v3803, 4
    %v3821 = vsel %vm2176, 0.0, %v3820
    %v3822 = vrot.slane %v3807, 4
    %v3823 = vsel %vm2176, 0.0, %v3822
    %v3824 = vrot.slane %v3815, 4
    %v3825 = vsel %vm2176, 0.0, %v3824
    %v3826 = vrot.slane %v3819, 4
    %v3827 = vsel %vm2176, 0.0, %v3826
    %vm3828 = vcmask 523264
    %v3830 = vsel %vm3828, %v2407, 0
    %v3833 = vsel %vm3828, %v2941, 0
    %v3836 = vsel %vm3828, %v2983, 0
    %3838 = vmatpush.xpose.msra.mxu0 0.0
    %3839 = vmatpush.xpose.msra.mxu0 0.0
    %3840 = vmatpush.xpose.msra.mxu0 0.0
    %3841 = vmatpush.xpose.msra.mxu0 0.0
    %3842 = vmatpush.xpose.msra.mxu0 0.0
    %3843 = vmatpush.xpose.msra.mxu0 0.0
    %3844 = vmatpush.xpose.msra.mxu0 0.0
    %3845 = vmatpush.xpose.msra.mxu0 0.0
    %3846 = vmatpush.xpose.msra.mxu0 0.0
    %3847 = vmatpush.xpose.msra.mxu0 0.0
    %3848 = vmatpush.xpose.msra.mxu0 0.0
    %3849 = vmatpush.xpose.msra.mxu0 0.0
    %3850 = vmatpush.xpose.msra.mxu0 0.0
    %3851 = vmatpush.xpose.msra.mxu0 0.0
    %3852 = vmatpush.xpose.msra.mxu0 %v3836
    %3853 = vmatpush.xpose.msra.mxu0 %v3833
    %3854 = vmatmul.f32.gmra.mxu0 %v3830
    %v3855 = vpop.f32.mrf.mxu0
    %v3856 = vadd.f32 0.0, %v3855
    %3857 = vdwg.mxu0
    %v3859 = vsel %vm3828, %v2409, 0
    %v3862 = vsel %vm3828, %v2943, 0
    %v3865 = vsel %vm3828, %v3001, 0
    %3867 = vmatpush.xpose.msra.mxu0 0.0
    %3868 = vmatpush.xpose.msra.mxu0 0.0
    %3869 = vmatpush.xpose.msra.mxu0 0.0
    %3870 = vmatpush.xpose.msra.mxu0 0.0
    %3871 = vmatpush.xpose.msra.mxu0 0.0
    %3872 = vmatpush.xpose.msra.mxu0 0.0
    %3873 = vmatpush.xpose.msra.mxu0 0.0
    %3874 = vmatpush.xpose.msra.mxu0 0.0
    %3875 = vmatpush.xpose.msra.mxu0 0.0
    %3876 = vmatpush.xpose.msra.mxu0 0.0
    %3877 = vmatpush.xpose.msra.mxu0 0.0
    %3878 = vmatpush.xpose.msra.mxu0 0.0
    %3879 = vmatpush.xpose.msra.mxu0 0.0
    %3880 = vmatpush.xpose.msra.mxu0 0.0
    %3881 = vmatpush.xpose.msra.mxu0 %v3865
    %3882 = vmatpush.xpose.msra.mxu0 %v3862
    %3883 = vmatmul.f32.gmra.mxu0 %v3859
    %v3884 = vpop.f32.mrf.mxu0
    %v3885 = vadd.f32 0.0, %v3884
    %3886 = vdwg.mxu0
    %v3888 = vsel %vm3828, %v2411, 0
    %v3891 = vsel %vm3828, %v2945, 0
    %v3894 = vsel %vm3828, %v2987, 0
    %3896 = vmatpush.xpose.msra.mxu0 0.0
    %3897 = vmatpush.xpose.msra.mxu0 0.0
    %3898 = vmatpush.xpose.msra.mxu0 0.0
    %3899 = vmatpush.xpose.msra.mxu0 0.0
    %3900 = vmatpush.xpose.msra.mxu0 0.0
    %3901 = vmatpush.xpose.msra.mxu0 0.0
    %3902 = vmatpush.xpose.msra.mxu0 0.0
    %3903 = vmatpush.xpose.msra.mxu0 0.0
    %3904 = vmatpush.xpose.msra.mxu0 0.0
    %3905 = vmatpush.xpose.msra.mxu0 0.0
    %3906 = vmatpush.xpose.msra.mxu0 0.0
    %3907 = vmatpush.xpose.msra.mxu0 0.0
    %3908 = vmatpush.xpose.msra.mxu0 0.0
    %3909 = vmatpush.xpose.msra.mxu0 0.0
    %3910 = vmatpush.xpose.msra.mxu0 %v3894
    %3911 = vmatpush.xpose.msra.mxu0 %v3891
    %3912 = vmatmul.f32.gmra.mxu0 %v3888
    %v3913 = vpop.f32.mrf.mxu0
    %v3914 = vadd.f32 0.0, %v3913
    %3915 = vdwg.mxu0
    %v3917 = vsel %vm3828, %v2413, 0
    %v3920 = vsel %vm3828, %v2947, 0
    %v3923 = vsel %vm3828, %v3003, 0
    %3925 = vmatpush.xpose.msra.mxu0 0.0
    %3926 = vmatpush.xpose.msra.mxu0 0.0
    %3927 = vmatpush.xpose.msra.mxu0 0.0
    %3928 = vmatpush.xpose.msra.mxu0 0.0
    %3929 = vmatpush.xpose.msra.mxu0 0.0
    %3930 = vmatpush.xpose.msra.mxu0 0.0
    %3931 = vmatpush.xpose.msra.mxu0 0.0
    %3932 = vmatpush.xpose.msra.mxu0 0.0
    %3933 = vmatpush.xpose.msra.mxu0 0.0
    %3934 = vmatpush.xpose.msra.mxu0 0.0
    %3935 = vmatpush.xpose.msra.mxu0 0.0
    %3936 = vmatpush.xpose.msra.mxu0 0.0
    %3937 = vmatpush.xpose.msra.mxu0 0.0
    %3938 = vmatpush.xpose.msra.mxu0 0.0
    %3939 = vmatpush.xpose.msra.mxu0 %v3923
    %3940 = vmatpush.xpose.msra.mxu0 %v3920
    %3941 = vmatmul.f32.gmra.mxu0 %v3917
    %v3942 = vpop.f32.mrf.mxu0
    %v3943 = vadd.f32 0.0, %v3942
    %3944 = vdwg.mxu0
    %v3946 = vsel %vm3828, %v2415, 0
    %v3949 = vsel %vm3828, %v2949, 0
    %v3952 = vsel %vm3828, %v2995, 0
    %3954 = vmatpush.xpose.msra.mxu0 0.0
    %3955 = vmatpush.xpose.msra.mxu0 0.0
    %3956 = vmatpush.xpose.msra.mxu0 0.0
    %3957 = vmatpush.xpose.msra.mxu0 0.0
    %3958 = vmatpush.xpose.msra.mxu0 0.0
    %3959 = vmatpush.xpose.msra.mxu0 0.0
    %3960 = vmatpush.xpose.msra.mxu0 0.0
    %3961 = vmatpush.xpose.msra.mxu0 0.0
    %3962 = vmatpush.xpose.msra.mxu0 0.0
    %3963 = vmatpush.xpose.msra.mxu0 0.0
    %3964 = vmatpush.xpose.msra.mxu0 0.0
    %3965 = vmatpush.xpose.msra.mxu0 0.0
    %3966 = vmatpush.xpose.msra.mxu0 0.0
    %3967 = vmatpush.xpose.msra.mxu0 0.0
    %3968 = vmatpush.xpose.msra.mxu0 %v3952
    %3969 = vmatpush.xpose.msra.mxu0 %v3949
    %3970 = vmatmul.f32.gmra.mxu0 %v3946
    %v3971 = vpop.f32.mrf.mxu0
    %v3972 = vadd.f32 0.0, %v3971
    %3973 = vdwg.mxu0
    %v3975 = vsel %vm3828, %v2417, 0
    %v3978 = vsel %vm3828, %v2951, 0
    %v3981 = vsel %vm3828, %v3005, 0
    %3983 = vmatpush.xpose.msra.mxu0 0.0
    %3984 = vmatpush.xpose.msra.mxu0 0.0
    %3985 = vmatpush.xpose.msra.mxu0 0.0
    %3986 = vmatpush.xpose.msra.mxu0 0.0
    %3987 = vmatpush.xpose.msra.mxu0 0.0
    %3988 = vmatpush.xpose.msra.mxu0 0.0
    %3989 = vmatpush.xpose.msra.mxu0 0.0
    %3990 = vmatpush.xpose.msra.mxu0 0.0
    %3991 = vmatpush.xpose.msra.mxu0 0.0
    %3992 = vmatpush.xpose.msra.mxu0 0.0
    %3993 = vmatpush.xpose.msra.mxu0 0.0
    %3994 = vmatpush.xpose.msra.mxu0 0.0
    %3995 = vmatpush.xpose.msra.mxu0 0.0
    %3996 = vmatpush.xpose.msra.mxu0 0.0
    %3997 = vmatpush.xpose.msra.mxu0 %v3981
    %3998 = vmatpush.xpose.msra.mxu0 %v3978
    %3999 = vmatmul.f32.gmra.mxu0 %v3975
    %v4000 = vpop.f32.mrf.mxu0
    %v4001 = vadd.f32 0.0, %v4000
    %4002 = vdwg.mxu0
    %v4004 = vsel %vm3828, %v2419, 0
    %v4007 = vsel %vm3828, %v2953, 0
    %v4010 = vsel %vm3828, %v2999, 0
    %4012 = vmatpush.xpose.msra.mxu0 0.0
    %4013 = vmatpush.xpose.msra.mxu0 0.0
    %4014 = vmatpush.xpose.msra.mxu0 0.0
    %4015 = vmatpush.xpose.msra.mxu0 0.0
    %4016 = vmatpush.xpose.msra.mxu0 0.0
    %4017 = vmatpush.xpose.msra.mxu0 0.0
    %4018 = vmatpush.xpose.msra.mxu0 0.0
    %4019 = vmatpush.xpose.msra.mxu0 0.0
    %4020 = vmatpush.xpose.msra.mxu0 0.0
    %4021 = vmatpush.xpose.msra.mxu0 0.0
    %4022 = vmatpush.xpose.msra.mxu0 0.0
    %4023 = vmatpush.xpose.msra.mxu0 0.0
    %4024 = vmatpush.xpose.msra.mxu0 0.0
    %4025 = vmatpush.xpose.msra.mxu0 0.0
    %4026 = vmatpush.xpose.msra.mxu0 %v4010
    %4027 = vmatpush.xpose.msra.mxu0 %v4007
    %4028 = vmatmul.f32.gmra.mxu0 %v4004
    %v4029 = vpop.f32.mrf.mxu0
    %v4030 = vadd.f32 0.0, %v4029
    %4031 = vdwg.mxu0
    %v4033 = vsel %vm3828, %v2421, 0
    %v4036 = vsel %vm3828, %v2955, 0
    %v4039 = vsel %vm3828, %v3007, 0
    %4041 = vmatpush.xpose.msra.mxu0 0.0
    %4042 = vmatpush.xpose.msra.mxu0 0.0
    %4043 = vmatpush.xpose.msra.mxu0 0.0
    %4044 = vmatpush.xpose.msra.mxu0 0.0
    %4045 = vmatpush.xpose.msra.mxu0 0.0
    %4046 = vmatpush.xpose.msra.mxu0 0.0
    %4047 = vmatpush.xpose.msra.mxu0 0.0
    %4048 = vmatpush.xpose.msra.mxu0 0.0
    %4049 = vmatpush.xpose.msra.mxu0 0.0
    %4050 = vmatpush.xpose.msra.mxu0 0.0
    %4051 = vmatpush.xpose.msra.mxu0 0.0
    %4052 = vmatpush.xpose.msra.mxu0 0.0
    %4053 = vmatpush.xpose.msra.mxu0 0.0
    %4054 = vmatpush.xpose.msra.mxu0 0.0
    %4055 = vmatpush.xpose.msra.mxu0 %v4039
    %4056 = vmatpush.xpose.msra.mxu0 %v4036
    %4057 = vmatmul.f32.gmra.mxu0 %v4033
    %v4058 = vpop.f32.mrf.mxu0
    %v4059 = vadd.f32 0.0, %v4058
    %4060 = vdwg.mxu0
    %v4062 = vsel %vm3828, %v2501, 0
    %v4065 = vsel %vm3828, %v3105, 0
    %v4068 = vsel %vm3828, %v3147, 0
    %4070 = vmatpush.xpose.msra.mxu0 0.0
    %4071 = vmatpush.xpose.msra.mxu0 0.0
    %4072 = vmatpush.xpose.msra.mxu0 0.0
    %4073 = vmatpush.xpose.msra.mxu0 0.0
    %4074 = vmatpush.xpose.msra.mxu0 0.0
    %4075 = vmatpush.xpose.msra.mxu0 0.0
    %4076 = vmatpush.xpose.msra.mxu0 0.0
    %4077 = vmatpush.xpose.msra.mxu0 0.0
    %4078 = vmatpush.xpose.msra.mxu0 0.0
    %4079 = vmatpush.xpose.msra.mxu0 0.0
    %4080 = vmatpush.xpose.msra.mxu0 0.0
    %4081 = vmatpush.xpose.msra.mxu0 0.0
    %4082 = vmatpush.xpose.msra.mxu0 0.0
    %4083 = vmatpush.xpose.msra.mxu0 0.0
    %4084 = vmatpush.xpose.msra.mxu0 %v4068
    %4085 = vmatpush.xpose.msra.mxu0 %v4065
    %4086 = vmatmul.f32.gmra.mxu0 %v4062
    %v4087 = vpop.f32.mrf.mxu0
    %v4088 = vadd.f32 0.0, %v4087
    %4089 = vdwg.mxu0
    %v4091 = vsel %vm3828, %v2503, 0
    %v4094 = vsel %vm3828, %v3107, 0
    %v4097 = vsel %vm3828, %v3165, 0
    %4099 = vmatpush.xpose.msra.mxu0 0.0
    %4100 = vmatpush.xpose.msra.mxu0 0.0
    %4101 = vmatpush.xpose.msra.mxu0 0.0
    %4102 = vmatpush.xpose.msra.mxu0 0.0
    %4103 = vmatpush.xpose.msra.mxu0 0.0
    %4104 = vmatpush.xpose.msra.mxu0 0.0
    %4105 = vmatpush.xpose.msra.mxu0 0.0
    %4106 = vmatpush.xpose.msra.mxu0 0.0
    %4107 = vmatpush.xpose.msra.mxu0 0.0
    %4108 = vmatpush.xpose.msra.mxu0 0.0
    %4109 = vmatpush.xpose.msra.mxu0 0.0
    %4110 = vmatpush.xpose.msra.mxu0 0.0
    %4111 = vmatpush.xpose.msra.mxu0 0.0
    %4112 = vmatpush.xpose.msra.mxu0 0.0
    %4113 = vmatpush.xpose.msra.mxu0 %v4097
    %4114 = vmatpush.xpose.msra.mxu0 %v4094
    %4115 = vmatmul.f32.gmra.mxu0 %v4091
    %v4116 = vpop.f32.mrf.mxu0
    %v4117 = vadd.f32 0.0, %v4116
    %4118 = vdwg.mxu0
    %v4120 = vsel %vm3828, %v2505, 0
    %v4123 = vsel %vm3828, %v3109, 0
    %v4126 = vsel %vm3828, %v3151, 0
    %4128 = vmatpush.xpose.msra.mxu0 0.0
    %4129 = vmatpush.xpose.msra.mxu0 0.0
    %4130 = vmatpush.xpose.msra.mxu0 0.0
    %4131 = vmatpush.xpose.msra.mxu0 0.0
    %4132 = vmatpush.xpose.msra.mxu0 0.0
    %4133 = vmatpush.xpose.msra.mxu0 0.0
    %4134 = vmatpush.xpose.msra.mxu0 0.0
    %4135 = vmatpush.xpose.msra.mxu0 0.0
    %4136 = vmatpush.xpose.msra.mxu0 0.0
    %4137 = vmatpush.xpose.msra.mxu0 0.0
    %4138 = vmatpush.xpose.msra.mxu0 0.0
    %4139 = vmatpush.xpose.msra.mxu0 0.0
    %4140 = vmatpush.xpose.msra.mxu0 0.0
    %4141 = vmatpush.xpose.msra.mxu0 0.0
    %4142 = vmatpush.xpose.msra.mxu0 %v4126
    %4143 = vmatpush.xpose.msra.mxu0 %v4123
    %4144 = vmatmul.f32.gmra.mxu0 %v4120
    %v4145 = vpop.f32.mrf.mxu0
    %v4146 = vadd.f32 0.0, %v4145
    %4147 = vdwg.mxu0
    %v4149 = vsel %vm3828, %v2507, 0
    %v4152 = vsel %vm3828, %v3111, 0
    %v4155 = vsel %vm3828, %v3167, 0
    %4157 = vmatpush.xpose.msra.mxu0 0.0
    %4158 = vmatpush.xpose.msra.mxu0 0.0
    %4159 = vmatpush.xpose.msra.mxu0 0.0
    %4160 = vmatpush.xpose.msra.mxu0 0.0
    %4161 = vmatpush.xpose.msra.mxu0 0.0
    %4162 = vmatpush.xpose.msra.mxu0 0.0
    %4163 = vmatpush.xpose.msra.mxu0 0.0
    %4164 = vmatpush.xpose.msra.mxu0 0.0
    %4165 = vmatpush.xpose.msra.mxu0 0.0
    %4166 = vmatpush.xpose.msra.mxu0 0.0
    %4167 = vmatpush.xpose.msra.mxu0 0.0
    %4168 = vmatpush.xpose.msra.mxu0 0.0
    %4169 = vmatpush.xpose.msra.mxu0 0.0
    %4170 = vmatpush.xpose.msra.mxu0 0.0
    %4171 = vmatpush.xpose.msra.mxu0 %v4155
    %4172 = vmatpush.xpose.msra.mxu0 %v4152
    %4173 = vmatmul.f32.gmra.mxu0 %v4149
    %v4174 = vpop.f32.mrf.mxu0
    %v4175 = vadd.f32 0.0, %v4174
    %4176 = vdwg.mxu0
    %v4178 = vsel %vm3828, %v2509, 0
    %v4181 = vsel %vm3828, %v3113, 0
    %v4184 = vsel %vm3828, %v3159, 0
    %4186 = vmatpush.xpose.msra.mxu0 0.0
    %4187 = vmatpush.xpose.msra.mxu0 0.0
    %4188 = vmatpush.xpose.msra.mxu0 0.0
    %4189 = vmatpush.xpose.msra.mxu0 0.0
    %4190 = vmatpush.xpose.msra.mxu0 0.0
    %4191 = vmatpush.xpose.msra.mxu0 0.0
    %4192 = vmatpush.xpose.msra.mxu0 0.0
    %4193 = vmatpush.xpose.msra.mxu0 0.0
    %4194 = vmatpush.xpose.msra.mxu0 0.0
    %4195 = vmatpush.xpose.msra.mxu0 0.0
    %4196 = vmatpush.xpose.msra.mxu0 0.0
    %4197 = vmatpush.xpose.msra.mxu0 0.0
    %4198 = vmatpush.xpose.msra.mxu0 0.0
    %4199 = vmatpush.xpose.msra.mxu0 0.0
    %4200 = vmatpush.xpose.msra.mxu0 %v4184
    %4201 = vmatpush.xpose.msra.mxu0 %v4181
    %4202 = vmatmul.f32.gmra.mxu0 %v4178
    %v4203 = vpop.f32.mrf.mxu0
    %v4204 = vadd.f32 0.0, %v4203
    %4205 = vdwg.mxu0
    %v4207 = vsel %vm3828, %v2511, 0
    %v4210 = vsel %vm3828, %v3115, 0
    %v4213 = vsel %vm3828, %v3169, 0
    %4215 = vmatpush.xpose.msra.mxu0 0.0
    %4216 = vmatpush.xpose.msra.mxu0 0.0
    %4217 = vmatpush.xpose.msra.mxu0 0.0
    %4218 = vmatpush.xpose.msra.mxu0 0.0
    %4219 = vmatpush.xpose.msra.mxu0 0.0
    %4220 = vmatpush.xpose.msra.mxu0 0.0
    %4221 = vmatpush.xpose.msra.mxu0 0.0
    %4222 = vmatpush.xpose.msra.mxu0 0.0
    %4223 = vmatpush.xpose.msra.mxu0 0.0
    %4224 = vmatpush.xpose.msra.mxu0 0.0
    %4225 = vmatpush.xpose.msra.mxu0 0.0
    %4226 = vmatpush.xpose.msra.mxu0 0.0
    %4227 = vmatpush.xpose.msra.mxu0 0.0
    %4228 = vmatpush.xpose.msra.mxu0 0.0
    %4229 = vmatpush.xpose.msra.mxu0 %v4213
    %4230 = vmatpush.xpose.msra.mxu0 %v4210
    %4231 = vmatmul.f32.gmra.mxu0 %v4207
    %v4232 = vpop.f32.mrf.mxu0
    %v4233 = vadd.f32 0.0, %v4232
    %4234 = vdwg.mxu0
    %v4236 = vsel %vm3828, %v2513, 0
    %v4239 = vsel %vm3828, %v3117, 0
    %v4242 = vsel %vm3828, %v3163, 0
    %4244 = vmatpush.xpose.msra.mxu0 0.0
    %4245 = vmatpush.xpose.msra.mxu0 0.0
    %4246 = vmatpush.xpose.msra.mxu0 0.0
    %4247 = vmatpush.xpose.msra.mxu0 0.0
    %4248 = vmatpush.xpose.msra.mxu0 0.0
    %4249 = vmatpush.xpose.msra.mxu0 0.0
    %4250 = vmatpush.xpose.msra.mxu0 0.0
    %4251 = vmatpush.xpose.msra.mxu0 0.0
    %4252 = vmatpush.xpose.msra.mxu0 0.0
    %4253 = vmatpush.xpose.msra.mxu0 0.0
    %4254 = vmatpush.xpose.msra.mxu0 0.0
    %4255 = vmatpush.xpose.msra.mxu0 0.0
    %4256 = vmatpush.xpose.msra.mxu0 0.0
    %4257 = vmatpush.xpose.msra.mxu0 0.0
    %4258 = vmatpush.xpose.msra.mxu0 %v4242
    %4259 = vmatpush.xpose.msra.mxu0 %v4239
    %4260 = vmatmul.f32.gmra.mxu0 %v4236
    %v4261 = vpop.f32.mrf.mxu0
    %v4262 = vadd.f32 0.0, %v4261
    %4263 = vdwg.mxu0
    %v4265 = vsel %vm3828, %v2515, 0
    %v4268 = vsel %vm3828, %v3119, 0
    %v4271 = vsel %vm3828, %v3171, 0
    %4273 = vmatpush.xpose.msra.mxu0 0.0
    %4274 = vmatpush.xpose.msra.mxu0 0.0
    %4275 = vmatpush.xpose.msra.mxu0 0.0
    %4276 = vmatpush.xpose.msra.mxu0 0.0
    %4277 = vmatpush.xpose.msra.mxu0 0.0
    %4278 = vmatpush.xpose.msra.mxu0 0.0
    %4279 = vmatpush.xpose.msra.mxu0 0.0
    %4280 = vmatpush.xpose.msra.mxu0 0.0
    %4281 = vmatpush.xpose.msra.mxu0 0.0
    %4282 = vmatpush.xpose.msra.mxu0 0.0
    %4283 = vmatpush.xpose.msra.mxu0 0.0
    %4284 = vmatpush.xpose.msra.mxu0 0.0
    %4285 = vmatpush.xpose.msra.mxu0 0.0
    %4286 = vmatpush.xpose.msra.mxu0 0.0
    %4287 = vmatpush.xpose.msra.mxu0 %v4271
    %4288 = vmatpush.xpose.msra.mxu0 %v4268
    %4289 = vmatmul.f32.gmra.mxu0 %v4265
    %v4290 = vpop.f32.mrf.mxu0
    %v4291 = vadd.f32 0.0, %v4290
    %4292 = vdwg.mxu0
    %v4293 = vmul.f32 %v3856, 0.125
    %v4294 = vmul.f32 %v3885, 0.125
    %v4295 = vmul.f32 %v3914, 0.125
    %v4296 = vmul.f32 %v3943, 0.125
    %v4297 = vmul.f32 %v3972, 0.125
    %v4298 = vmul.f32 %v4001, 0.125
    %v4299 = vmul.f32 %v4030, 0.125
    %v4300 = vmul.f32 %v4059, 0.125
    %v4301 = vmul.f32 %v4088, 0.125
    %v4302 = vmul.f32 %v4117, 0.125
    %v4303 = vmul.f32 %v4146, 0.125
    %v4304 = vmul.f32 %v4175, 0.125
    %v4305 = vmul.f32 %v4204, 0.125
    %v4306 = vmul.f32 %v4233, 0.125
    %v4307 = vmul.f32 %v4262, 0.125
    %v4308 = vmul.f32 %v4291, 0.125
    %v4309 = vld [vmem:[%s3] sm:$0x3]
    %v4310 = vld [vmem:[%s3 + $0x2] sm:$0x3]
    %v4311 = vld [vmem:[%s3 + $0x4] sm:$0x3]
    %v4312 = vld [vmem:[%s3 + $0x6] sm:$0x3]
    %v4313 = vld [vmem:[%s3 + $0x8] sm:$0x3]
    %v4314 = vld [vmem:[%s3 + $0xa] sm:$0x3]
    %v4315 = vld [vmem:[%s3 + $0xc] sm:$0x3]
    %v4316 = vld [vmem:[%s3 + $0xe] sm:$0x3]
    %v4317 = vld [vmem:[%s3 + $0x10] sm:$0x3]
    %v4318 = vld [vmem:[%s3 + $0x12] sm:$0x3]
    %v4319 = vld [vmem:[%s3 + $0x14] sm:$0x3]
    %v4320 = vld [vmem:[%s3 + $0x16] sm:$0x3]
    %v4321 = vld [vmem:[%s3 + $0x18] sm:$0x3]
    %v4322 = vld [vmem:[%s3 + $0x1a] sm:$0x3]
    %v4323 = vld [vmem:[%s3 + $0x1c] sm:$0x3]
    %v4324 = vld [vmem:[%s3 + $0x1e] sm:$0x3]
    %vm4325 = vnez %v4309
    %vm4326 = vnez %v4310
    %vm4327 = vnez %v4311
    %vm4328 = vnez %v4312
    %vm4329 = vnez %v4313
    %vm4330 = vnez %v4314
    %vm4331 = vnez %v4315
    %vm4332 = vnez %v4316
    %vm4333 = vnez %v4317
    %vm4334 = vnez %v4318
    %vm4335 = vnez %v4319
    %vm4336 = vnez %v4320
    %vm4337 = vnez %v4321
    %vm4338 = vnez %v4322
    %vm4339 = vnez %v4323
    %vm4340 = vnez %v4324
    %v4341 = vsel %vm4325, 16843009, 0
    %v4342 = vsel %vm4326, 16843009, 0
    %v4343 = vsel %vm4327, 16843009, 0
    %v4344 = vsel %vm4328, 16843009, 0
    %v4345 = vsel %vm4329, 16843009, 0
    %v4346 = vsel %vm4330, 16843009, 0
    %v4347 = vsel %vm4331, 16843009, 0
    %v4348 = vsel %vm4332, 16843009, 0
    %v4349 = vsel %vm4333, 16843009, 0
    %v4350 = vsel %vm4334, 16843009, 0
    %v4351 = vsel %vm4335, 16843009, 0
    %v4352 = vsel %vm4336, 16843009, 0
    %v4353 = vsel %vm4337, 16843009, 0
    %v4354 = vsel %vm4338, 16843009, 0
    %v4355 = vsel %vm4339, 16843009, 0
    %v4356 = vsel %vm4340, 16843009, 0
    %v4357 = vunpack.c.0.s8 %v4341
    %v4358 = vunpack.c.0.s8 %v4342
    %v4359 = vunpack.c.0.s8 %v4343
    %v4360 = vunpack.c.0.s8 %v4344
    %v4361 = vunpack.c.0.s8 %v4345
    %v4362 = vunpack.c.0.s8 %v4346
    %v4363 = vunpack.c.0.s8 %v4347
    %v4364 = vunpack.c.0.s8 %v4348
    %v4365 = vunpack.c.0.s8 %v4349
    %v4366 = vunpack.c.0.s8 %v4350
    %v4367 = vunpack.c.0.s8 %v4351
    %v4368 = vunpack.c.0.s8 %v4352
    %v4369 = vunpack.c.0.s8 %v4353
    %v4370 = vunpack.c.0.s8 %v4354
    %v4371 = vunpack.c.0.s8 %v4355
    %v4372 = vunpack.c.0.s8 %v4356
    %vm4373 = vcmp.ne.s32.totalorder %v4357, 0
    %vm4374 = vcmp.ne.s32.totalorder %v4358, 0
    %vm4375 = vcmp.ne.s32.totalorder %v4359, 0
    %vm4376 = vcmp.ne.s32.totalorder %v4360, 0
    %vm4377 = vcmp.ne.s32.totalorder %v4361, 0
    %vm4378 = vcmp.ne.s32.totalorder %v4362, 0
    %vm4379 = vcmp.ne.s32.totalorder %v4363, 0
    %vm4380 = vcmp.ne.s32.totalorder %v4364, 0
    %vm4381 = vcmp.ne.s32.totalorder %v4365, 0
    %vm4382 = vcmp.ne.s32.totalorder %v4366, 0
    %vm4383 = vcmp.ne.s32.totalorder %v4367, 0
    %vm4384 = vcmp.ne.s32.totalorder %v4368, 0
    %vm4385 = vcmp.ne.s32.totalorder %v4369, 0
    %vm4386 = vcmp.ne.s32.totalorder %v4370, 0
    %vm4387 = vcmp.ne.s32.totalorder %v4371, 0
    %vm4388 = vcmp.ne.s32.totalorder %v4372, 0
    %v4389 = vsel %vm4373, -inf, %v4293
    %v4390 = vsel %vm4374, -inf, %v4294
    %v4391 = vsel %vm4375, -inf, %v4295
    %v4392 = vsel %vm4376, -inf, %v4296
    %v4393 = vsel %vm4377, -inf, %v4297
    %v4394 = vsel %vm4378, -inf, %v4298
    %v4395 = vsel %vm4379, -inf, %v4299
    %v4396 = vsel %vm4380, -inf, %v4300
    %v4397 = vsel %vm4381, -inf, %v4301
    %v4398 = vsel %vm4382, -inf, %v4302
    %v4399 = vsel %vm4383, -inf, %v4303
    %v4400 = vsel %vm4384, -inf, %v4304
    %v4401 = vsel %vm4385, -inf, %v4305
    %v4402 = vsel %vm4386, -inf, %v4306
    %v4403 = vsel %vm4387, -inf, %v4307
    %v4404 = vsel %vm4388, -inf, %v4308
    %vm4405 = vcmask 77824
    %v4406 = vsel %vm4405, %v4389, -inf
    %4407 = vmax.xlane.f32.xlu0 %v4406
    %v4408 = vpop.xlane.xlu0 %4407
    %v4409 = vsel %vm4405, %v4390, -inf
    %4410 = vmax.xlane.f32.xlu0 %v4409
    %v4411 = vpop.xlane.xlu0 %4410
    %v4412 = vsel %vm4405, %v4391, -inf
    %4413 = vmax.xlane.f32.xlu0 %v4412
    %v4414 = vpop.xlane.xlu0 %4413
    %v4415 = vsel %vm4405, %v4392, -inf
    %4416 = vmax.xlane.f32.xlu0 %v4415
    %v4417 = vpop.xlane.xlu0 %4416
    %v4418 = vsel %vm4405, %v4393, -inf
    %4419 = vmax.xlane.f32.xlu0 %v4418
    %v4420 = vpop.xlane.xlu0 %4419
    %v4421 = vsel %vm4405, %v4394, -inf
    %4422 = vmax.xlane.f32.xlu0 %v4421
    %v4423 = vpop.xlane.xlu0 %4422
    %v4424 = vsel %vm4405, %v4395, -inf
    %4425 = vmax.xlane.f32.xlu0 %v4424
    %v4426 = vpop.xlane.xlu0 %4425
    %v4427 = vsel %vm4405, %v4396, -inf
    %4428 = vmax.xlane.f32.xlu0 %v4427
    %v4429 = vpop.xlane.xlu0 %4428
    %v4430 = vsel %vm4405, %v4397, -inf
    %4431 = vmax.xlane.f32.xlu0 %v4430
    %v4432 = vpop.xlane.xlu0 %4431
    %v4433 = vsel %vm4405, %v4398, -inf
    %4434 = vmax.xlane.f32.xlu0 %v4433
    %v4435 = vpop.xlane.xlu0 %4434
    %v4436 = vsel %vm4405, %v4399, -inf
    %4437 = vmax.xlane.f32.xlu0 %v4436
    %v4438 = vpop.xlane.xlu0 %4437
    %v4439 = vsel %vm4405, %v4400, -inf
    %4440 = vmax.xlane.f32.xlu0 %v4439
    %v4441 = vpop.xlane.xlu0 %4440
    %v4442 = vsel %vm4405, %v4401, -inf
    %4443 = vmax.xlane.f32.xlu0 %v4442
    %v4444 = vpop.xlane.xlu0 %4443
    %v4445 = vsel %vm4405, %v4402, -inf
    %4446 = vmax.xlane.f32.xlu0 %v4445
    %v4447 = vpop.xlane.xlu0 %4446
    %v4448 = vsel %vm4405, %v4403, -inf
    %4449 = vmax.xlane.f32.xlu0 %v4448
    %v4450 = vpop.xlane.xlu0 %4449
    %v4451 = vsel %vm4405, %v4404, -inf
    %4452 = vmax.xlane.f32.xlu0 %v4451
    %v4453 = vpop.xlane.xlu0 %4452
    %v4454 = vsub.f32 %v4389, %v4408
    %v4455 = vsub.f32 %v4390, %v4411
    %v4456 = vsub.f32 %v4391, %v4414
    %v4457 = vsub.f32 %v4392, %v4417
    %v4458 = vsub.f32 %v4393, %v4420
    %v4459 = vsub.f32 %v4394, %v4423
    %v4460 = vsub.f32 %v4395, %v4426
    %v4461 = vsub.f32 %v4396, %v4429
    %v4462 = vsub.f32 %v4397, %v4432
    %v4463 = vsub.f32 %v4398, %v4435
    %v4464 = vsub.f32 %v4399, %v4438
    %v4465 = vsub.f32 %v4400, %v4441
    %v4466 = vsub.f32 %v4401, %v4444
    %v4467 = vsub.f32 %v4402, %v4447
    %v4468 = vsub.f32 %v4403, %v4450
    %v4469 = vsub.f32 %v4404, %v4453
    %v4470 = vmul.f32 %v4454, 1.442695
    %v4471 = vpow.pop %v4470
    %v4472 = vmul.f32 %v4455, 1.442695
    %v4473 = vpow.pop %v4472
    %v4474 = vmul.f32 %v4456, 1.442695
    %v4475 = vpow.pop %v4474
    %v4476 = vmul.f32 %v4457, 1.442695
    %v4477 = vpow.pop %v4476
    %v4478 = vmul.f32 %v4458, 1.442695
    %v4479 = vpow.pop %v4478
    %v4480 = vmul.f32 %v4459, 1.442695
    %v4481 = vpow.pop %v4480
    %v4482 = vmul.f32 %v4460, 1.442695
    %v4483 = vpow.pop %v4482
    %v4484 = vmul.f32 %v4461, 1.442695
    %v4485 = vpow.pop %v4484
    %v4486 = vmul.f32 %v4462, 1.442695
    %v4487 = vpow.pop %v4486
    %v4488 = vmul.f32 %v4463, 1.442695
    %v4489 = vpow.pop %v4488
    %v4490 = vmul.f32 %v4464, 1.442695
    %v4491 = vpow.pop %v4490
    %v4492 = vmul.f32 %v4465, 1.442695
    %v4493 = vpow.pop %v4492
    %v4494 = vmul.f32 %v4466, 1.442695
    %v4495 = vpow.pop %v4494
    %v4496 = vmul.f32 %v4467, 1.442695
    %v4497 = vpow.pop %v4496
    %v4498 = vmul.f32 %v4468, 1.442695
    %v4499 = vpow.pop %v4498
    %v4500 = vmul.f32 %v4469, 1.442695
    %v4501 = vpow.pop %v4500
    %v4502 = vsel %vm4405, %v4471, 0.0
    %4503 = vadd.xlane.f32.xlu0 %v4502
    %v4504 = vpop.xlane.xlu0 %4503
    %v4505 = vsel %vm4405, %v4473, 0.0
    %4506 = vadd.xlane.f32.xlu0 %v4505
    %v4507 = vpop.xlane.xlu0 %4506
    %v4508 = vsel %vm4405, %v4475, 0.0
    %4509 = vadd.xlane.f32.xlu0 %v4508
    %v4510 = vpop.xlane.xlu0 %4509
    %v4511 = vsel %vm4405, %v4477, 0.0
    %4512 = vadd.xlane.f32.xlu0 %v4511
    %v4513 = vpop.xlane.xlu0 %4512
    %v4514 = vsel %vm4405, %v4479, 0.0
    %4515 = vadd.xlane.f32.xlu0 %v4514
    %v4516 = vpop.xlane.xlu0 %4515
    %v4517 = vsel %vm4405, %v4481, 0.0
    %4518 = vadd.xlane.f32.xlu0 %v4517
    %v4519 = vpop.xlane.xlu0 %4518
    %v4520 = vsel %vm4405, %v4483, 0.0
    %4521 = vadd.xlane.f32.xlu0 %v4520
    %v4522 = vpop.xlane.xlu0 %4521
    %v4523 = vsel %vm4405, %v4485, 0.0
    %4524 = vadd.xlane.f32.xlu0 %v4523
    %v4525 = vpop.xlane.xlu0 %4524
    %v4526 = vsel %vm4405, %v4487, 0.0
    %4527 = vadd.xlane.f32.xlu0 %v4526
    %v4528 = vpop.xlane.xlu0 %4527
    %v4529 = vsel %vm4405, %v4489, 0.0
    %4530 = vadd.xlane.f32.xlu0 %v4529
    %v4531 = vpop.xlane.xlu0 %4530
    %v4532 = vsel %vm4405, %v4491, 0.0
    %4533 = vadd.xlane.f32.xlu0 %v4532
    %v4534 = vpop.xlane.xlu0 %4533
    %v4535 = vsel %vm4405, %v4493, 0.0
    %4536 = vadd.xlane.f32.xlu0 %v4535
    %v4537 = vpop.xlane.xlu0 %4536
    %v4538 = vsel %vm4405, %v4495, 0.0
    %4539 = vadd.xlane.f32.xlu0 %v4538
    %v4540 = vpop.xlane.xlu0 %4539
    %v4541 = vsel %vm4405, %v4497, 0.0
    %4542 = vadd.xlane.f32.xlu0 %v4541
    %v4543 = vpop.xlane.xlu0 %4542
    %v4544 = vsel %vm4405, %v4499, 0.0
    %4545 = vadd.xlane.f32.xlu0 %v4544
    %v4546 = vpop.xlane.xlu0 %4545
    %v4547 = vsel %vm4405, %v4501, 0.0
    %4548 = vadd.xlane.f32.xlu0 %v4547
    %v4549 = vpop.xlane.xlu0 %4548
    %v4550 = vrcp.pop %v4504
    %v4551 = vrcp.pop %v4507
    %v4552 = vrcp.pop %v4510
    %v4553 = vrcp.pop %v4513
    %v4554 = vrcp.pop %v4516
    %v4555 = vrcp.pop %v4519
    %v4556 = vrcp.pop %v4522
    %v4557 = vrcp.pop %v4525
    %v4558 = vrcp.pop %v4528
    %v4559 = vrcp.pop %v4531
    %v4560 = vrcp.pop %v4534
    %v4561 = vrcp.pop %v4537
    %v4562 = vrcp.pop %v4540
    %v4563 = vrcp.pop %v4543
    %v4564 = vrcp.pop %v4546
    %v4565 = vrcp.pop %v4549
    %v4566 = vmul.f32 %v4471, %v4550
    %v4567 = vmul.f32 %v4473, %v4551
    %v4568 = vmul.f32 %v4475, %v4552
    %v4569 = vmul.f32 %v4477, %v4553
    %v4570 = vmul.f32 %v4479, %v4554
    %v4571 = vmul.f32 %v4481, %v4555
    %v4572 = vmul.f32 %v4483, %v4556
    %v4573 = vmul.f32 %v4485, %v4557
    %v4574 = vmul.f32 %v4487, %v4558
    %v4575 = vmul.f32 %v4489, %v4559
    %v4576 = vmul.f32 %v4491, %v4560
    %v4577 = vmul.f32 %v4493, %v4561
    %v4578 = vmul.f32 %v4495, %v4562
    %v4579 = vmul.f32 %v4497, %v4563
    %v4580 = vmul.f32 %v4499, %v4564
    %v4581 = vmul.f32 %v4501, %v4565
    %4582 = vst.msk [vmem:[%s9] sm:$0x1f] %vm4405, %v4566
    %4583 = vst.msk [vmem:[%s9 + $0x8] sm:$0x1f] %vm4405, %v4567
    %4584 = vst.msk [vmem:[%s9 + $0x10] sm:$0x1f] %vm4405, %v4568
    %4585 = vst.msk [vmem:[%s9 + $0x18] sm:$0x1f] %vm4405, %v4569
    %4586 = vst.msk [vmem:[%s9 + $0x20] sm:$0x1f] %vm4405, %v4570
    %4587 = vst.msk [vmem:[%s9 + $0x28] sm:$0x1f] %vm4405, %v4571
    %4588 = vst.msk [vmem:[%s9 + $0x30] sm:$0x1f] %vm4405, %v4572
    %4589 = vst.msk [vmem:[%s9 + $0x38] sm:$0x1f] %vm4405, %v4573
    %4590 = vst.msk [vmem:[%s9 + $0x40] sm:$0x1f] %vm4405, %v4574
    %4591 = vst.msk [vmem:[%s9 + $0x48] sm:$0x1f] %vm4405, %v4575
    %4592 = vst.msk [vmem:[%s9 + $0x50] sm:$0x1f] %vm4405, %v4576
    %4593 = vst.msk [vmem:[%s9 + $0x58] sm:$0x1f] %vm4405, %v4577
    %4594 = vst.msk [vmem:[%s9 + $0x60] sm:$0x1f] %vm4405, %v4578
    %4595 = vst.msk [vmem:[%s9 + $0x68] sm:$0x1f] %vm4405, %v4579
    %4596 = vst.msk [vmem:[%s9 + $0x70] sm:$0x1f] %vm4405, %v4580
    %4597 = vst.msk [vmem:[%s9 + $0x78] sm:$0x1f] %vm4405, %v4581
    %vm4598 = vcmask 80896
    %v4600 = vsel %vm4598, %v4566, 0
    %vm4602 = vcmask 1041408
    %v4604 = vsel %vm4602, %v3639, 0
    %4606 = vmatpush.msra.mxu0 0.0
    %4607 = vmatpush.msra.mxu0 0.0
    %4608 = vmatpush.msra.mxu0 0.0
    %4609 = vmatpush.msra.mxu0 0.0
    %4610 = vmatpush.msra.mxu0 0.0
    %4611 = vmatpush.msra.mxu0 0.0
    %4612 = vmatpush.msra.mxu0 0.0
    %4613 = vmatpush.msra.mxu0 0.0
    %4614 = vmatpush.msra.mxu0 0.0
    %4615 = vmatpush.msra.mxu0 0.0
    %4616 = vmatpush.msra.mxu0 0.0
    %4617 = vmatpush.msra.mxu0 0.0
    %4618 = vmatpush.msra.mxu0 0.0
    %4619 = vmatpush.msra.mxu0 0.0
    %4620 = vmatpush.msra.mxu0 %v4604
    %4621 = vmatpush.msra.mxu0 %v3597
    %4622 = vmatmul.f32.gmra.mxu0 %v4600
    %v4623 = vpop.f32.mrf.mxu0
    %v4624 = vadd.f32 0.0, %v4623
    %4625 = vdwg.mxu0
    %v4627 = vsel %vm4598, %v4567, 0
    %v4630 = vsel %vm4602, %v3657, 0
    %4632 = vmatpush.msra.mxu0 0.0
    %4633 = vmatpush.msra.mxu0 0.0
    %4634 = vmatpush.msra.mxu0 0.0
    %4635 = vmatpush.msra.mxu0 0.0
    %4636 = vmatpush.msra.mxu0 0.0
    %4637 = vmatpush.msra.mxu0 0.0
    %4638 = vmatpush.msra.mxu0 0.0
    %4639 = vmatpush.msra.mxu0 0.0
    %4640 = vmatpush.msra.mxu0 0.0
    %4641 = vmatpush.msra.mxu0 0.0
    %4642 = vmatpush.msra.mxu0 0.0
    %4643 = vmatpush.msra.mxu0 0.0
    %4644 = vmatpush.msra.mxu0 0.0
    %4645 = vmatpush.msra.mxu0 0.0
    %4646 = vmatpush.msra.mxu0 %v4630
    %4647 = vmatpush.msra.mxu0 %v3599
    %4648 = vmatmul.f32.gmra.mxu0 %v4627
    %v4649 = vpop.f32.mrf.mxu0
    %v4650 = vadd.f32 0.0, %v4649
    %4651 = vdwg.mxu0
    %v4653 = vsel %vm4598, %v4568, 0
    %v4656 = vsel %vm4602, %v3643, 0
    %4658 = vmatpush.msra.mxu0 0.0
    %4659 = vmatpush.msra.mxu0 0.0
    %4660 = vmatpush.msra.mxu0 0.0
    %4661 = vmatpush.msra.mxu0 0.0
    %4662 = vmatpush.msra.mxu0 0.0
    %4663 = vmatpush.msra.mxu0 0.0
    %4664 = vmatpush.msra.mxu0 0.0
    %4665 = vmatpush.msra.mxu0 0.0
    %4666 = vmatpush.msra.mxu0 0.0
    %4667 = vmatpush.msra.mxu0 0.0
    %4668 = vmatpush.msra.mxu0 0.0
    %4669 = vmatpush.msra.mxu0 0.0
    %4670 = vmatpush.msra.mxu0 0.0
    %4671 = vmatpush.msra.mxu0 0.0
    %4672 = vmatpush.msra.mxu0 %v4656
    %4673 = vmatpush.msra.mxu0 %v3601
    %4674 = vmatmul.f32.gmra.mxu0 %v4653
    %v4675 = vpop.f32.mrf.mxu0
    %v4676 = vadd.f32 0.0, %v4675
    %4677 = vdwg.mxu0
    %v4679 = vsel %vm4598, %v4569, 0
    %v4682 = vsel %vm4602, %v3659, 0
    %4684 = vmatpush.msra.mxu0 0.0
    %4685 = vmatpush.msra.mxu0 0.0
    %4686 = vmatpush.msra.mxu0 0.0
    %4687 = vmatpush.msra.mxu0 0.0
    %4688 = vmatpush.msra.mxu0 0.0
    %4689 = vmatpush.msra.mxu0 0.0
    %4690 = vmatpush.msra.mxu0 0.0
    %4691 = vmatpush.msra.mxu0 0.0
    %4692 = vmatpush.msra.mxu0 0.0
    %4693 = vmatpush.msra.mxu0 0.0
    %4694 = vmatpush.msra.mxu0 0.0
    %4695 = vmatpush.msra.mxu0 0.0
    %4696 = vmatpush.msra.mxu0 0.0
    %4697 = vmatpush.msra.mxu0 0.0
    %4698 = vmatpush.msra.mxu0 %v4682
    %4699 = vmatpush.msra.mxu0 %v3603
    %4700 = vmatmul.f32.gmra.mxu0 %v4679
    %v4701 = vpop.f32.mrf.mxu0
    %v4702 = vadd.f32 0.0, %v4701
    %4703 = vdwg.mxu0
    %v4705 = vsel %vm4598, %v4570, 0
    %v4708 = vsel %vm4602, %v3651, 0
    %4710 = vmatpush.msra.mxu0 0.0
    %4711 = vmatpush.msra.mxu0 0.0
    %4712 = vmatpush.msra.mxu0 0.0
    %4713 = vmatpush.msra.mxu0 0.0
    %4714 = vmatpush.msra.mxu0 0.0
    %4715 = vmatpush.msra.mxu0 0.0
    %4716 = vmatpush.msra.mxu0 0.0
    %4717 = vmatpush.msra.mxu0 0.0
    %4718 = vmatpush.msra.mxu0 0.0
    %4719 = vmatpush.msra.mxu0 0.0
    %4720 = vmatpush.msra.mxu0 0.0
    %4721 = vmatpush.msra.mxu0 0.0
    %4722 = vmatpush.msra.mxu0 0.0
    %4723 = vmatpush.msra.mxu0 0.0
    %4724 = vmatpush.msra.mxu0 %v4708
    %4725 = vmatpush.msra.mxu0 %v3605
    %4726 = vmatmul.f32.gmra.mxu0 %v4705
    %v4727 = vpop.f32.mrf.mxu0
    %v4728 = vadd.f32 0.0, %v4727
    %4729 = vdwg.mxu0
    %v4731 = vsel %vm4598, %v4571, 0
    %v4734 = vsel %vm4602, %v3661, 0
    %4736 = vmatpush.msra.mxu0 0.0
    %4737 = vmatpush.msra.mxu0 0.0
    %4738 = vmatpush.msra.mxu0 0.0
    %4739 = vmatpush.msra.mxu0 0.0
    %4740 = vmatpush.msra.mxu0 0.0
    %4741 = vmatpush.msra.mxu0 0.0
    %4742 = vmatpush.msra.mxu0 0.0
    %4743 = vmatpush.msra.mxu0 0.0
    %4744 = vmatpush.msra.mxu0 0.0
    %4745 = vmatpush.msra.mxu0 0.0
    %4746 = vmatpush.msra.mxu0 0.0
    %4747 = vmatpush.msra.mxu0 0.0
    %4748 = vmatpush.msra.mxu0 0.0
    %4749 = vmatpush.msra.mxu0 0.0
    %4750 = vmatpush.msra.mxu0 %v4734
    %4751 = vmatpush.msra.mxu0 %v3607
    %4752 = vmatmul.f32.gmra.mxu0 %v4731
    %v4753 = vpop.f32.mrf.mxu0
    %v4754 = vadd.f32 0.0, %v4753
    %4755 = vdwg.mxu0
    %v4757 = vsel %vm4598, %v4572, 0
    %v4760 = vsel %vm4602, %v3655, 0
    %4762 = vmatpush.msra.mxu0 0.0
    %4763 = vmatpush.msra.mxu0 0.0
    %4764 = vmatpush.msra.mxu0 0.0
    %4765 = vmatpush.msra.mxu0 0.0
    %4766 = vmatpush.msra.mxu0 0.0
    %4767 = vmatpush.msra.mxu0 0.0
    %4768 = vmatpush.msra.mxu0 0.0
    %4769 = vmatpush.msra.mxu0 0.0
    %4770 = vmatpush.msra.mxu0 0.0
    %4771 = vmatpush.msra.mxu0 0.0
    %4772 = vmatpush.msra.mxu0 0.0
    %4773 = vmatpush.msra.mxu0 0.0
    %4774 = vmatpush.msra.mxu0 0.0
    %4775 = vmatpush.msra.mxu0 0.0
    %4776 = vmatpush.msra.mxu0 %v4760
    %4777 = vmatpush.msra.mxu0 %v3609
    %4778 = vmatmul.f32.gmra.mxu0 %v4757
    %v4779 = vpop.f32.mrf.mxu0
    %v4780 = vadd.f32 0.0, %v4779
    %4781 = vdwg.mxu0
    %v4783 = vsel %vm4598, %v4573, 0
    %v4786 = vsel %vm4602, %v3663, 0
    %4788 = vmatpush.msra.mxu0 0.0
    %4789 = vmatpush.msra.mxu0 0.0
    %4790 = vmatpush.msra.mxu0 0.0
    %4791 = vmatpush.msra.mxu0 0.0
    %4792 = vmatpush.msra.mxu0 0.0
    %4793 = vmatpush.msra.mxu0 0.0
    %4794 = vmatpush.msra.mxu0 0.0
    %4795 = vmatpush.msra.mxu0 0.0
    %4796 = vmatpush.msra.mxu0 0.0
    %4797 = vmatpush.msra.mxu0 0.0
    %4798 = vmatpush.msra.mxu0 0.0
    %4799 = vmatpush.msra.mxu0 0.0
    %4800 = vmatpush.msra.mxu0 0.0
    %4801 = vmatpush.msra.mxu0 0.0
    %4802 = vmatpush.msra.mxu0 %v4786
    %4803 = vmatpush.msra.mxu0 %v3611
    %4804 = vmatmul.f32.gmra.mxu0 %v4783
    %v4805 = vpop.f32.mrf.mxu0
    %v4806 = vadd.f32 0.0, %v4805
    %4807 = vdwg.mxu0
    %v4809 = vsel %vm4598, %v4574, 0
    %v4812 = vsel %vm4602, %v3803, 0
    %4814 = vmatpush.msra.mxu0 0.0
    %4815 = vmatpush.msra.mxu0 0.0
    %4816 = vmatpush.msra.mxu0 0.0
    %4817 = vmatpush.msra.mxu0 0.0
    %4818 = vmatpush.msra.mxu0 0.0
    %4819 = vmatpush.msra.mxu0 0.0
    %4820 = vmatpush.msra.mxu0 0.0
    %4821 = vmatpush.msra.mxu0 0.0
    %4822 = vmatpush.msra.mxu0 0.0
    %4823 = vmatpush.msra.mxu0 0.0
    %4824 = vmatpush.msra.mxu0 0.0
    %4825 = vmatpush.msra.mxu0 0.0
    %4826 = vmatpush.msra.mxu0 0.0
    %4827 = vmatpush.msra.mxu0 0.0
    %4828 = vmatpush.msra.mxu0 %v4812
    %4829 = vmatpush.msra.mxu0 %v3761
    %4830 = vmatmul.f32.gmra.mxu0 %v4809
    %v4831 = vpop.f32.mrf.mxu0
    %v4832 = vadd.f32 0.0, %v4831
    %4833 = vdwg.mxu0
    %v4835 = vsel %vm4598, %v4575, 0
    %v4838 = vsel %vm4602, %v3821, 0
    %4840 = vmatpush.msra.mxu0 0.0
    %4841 = vmatpush.msra.mxu0 0.0
    %4842 = vmatpush.msra.mxu0 0.0
    %4843 = vmatpush.msra.mxu0 0.0
    %4844 = vmatpush.msra.mxu0 0.0
    %4845 = vmatpush.msra.mxu0 0.0
    %4846 = vmatpush.msra.mxu0 0.0
    %4847 = vmatpush.msra.mxu0 0.0
    %4848 = vmatpush.msra.mxu0 0.0
    %4849 = vmatpush.msra.mxu0 0.0
    %4850 = vmatpush.msra.mxu0 0.0
    %4851 = vmatpush.msra.mxu0 0.0
    %4852 = vmatpush.msra.mxu0 0.0
    %4853 = vmatpush.msra.mxu0 0.0
    %4854 = vmatpush.msra.mxu0 %v4838
    %4855 = vmatpush.msra.mxu0 %v3763
    %4856 = vmatmul.f32.gmra.mxu0 %v4835
    %v4857 = vpop.f32.mrf.mxu0
    %v4858 = vadd.f32 0.0, %v4857
    %4859 = vdwg.mxu0
    %v4861 = vsel %vm4598, %v4576, 0
    %v4864 = vsel %vm4602, %v3807, 0
    %4866 = vmatpush.msra.mxu0 0.0
    %4867 = vmatpush.msra.mxu0 0.0
    %4868 = vmatpush.msra.mxu0 0.0
    %4869 = vmatpush.msra.mxu0 0.0
    %4870 = vmatpush.msra.mxu0 0.0
    %4871 = vmatpush.msra.mxu0 0.0
    %4872 = vmatpush.msra.mxu0 0.0
    %4873 = vmatpush.msra.mxu0 0.0
    %4874 = vmatpush.msra.mxu0 0.0
    %4875 = vmatpush.msra.mxu0 0.0
    %4876 = vmatpush.msra.mxu0 0.0
    %4877 = vmatpush.msra.mxu0 0.0
    %4878 = vmatpush.msra.mxu0 0.0
    %4879 = vmatpush.msra.mxu0 0.0
    %4880 = vmatpush.msra.mxu0 %v4864
    %4881 = vmatpush.msra.mxu0 %v3765
    %4882 = vmatmul.f32.gmra.mxu0 %v4861
    %v4883 = vpop.f32.mrf.mxu0
    %v4884 = vadd.f32 0.0, %v4883
    %4885 = vdwg.mxu0
    %v4887 = vsel %vm4598, %v4577, 0
    %v4890 = vsel %vm4602, %v3823, 0
    %4892 = vmatpush.msra.mxu0 0.0
    %4893 = vmatpush.msra.mxu0 0.0
    %4894 = vmatpush.msra.mxu0 0.0
    %4895 = vmatpush.msra.mxu0 0.0
    %4896 = vmatpush.msra.mxu0 0.0
    %4897 = vmatpush.msra.mxu0 0.0
    %4898 = vmatpush.msra.mxu0 0.0
    %4899 = vmatpush.msra.mxu0 0.0
    %4900 = vmatpush.msra.mxu0 0.0
    %4901 = vmatpush.msra.mxu0 0.0
    %4902 = vmatpush.msra.mxu0 0.0
    %4903 = vmatpush.msra.mxu0 0.0
    %4904 = vmatpush.msra.mxu0 0.0
    %4905 = vmatpush.msra.mxu0 0.0
    %4906 = vmatpush.msra.mxu0 %v4890
    %4907 = vmatpush.msra.mxu0 %v3767
    %4908 = vmatmul.f32.gmra.mxu0 %v4887
    %v4909 = vpop.f32.mrf.mxu0
    %v4910 = vadd.f32 0.0, %v4909
    %4911 = vdwg.mxu0
    %v4913 = vsel %vm4598, %v4578, 0
    %v4916 = vsel %vm4602, %v3815, 0
    %4918 = vmatpush.msra.mxu0 0.0
    %4919 = vmatpush.msra.mxu0 0.0
    %4920 = vmatpush.msra.mxu0 0.0
    %4921 = vmatpush.msra.mxu0 0.0
    %4922 = vmatpush.msra.mxu0 0.0
    %4923 = vmatpush.msra.mxu0 0.0
    %4924 = vmatpush.msra.mxu0 0.0
    %4925 = vmatpush.msra.mxu0 0.0
    %4926 = vmatpush.msra.mxu0 0.0
    %4927 = vmatpush.msra.mxu0 0.0
    %4928 = vmatpush.msra.mxu0 0.0
    %4929 = vmatpush.msra.mxu0 0.0
    %4930 = vmatpush.msra.mxu0 0.0
    %4931 = vmatpush.msra.mxu0 0.0
    %4932 = vmatpush.msra.mxu0 %v4916
    %4933 = vmatpush.msra.mxu0 %v3769
    %4934 = vmatmul.f32.gmra.mxu0 %v4913
    %v4935 = vpop.f32.mrf.mxu0
    %v4936 = vadd.f32 0.0, %v4935
    %4937 = vdwg.mxu0
    %v4939 = vsel %vm4598, %v4579, 0
    %v4942 = vsel %vm4602, %v3825, 0
    %4944 = vmatpush.msra.mxu0 0.0
    %4945 = vmatpush.msra.mxu0 0.0
    %4946 = vmatpush.msra.mxu0 0.0
    %4947 = vmatpush.msra.mxu0 0.0
    %4948 = vmatpush.msra.mxu0 0.0
    %4949 = vmatpush.msra.mxu0 0.0
    %4950 = vmatpush.msra.mxu0 0.0
    %4951 = vmatpush.msra.mxu0 0.0
    %4952 = vmatpush.msra.mxu0 0.0
    %4953 = vmatpush.msra.mxu0 0.0
    %4954 = vmatpush.msra.mxu0 0.0
    %4955 = vmatpush.msra.mxu0 0.0
    %4956 = vmatpush.msra.mxu0 0.0
    %4957 = vmatpush.msra.mxu0 0.0
    %4958 = vmatpush.msra.mxu0 %v4942
    %4959 = vmatpush.msra.mxu0 %v3771
    %4960 = vmatmul.f32.gmra.mxu0 %v4939
    %v4961 = vpop.f32.mrf.mxu0
    %v4962 = vadd.f32 0.0, %v4961
    %4963 = vdwg.mxu0
    %v4965 = vsel %vm4598, %v4580, 0
    %v4968 = vsel %vm4602, %v3819, 0
    %4970 = vmatpush.msra.mxu0 0.0
    %4971 = vmatpush.msra.mxu0 0.0
    %4972 = vmatpush.msra.mxu0 0.0
    %4973 = vmatpush.msra.mxu0 0.0
    %4974 = vmatpush.msra.mxu0 0.0
    %4975 = vmatpush.msra.mxu0 0.0
    %4976 = vmatpush.msra.mxu0 0.0
    %4977 = vmatpush.msra.mxu0 0.0
    %4978 = vmatpush.msra.mxu0 0.0
    %4979 = vmatpush.msra.mxu0 0.0
    %4980 = vmatpush.msra.mxu0 0.0
    %4981 = vmatpush.msra.mxu0 0.0
    %4982 = vmatpush.msra.mxu0 0.0
    %4983 = vmatpush.msra.mxu0 0.0
    %4984 = vmatpush.msra.mxu0 %v4968
    %4985 = vmatpush.msra.mxu0 %v3773
    %4986 = vmatmul.f32.gmra.mxu0 %v4965
    %v4987 = vpop.f32.mrf.mxu0
    %v4988 = vadd.f32 0.0, %v4987
    %4989 = vdwg.mxu0
    %v4991 = vsel %vm4598, %v4581, 0
    %v4994 = vsel %vm4602, %v3827, 0
    %4996 = vmatpush.msra.mxu0 0.0
    %4997 = vmatpush.msra.mxu0 0.0
    %4998 = vmatpush.msra.mxu0 0.0
    %4999 = vmatpush.msra.mxu0 0.0
    %5000 = vmatpush.msra.mxu0 0.0
    %5001 = vmatpush.msra.mxu0 0.0
    %5002 = vmatpush.msra.mxu0 0.0
    %5003 = vmatpush.msra.mxu0 0.0
    %5004 = vmatpush.msra.mxu0 0.0
    %5005 = vmatpush.msra.mxu0 0.0
    %5006 = vmatpush.msra.mxu0 0.0
    %5007 = vmatpush.msra.mxu0 0.0
    %5008 = vmatpush.msra.mxu0 0.0
    %5009 = vmatpush.msra.mxu0 0.0
    %5010 = vmatpush.msra.mxu0 %v4994
    %5011 = vmatpush.msra.mxu0 %v3775
    %5012 = vmatmul.f32.gmra.mxu0 %v4991
    %v5013 = vpop.f32.mrf.mxu0
    %v5014 = vadd.f32 0.0, %v5013
    %5015 = vdwg.mxu0
    %v5016 = vrot.slane %v4676, 4
    %v5017 = vsel %vm2176, %v5016, %v4624
    %v5018 = vrot.slane %v4624, 4
    %v5019 = vsel %vm2176, %v4676, %v5018
    %v5021 = vunpack.c.l.s4 1983009808
    %v5022 = vunpack.c.0.s8 %v5021
    %v5023 = vperm.slane %v5017, %v5022
    %v5025 = vunpack.c.l.s4 1983009808
    %v5026 = vunpack.c.0.s8 %v5025
    %v5027 = vperm.slane %v5019, %v5026
    %v5028 = vrot.slane %v4702, 4
    %v5029 = vsel %vm2176, %v5028, %v4650
    %v5030 = vrot.slane %v4650, 4
    %v5031 = vsel %vm2176, %v4702, %v5030
    %v5033 = vunpack.c.l.s4 1983009808
    %v5034 = vunpack.c.0.s8 %v5033
    %v5035 = vperm.slane %v5029, %v5034
    %v5037 = vunpack.c.l.s4 1983009808
    %v5038 = vunpack.c.0.s8 %v5037
    %v5039 = vperm.slane %v5031, %v5038
    %v5040 = vrot.slane %v4780, 4
    %v5041 = vsel %vm2176, %v5040, %v4728
    %v5042 = vrot.slane %v4728, 4
    %v5043 = vsel %vm2176, %v4780, %v5042
    %v5045 = vunpack.c.l.s4 1983009808
    %v5046 = vunpack.c.0.s8 %v5045
    %v5047 = vperm.slane %v5041, %v5046
    %v5049 = vunpack.c.l.s4 1983009808
    %v5050 = vunpack.c.0.s8 %v5049
    %v5051 = vperm.slane %v5043, %v5050
    %v5052 = vrot.slane %v4806, 4
    %v5053 = vsel %vm2176, %v5052, %v4754
    %v5054 = vrot.slane %v4754, 4
    %v5055 = vsel %vm2176, %v4806, %v5054
    %v5057 = vunpack.c.l.s4 1983009808
    %v5058 = vunpack.c.0.s8 %v5057
    %v5059 = vperm.slane %v5053, %v5058
    %v5061 = vunpack.c.l.s4 1983009808
    %v5062 = vunpack.c.0.s8 %v5061
    %v5063 = vperm.slane %v5055, %v5062
    %v5064 = vrot.slane %v5035, 4
    %v5065 = vsel %vm2176, %v5064, %v5023
    %v5066 = vrot.slane %v5023, 4
    %v5067 = vsel %vm2176, %v5035, %v5066
    %v5069 = vunpack.c.l.s4 1934713408
    %v5070 = vunpack.c.0.s8 %v5069
    %v5071 = vperm.slane %v5065, %v5070
    %v5073 = vunpack.c.l.s4 1934713408
    %v5074 = vunpack.c.0.s8 %v5073
    %v5075 = vperm.slane %v5067, %v5074
    %v5076 = vrot.slane %v5039, 4
    %v5077 = vsel %vm2176, %v5076, %v5027
    %v5079 = vunpack.c.l.s4 1934713408
    %v5080 = vunpack.c.0.s8 %v5079
    %v5081 = vperm.slane %v5077, %v5080
    %v5082 = vrot.slane %v5059, 4
    %v5083 = vsel %vm2176, %v5082, %v5047
    %v5084 = vrot.slane %v5047, 4
    %v5085 = vsel %vm2176, %v5059, %v5084
    %v5087 = vunpack.c.l.s4 1934713408
    %v5088 = vunpack.c.0.s8 %v5087
    %v5089 = vperm.slane %v5083, %v5088
    %v5091 = vunpack.c.l.s4 1934713408
    %v5092 = vunpack.c.0.s8 %v5091
    %v5093 = vperm.slane %v5085, %v5092
    %v5094 = vrot.slane %v5063, 4
    %v5095 = vsel %vm2176, %v5094, %v5051
    %v5097 = vunpack.c.l.s4 1934713408
    %v5098 = vunpack.c.0.s8 %v5097
    %v5099 = vperm.slane %v5095, %v5098
    %v5100 = vrot.slane %v5089, 4
    %v5101 = vsel %vm2176, %v5100, %v5071
    %v5102 = vrot.slane %v5071, 4
    %v5103 = vsel %vm2176, %v5089, %v5102
    %v5104 = vrot.slane %v5093, 4
    %v5105 = vsel %vm2176, %v5104, %v5075
    %v5106 = vrot.slane %v5075, 4
    %v5107 = vsel %vm2176, %v5093, %v5106
    %v5108 = vrot.slane %v5099, 4
    %v5109 = vsel %vm2176, %v5108, %v5081
    %v5110 = vrot.slane %v4884, 4
    %v5111 = vsel %vm2176, %v5110, %v4832
    %v5112 = vrot.slane %v4832, 4
    %v5113 = vsel %vm2176, %v4884, %v5112
    %v5115 = vunpack.c.l.s4 1983009808
    %v5116 = vunpack.c.0.s8 %v5115
    %v5117 = vperm.slane %v5111, %v5116
    %v5119 = vunpack.c.l.s4 1983009808
    %v5120 = vunpack.c.0.s8 %v5119
    %v5121 = vperm.slane %v5113, %v5120
    %v5122 = vrot.slane %v4910, 4
    %v5123 = vsel %vm2176, %v5122, %v4858
    %v5124 = vrot.slane %v4858, 4
    %v5125 = vsel %vm2176, %v4910, %v5124
    %v5127 = vunpack.c.l.s4 1983009808
    %v5128 = vunpack.c.0.s8 %v5127
    %v5129 = vperm.slane %v5123, %v5128
    %v5131 = vunpack.c.l.s4 1983009808
    %v5132 = vunpack.c.0.s8 %v5131
    %v5133 = vperm.slane %v5125, %v5132
    %v5134 = vrot.slane %v4988, 4
    %v5135 = vsel %vm2176, %v5134, %v4936
    %v5136 = vrot.slane %v4936, 4
    %v5137 = vsel %vm2176, %v4988, %v5136
    %v5139 = vunpack.c.l.s4 1983009808
    %v5140 = vunpack.c.0.s8 %v5139
    %v5141 = vperm.slane %v5135, %v5140
    %v5143 = vunpack.c.l.s4 1983009808
    %v5144 = vunpack.c.0.s8 %v5143
    %v5145 = vperm.slane %v5137, %v5144
    %v5146 = vrot.slane %v5014, 4
    %v5147 = vsel %vm2176, %v5146, %v4962
    %v5148 = vrot.slane %v4962, 4
    %v5149 = vsel %vm2176, %v5014, %v5148
    %v5151 = vunpack.c.l.s4 1983009808
    %v5152 = vunpack.c.0.s8 %v5151
    %v5153 = vperm.slane %v5147, %v5152
    %v5155 = vunpack.c.l.s4 1983009808
    %v5156 = vunpack.c.0.s8 %v5155
    %v5157 = vperm.slane %v5149, %v5156
    %v5158 = vrot.slane %v5129, 4
    %v5159 = vsel %vm2176, %v5158, %v5117
    %v5160 = vrot.slane %v5117, 4
    %v5161 = vsel %vm2176, %v5129, %v5160
    %v5163 = vunpack.c.l.s4 1934713408
    %v5164 = vunpack.c.0.s8 %v5163
    %v5165 = vperm.slane %v5159, %v5164
    %v5167 = vunpack.c.l.s4 1934713408
    %v5168 = vunpack.c.0.s8 %v5167
    %v5169 = vperm.slane %v5161, %v5168
    %v5170 = vrot.slane %v5133, 4
    %v5171 = vsel %vm2176, %v5170, %v5121
    %v5173 = vunpack.c.l.s4 1934713408
    %v5174 = vunpack.c.0.s8 %v5173
    %v5175 = vperm.slane %v5171, %v5174
    %v5176 = vrot.slane %v5153, 4
    %v5177 = vsel %vm2176, %v5176, %v5141
    %v5178 = vrot.slane %v5141, 4
    %v5179 = vsel %vm2176, %v5153, %v5178
    %v5181 = vunpack.c.l.s4 1934713408
    %v5182 = vunpack.c.0.s8 %v5181
    %v5183 = vperm.slane %v5177, %v5182
    %v5185 = vunpack.c.l.s4 1934713408
    %v5186 = vunpack.c.0.s8 %v5185
    %v5187 = vperm.slane %v5179, %v5186
    %v5188 = vrot.slane %v5157, 4
    %v5189 = vsel %vm2176, %v5188, %v5145
    %v5191 = vunpack.c.l.s4 1934713408
    %v5192 = vunpack.c.0.s8 %v5191
    %v5193 = vperm.slane %v5189, %v5192
    %v5194 = vrot.slane %v5183, 4
    %v5195 = vsel %vm2176, %v5194, %v5165
    %v5196 = vrot.slane %v5165, 4
    %v5197 = vsel %vm2176, %v5183, %v5196
    %v5198 = vrot.slane %v5187, 4
    %v5199 = vsel %vm2176, %v5198, %v5169
    %v5200 = vrot.slane %v5169, 4
    %v5201 = vsel %vm2176, %v5187, %v5200
    %v5202 = vrot.slane %v5193, 4
    %v5203 = vsel %vm2176, %v5202, %v5175
    %v5204 = vrot.slane %v5105, 4
    %v5205 = vsel %vm2176, %v5204, %v5101
    %v5206 = vrot.slane %v5101, 4
    %v5207 = vsel %vm2176, %v5105, %v5206
    %v5209 = vunpack.c.l.s4 1983009808
    %v5210 = vunpack.c.0.s8 %v5209
    %v5211 = vperm.slane %v5205, %v5210
    %v5213 = vunpack.c.l.s4 1983009808
    %v5214 = vunpack.c.0.s8 %v5213
    %v5215 = vperm.slane %v5207, %v5214
    %v5216 = vrot.slane %v5107, 4
    %v5217 = vsel %vm2176, %v5216, %v5103
    %v5218 = vrot.slane %v5103, 4
    %v5219 = vsel %vm2176, %v5107, %v5218
    %v5221 = vunpack.c.l.s4 1983009808
    %v5222 = vunpack.c.0.s8 %v5221
    %v5223 = vperm.slane %v5217, %v5222
    %v5225 = vunpack.c.l.s4 1983009808
    %v5226 = vunpack.c.0.s8 %v5225
    %v5227 = vperm.slane %v5219, %v5226
    %v5228 = vrot.slane %v5197, 4
    %v5229 = vsel %vm2176, %v5228, %v5109
    %v5230 = vrot.slane %v5109, 4
    %v5231 = vsel %vm2176, %v5197, %v5230
    %v5233 = vunpack.c.l.s4 1983009808
    %v5234 = vunpack.c.0.s8 %v5233
    %v5235 = vperm.slane %v5229, %v5234
    %v5237 = vunpack.c.l.s4 1983009808
    %v5238 = vunpack.c.0.s8 %v5237
    %v5239 = vperm.slane %v5231, %v5238
    %v5240 = vrot.slane %v5199, 4
    %v5241 = vsel %vm2176, %v5240, %v5195
    %v5242 = vrot.slane %v5195, 4
    %v5243 = vsel %vm2176, %v5199, %v5242
    %v5245 = vunpack.c.l.s4 1983009808
    %v5246 = vunpack.c.0.s8 %v5245
    %v5247 = vperm.slane %v5241, %v5246
    %v5249 = vunpack.c.l.s4 1983009808
    %v5250 = vunpack.c.0.s8 %v5249
    %v5251 = vperm.slane %v5243, %v5250
    %v5252 = vrot.slane %v5223, 4
    %v5253 = vsel %vm2176, %v5252, %v5211
    %v5254 = vrot.slane %v5211, 4
    %v5255 = vsel %vm2176, %v5223, %v5254
    %v5257 = vunpack.c.l.s4 1934713408
    %v5258 = vunpack.c.0.s8 %v5257
    %v5259 = vperm.slane %v5253, %v5258
    %v5261 = vunpack.c.l.s4 1934713408
    %v5262 = vunpack.c.0.s8 %v5261
    %v5263 = vperm.slane %v5255, %v5262
    %v5264 = vrot.slane %v5227, 4
    %v5265 = vsel %vm2176, %v5264, %v5215
    %v5266 = vrot.slane %v5215, 4
    %v5267 = vsel %vm2176, %v5227, %v5266
    %v5269 = vunpack.c.l.s4 1934713408
    %v5270 = vunpack.c.0.s8 %v5269
    %v5271 = vperm.slane %v5265, %v5270
    %v5273 = vunpack.c.l.s4 1934713408
    %v5274 = vunpack.c.0.s8 %v5273
    %v5275 = vperm.slane %v5267, %v5274
    %v5276 = vrot.slane %v5247, 4
    %v5277 = vsel %vm2176, %v5276, %v5235
    %v5278 = vrot.slane %v5235, 4
    %v5279 = vsel %vm2176, %v5247, %v5278
    %v5281 = vunpack.c.l.s4 1934713408
    %v5282 = vunpack.c.0.s8 %v5281
    %v5283 = vperm.slane %v5277, %v5282
    %v5285 = vunpack.c.l.s4 1934713408
    %v5286 = vunpack.c.0.s8 %v5285
    %v5287 = vperm.slane %v5279, %v5286
    %v5288 = vrot.slane %v5251, 4
    %v5289 = vsel %vm2176, %v5288, %v5239
    %v5290 = vrot.slane %v5239, 4
    %v5291 = vsel %vm2176, %v5251, %v5290
    %v5293 = vunpack.c.l.s4 1934713408
    %v5294 = vunpack.c.0.s8 %v5293
    %v5295 = vperm.slane %v5289, %v5294
    %v5297 = vunpack.c.l.s4 1934713408
    %v5298 = vunpack.c.0.s8 %v5297
    %v5299 = vperm.slane %v5291, %v5298
    %v5300 = vrot.slane %v5283, 4
    %v5301 = vsel %vm2176, %v5300, %v5259
    %v5302 = vrot.slane %v5259, 4
    %v5303 = vsel %vm2176, %v5283, %v5302
    %v5304 = vrot.slane %v5287, 4
    %v5305 = vsel %vm2176, %v5304, %v5263
    %v5306 = vrot.slane %v5263, 4
    %v5307 = vsel %vm2176, %v5287, %v5306
    %v5308 = vrot.slane %v5295, 4
    %v5309 = vsel %vm2176, %v5308, %v5271
    %v5310 = vrot.slane %v5271, 4
    %v5311 = vsel %vm2176, %v5295, %v5310
    %v5312 = vrot.slane %v5299, 4
    %v5313 = vsel %vm2176, %v5312, %v5275
    %v5314 = vrot.slane %v5275, 4
    %v5315 = vsel %vm2176, %v5299, %v5314
    %v5316 = vrot.slane %v5201, 4
    %v5317 = vsel %vm2176, 0.0, %v5316
    %v5319 = vunpack.c.l.s4 1983009808
    %v5320 = vunpack.c.0.s8 %v5319
    %v5321 = vperm.slane %v5201, %v5320
    %v5323 = vunpack.c.l.s4 1983009808
    %v5324 = vunpack.c.0.s8 %v5323
    %v5325 = vperm.slane %v5317, %v5324
    %v5326 = vrot.slane %v5203, 4
    %v5327 = vsel %vm2176, 0.0, %v5326
    %v5329 = vunpack.c.l.s4 1983009808
    %v5330 = vunpack.c.0.s8 %v5329
    %v5331 = vperm.slane %v5203, %v5330
    %v5333 = vunpack.c.l.s4 1983009808
    %v5334 = vunpack.c.0.s8 %v5333
    %v5335 = vperm.slane %v5327, %v5334
    %v5336 = vrot.slane %v5331, 4
    %v5337 = vsel %vm2176, %v5336, %v5321
    %v5338 = vrot.slane %v5321, 4
    %v5339 = vsel %vm2176, %v5331, %v5338
    %v5341 = vunpack.c.l.s4 1934713408
    %v5342 = vunpack.c.0.s8 %v5341
    %v5343 = vperm.slane %v5337, %v5342
    %v5345 = vunpack.c.l.s4 1934713408
    %v5346 = vunpack.c.0.s8 %v5345
    %v5347 = vperm.slane %v5339, %v5346
    %v5348 = vrot.slane %v5335, 4
    %v5349 = vsel %vm2176, %v5348, %v5325
    %v5350 = vrot.slane %v5325, 4
    %v5351 = vsel %vm2176, %v5335, %v5350
    %v5353 = vunpack.c.l.s4 1934713408
    %v5354 = vunpack.c.0.s8 %v5353
    %v5355 = vperm.slane %v5349, %v5354
    %v5357 = vunpack.c.l.s4 1934713408
    %v5358 = vunpack.c.0.s8 %v5357
    %v5359 = vperm.slane %v5351, %v5358
    %v5360 = vrot.slane %v5343, 4
    %v5361 = vsel %vm2176, 0.0, %v5360
    %v5362 = vrot.slane %v5347, 4
    %v5363 = vsel %vm2176, 0.0, %v5362
    %v5364 = vrot.slane %v5355, 4
    %v5365 = vsel %vm2176, 0.0, %v5364
    %v5366 = vrot.slane %v5359, 4
    %v5367 = vsel %vm2176, 0.0, %v5366
    %5370 = vrot.lane.b32.xlu0 %v5303, 64
    %v5371 = vpop.permute.xlu0 %5370
    %5372 = vrot.lane.b32.xlu0 %v5361, 64
    %v5373 = vpop.permute.xlu0 %5372
    %5378 = vrot.lane.b32.xlu0 %v5307, 64
    %v5379 = vpop.permute.xlu0 %5378
    %5380 = vrot.lane.b32.xlu0 %v5363, 64
    %v5381 = vpop.permute.xlu0 %5380
    %5386 = vrot.lane.b32.xlu0 %v5311, 64
    %v5387 = vpop.permute.xlu0 %5386
    %5388 = vrot.lane.b32.xlu0 %v5365, 64
    %v5389 = vpop.permute.xlu0 %5388
    %5394 = vrot.lane.b32.xlu0 %v5315, 64
    %v5395 = vpop.permute.xlu0 %5394
    %5396 = vrot.lane.b32.xlu0 %v5367, 64
    %v5397 = vpop.permute.xlu0 %5396
    %v5400 = vsel %vm3828, %v5301, %v5371
    %v5401 = vsel %vm3828, %v5343, %v5373
    %v5402 = vsel %vm3828, %v5305, %v5379
    %v5403 = vsel %vm3828, %v5347, %v5381
    %v5404 = vsel %vm3828, %v5309, %v5387
    %v5405 = vsel %vm3828, %v5355, %v5389
    %v5406 = vsel %vm3828, %v5313, %v5395
    %v5407 = vsel %vm3828, %v5359, %v5397
    %v5408 = vld [vmem:[#allocation13] sm:$0xff]
    %v5409 = vld [vmem:[#allocation13 + $0x8] sm:$0xff]
    %v5410 = vld [vmem:[#allocation13 + $0x10] sm:$0xff]
    %v5411 = vld [vmem:[#allocation13 + $0x18] sm:$0xff]
    %v5412 = vld [vmem:[#allocation13 + $0x20] sm:$0xff]
    %v5413 = vld [vmem:[#allocation13 + $0x28] sm:$0xff]
    %v5414 = vld [vmem:[#allocation13 + $0x30] sm:$0xff]
    %v5415 = vld [vmem:[#allocation13 + $0x38] sm:$0xff]
    %v5416 = vld [vmem:[#allocation13 + $0x40] sm:$0xff]
    %v5417 = vld [vmem:[#allocation13 + $0x48] sm:$0xff]
    %v5418 = vld [vmem:[#allocation13 + $0x50] sm:$0xff]
    %v5419 = vld [vmem:[#allocation13 + $0x58] sm:$0xff]
    %v5420 = vld [vmem:[#allocation13 + $0x60] sm:$0xff]
    %v5421 = vld [vmem:[#allocation13 + $0x68] sm:$0xff]
    %v5422 = vld [vmem:[#allocation13 + $0x70] sm:$0xff]
    %v5423 = vld [vmem:[#allocation13 + $0x78] sm:$0xff]
    %v5424 = vld [vmem:[#allocation13 + $0x80] sm:$0xff]
    %v5425 = vld [vmem:[#allocation13 + $0x88] sm:$0xff]
    %v5426 = vld [vmem:[#allocation13 + $0x90] sm:$0xff]
    %v5427 = vld [vmem:[#allocation13 + $0x98] sm:$0xff]
    %v5428 = vld [vmem:[#allocation13 + $0xa0] sm:$0xff]
    %v5429 = vld [vmem:[#allocation13 + $0xa8] sm:$0xff]
    %v5430 = vld [vmem:[#allocation13 + $0xb0] sm:$0xff]
    %v5431 = vld [vmem:[#allocation13 + $0xb8] sm:$0xff]
    %v5432 = vld [vmem:[#allocation13 + $0xc0] sm:$0xff]
    %v5433 = vld [vmem:[#allocation13 + $0xc8] sm:$0xff]
    %v5434 = vld [vmem:[#allocation13 + $0xd0] sm:$0xff]
    %v5435 = vld [vmem:[#allocation13 + $0xd8] sm:$0xff]
    %v5436 = vld [vmem:[#allocation13 + $0xe0] sm:$0xff]
    %v5437 = vld [vmem:[#allocation13 + $0xe8] sm:$0xff]
    %v5438 = vld [vmem:[#allocation13 + $0xf0] sm:$0xff]
    %v5439 = vld [vmem:[#allocation13 + $0xf8] sm:$0xff]
    %v5440 = vld [vmem:[#allocation13 + $0x100] sm:$0xff]
    %v5441 = vld [vmem:[#allocation13 + $0x108] sm:$0xff]
    %v5442 = vld [vmem:[#allocation13 + $0x110] sm:$0xff]
    %v5443 = vld [vmem:[#allocation13 + $0x118] sm:$0xff]
    %v5444 = vld [vmem:[#allocation13 + $0x120] sm:$0xff]
    %v5445 = vld [vmem:[#allocation13 + $0x128] sm:$0xff]
    %v5446 = vld [vmem:[#allocation13 + $0x130] sm:$0xff]
    %v5447 = vld [vmem:[#allocation13 + $0x138] sm:$0xff]
    %v5448 = vld [vmem:[#allocation13 + $0x140] sm:$0xff]
    %v5449 = vld [vmem:[#allocation13 + $0x148] sm:$0xff]
    %v5450 = vld [vmem:[#allocation13 + $0x150] sm:$0xff]
    %v5451 = vld [vmem:[#allocation13 + $0x158] sm:$0xff]
    %v5452 = vld [vmem:[#allocation13 + $0x160] sm:$0xff]
    %v5453 = vld [vmem:[#allocation13 + $0x168] sm:$0xff]
    %v5454 = vld [vmem:[#allocation13 + $0x170] sm:$0xff]
    %v5455 = vld [vmem:[#allocation13 + $0x178] sm:$0xff]
    %v5456 = vld [vmem:[#allocation13 + $0x180] sm:$0xff]
    %v5457 = vld [vmem:[#allocation13 + $0x188] sm:$0xff]
    %v5458 = vld [vmem:[#allocation13 + $0x190] sm:$0xff]
    %v5459 = vld [vmem:[#allocation13 + $0x198] sm:$0xff]
    %v5460 = vld [vmem:[#allocation13 + $0x1a0] sm:$0xff]
    %v5461 = vld [vmem:[#allocation13 + $0x1a8] sm:$0xff]
    %v5462 = vld [vmem:[#allocation13 + $0x1b0] sm:$0xff]
    %v5463 = vld [vmem:[#allocation13 + $0x1b8] sm:$0xff]
    %v5464 = vld [vmem:[#allocation13 + $0x1c0] sm:$0xff]
    %v5465 = vld [vmem:[#allocation13 + $0x1c8] sm:$0xff]
    %v5466 = vld [vmem:[#allocation13 + $0x1d0] sm:$0xff]
    %v5467 = vld [vmem:[#allocation13 + $0x1d8] sm:$0xff]
    %v5468 = vld [vmem:[#allocation13 + $0x1e0] sm:$0xff]
    %v5469 = vld [vmem:[#allocation13 + $0x1e8] sm:$0xff]
    %v5470 = vld [vmem:[#allocation13 + $0x1f0] sm:$0xff]
    %v5471 = vld [vmem:[#allocation13 + $0x1f8] sm:$0xff]
    %v5472 = vld [vmem:[#allocation13 + $0x200] sm:$0xff]
    %v5473 = vld [vmem:[#allocation13 + $0x208] sm:$0xff]
    %v5474 = vld [vmem:[#allocation13 + $0x210] sm:$0xff]
    %v5475 = vld [vmem:[#allocation13 + $0x218] sm:$0xff]
    %v5476 = vld [vmem:[#allocation13 + $0x220] sm:$0xff]
    %v5477 = vld [vmem:[#allocation13 + $0x228] sm:$0xff]
    %v5478 = vld [vmem:[#allocation13 + $0x230] sm:$0xff]
    %v5479 = vld [vmem:[#allocation13 + $0x238] sm:$0xff]
    %v5480 = vld [vmem:[#allocation13 + $0x240] sm:$0xff]
    %v5481 = vld [vmem:[#allocation13 + $0x248] sm:$0xff]
    %v5482 = vld [vmem:[#allocation13 + $0x250] sm:$0xff]
    %v5483 = vld [vmem:[#allocation13 + $0x258] sm:$0xff]
    %v5484 = vld [vmem:[#allocation13 + $0x260] sm:$0xff]
    %v5485 = vld [vmem:[#allocation13 + $0x268] sm:$0xff]
    %v5486 = vld [vmem:[#allocation13 + $0x270] sm:$0xff]
    %v5487 = vld [vmem:[#allocation13 + $0x278] sm:$0xff]
    %v5488 = vld [vmem:[#allocation13 + $0x280] sm:$0xff]
    %v5489 = vld [vmem:[#allocation13 + $0x288] sm:$0xff]
    %v5490 = vld [vmem:[#allocation13 + $0x290] sm:$0xff]
    %v5491 = vld [vmem:[#allocation13 + $0x298] sm:$0xff]
    %v5492 = vld [vmem:[#allocation13 + $0x2a0] sm:$0xff]
    %v5493 = vld [vmem:[#allocation13 + $0x2a8] sm:$0xff]
    %v5494 = vld [vmem:[#allocation13 + $0x2b0] sm:$0xff]
    %v5495 = vld [vmem:[#allocation13 + $0x2b8] sm:$0xff]
    %v5496 = vld [vmem:[#allocation13 + $0x2c0] sm:$0xff]
    %v5497 = vld [vmem:[#allocation13 + $0x2c8] sm:$0xff]
    %v5498 = vld [vmem:[#allocation13 + $0x2d0] sm:$0xff]
    %v5499 = vld [vmem:[#allocation13 + $0x2d8] sm:$0xff]
    %v5500 = vld [vmem:[#allocation13 + $0x2e0] sm:$0xff]
    %v5501 = vld [vmem:[#allocation13 + $0x2e8] sm:$0xff]
    %v5502 = vld [vmem:[#allocation13 + $0x2f0] sm:$0xff]
    %v5503 = vld [vmem:[#allocation13 + $0x2f8] sm:$0xff]
    %v5504 = vld [vmem:[#allocation13 + $0x300] sm:$0xff]
    %v5505 = vld [vmem:[#allocation13 + $0x308] sm:$0xff]
    %v5506 = vld [vmem:[#allocation13 + $0x310] sm:$0xff]
    %v5507 = vld [vmem:[#allocation13 + $0x318] sm:$0xff]
    %v5508 = vld [vmem:[#allocation13 + $0x320] sm:$0xff]
    %v5509 = vld [vmem:[#allocation13 + $0x328] sm:$0xff]
    %v5510 = vld [vmem:[#allocation13 + $0x330] sm:$0xff]
    %v5511 = vld [vmem:[#allocation13 + $0x338] sm:$0xff]
    %v5512 = vld [vmem:[#allocation13 + $0x340] sm:$0xff]
    %v5513 = vld [vmem:[#allocation13 + $0x348] sm:$0xff]
    %v5514 = vld [vmem:[#allocation13 + $0x350] sm:$0xff]
    %v5515 = vld [vmem:[#allocation13 + $0x358] sm:$0xff]
    %v5516 = vld [vmem:[#allocation13 + $0x360] sm:$0xff]
    %v5517 = vld [vmem:[#allocation13 + $0x368] sm:$0xff]
    %v5518 = vld [vmem:[#allocation13 + $0x370] sm:$0xff]
    %v5519 = vld [vmem:[#allocation13 + $0x378] sm:$0xff]
    %v5520 = vld [vmem:[#allocation13 + $0x380] sm:$0xff]
    %v5521 = vld [vmem:[#allocation13 + $0x388] sm:$0xff]
    %v5522 = vld [vmem:[#allocation13 + $0x390] sm:$0xff]
    %v5523 = vld [vmem:[#allocation13 + $0x398] sm:$0xff]
    %v5524 = vld [vmem:[#allocation13 + $0x3a0] sm:$0xff]
    %v5525 = vld [vmem:[#allocation13 + $0x3a8] sm:$0xff]
    %v5526 = vld [vmem:[#allocation13 + $0x3b0] sm:$0xff]
    %v5527 = vld [vmem:[#allocation13 + $0x3b8] sm:$0xff]
    %v5528 = vld [vmem:[#allocation13 + $0x3c0] sm:$0xff]
    %v5529 = vld [vmem:[#allocation13 + $0x3c8] sm:$0xff]
    %v5530 = vld [vmem:[#allocation13 + $0x3d0] sm:$0xff]
    %v5531 = vld [vmem:[#allocation13 + $0x3d8] sm:$0xff]
    %v5532 = vld [vmem:[#allocation13 + $0x3e0] sm:$0xff]
    %v5533 = vld [vmem:[#allocation13 + $0x3e8] sm:$0xff]
    %v5534 = vld [vmem:[#allocation13 + $0x3f0] sm:$0xff]
    %v5535 = vld [vmem:[#allocation13 + $0x3f8] sm:$0xff]
    %v5536 = vld [vmem:[#allocation13 + $0x400] sm:$0xff]
    %v5537 = vld [vmem:[#allocation13 + $0x408] sm:$0xff]
    %v5538 = vld [vmem:[#allocation13 + $0x410] sm:$0xff]
    %v5539 = vld [vmem:[#allocation13 + $0x418] sm:$0xff]
    %v5540 = vld [vmem:[#allocation13 + $0x420] sm:$0xff]
    %v5541 = vld [vmem:[#allocation13 + $0x428] sm:$0xff]
    %v5542 = vld [vmem:[#allocation13 + $0x430] sm:$0xff]
    %v5543 = vld [vmem:[#allocation13 + $0x438] sm:$0xff]
    %v5544 = vld [vmem:[#allocation13 + $0x440] sm:$0xff]
    %v5545 = vld [vmem:[#allocation13 + $0x448] sm:$0xff]
    %v5546 = vld [vmem:[#allocation13 + $0x450] sm:$0xff]
    %v5547 = vld [vmem:[#allocation13 + $0x458] sm:$0xff]
    %v5548 = vld [vmem:[#allocation13 + $0x460] sm:$0xff]
    %v5549 = vld [vmem:[#allocation13 + $0x468] sm:$0xff]
    %v5550 = vld [vmem:[#allocation13 + $0x470] sm:$0xff]
    %v5551 = vld [vmem:[#allocation13 + $0x478] sm:$0xff]
    %v5552 = vld [vmem:[#allocation13 + $0x480] sm:$0xff]
    %v5553 = vld [vmem:[#allocation13 + $0x488] sm:$0xff]
    %v5554 = vld [vmem:[#allocation13 + $0x490] sm:$0xff]
    %v5555 = vld [vmem:[#allocation13 + $0x498] sm:$0xff]
    %v5556 = vld [vmem:[#allocation13 + $0x4a0] sm:$0xff]
    %v5557 = vld [vmem:[#allocation13 + $0x4a8] sm:$0xff]
    %v5558 = vld [vmem:[#allocation13 + $0x4b0] sm:$0xff]
    %v5559 = vld [vmem:[#allocation13 + $0x4b8] sm:$0xff]
    %v5560 = vld [vmem:[#allocation13 + $0x4c0] sm:$0xff]
    %v5561 = vld [vmem:[#allocation13 + $0x4c8] sm:$0xff]
    %v5562 = vld [vmem:[#allocation13 + $0x4d0] sm:$0xff]
    %v5563 = vld [vmem:[#allocation13 + $0x4d8] sm:$0xff]
    %v5564 = vld [vmem:[#allocation13 + $0x4e0] sm:$0xff]
    %v5565 = vld [vmem:[#allocation13 + $0x4e8] sm:$0xff]
    %v5566 = vld [vmem:[#allocation13 + $0x4f0] sm:$0xff]
    %v5567 = vld [vmem:[#allocation13 + $0x4f8] sm:$0xff]
    %v5568 = vld [vmem:[#allocation13 + $0x500] sm:$0xff]
    %v5569 = vld [vmem:[#allocation13 + $0x508] sm:$0xff]
    %v5570 = vld [vmem:[#allocation13 + $0x510] sm:$0xff]
    %v5571 = vld [vmem:[#allocation13 + $0x518] sm:$0xff]
    %v5572 = vld [vmem:[#allocation13 + $0x520] sm:$0xff]
    %v5573 = vld [vmem:[#allocation13 + $0x528] sm:$0xff]
    %v5574 = vld [vmem:[#allocation13 + $0x530] sm:$0xff]
    %v5575 = vld [vmem:[#allocation13 + $0x538] sm:$0xff]
    %v5576 = vld [vmem:[#allocation13 + $0x540] sm:$0xff]
    %v5577 = vld [vmem:[#allocation13 + $0x548] sm:$0xff]
    %v5578 = vld [vmem:[#allocation13 + $0x550] sm:$0xff]
    %v5579 = vld [vmem:[#allocation13 + $0x558] sm:$0xff]
    %v5580 = vld [vmem:[#allocation13 + $0x560] sm:$0xff]
    %v5581 = vld [vmem:[#allocation13 + $0x568] sm:$0xff]
    %v5582 = vld [vmem:[#allocation13 + $0x570] sm:$0xff]
    %v5583 = vld [vmem:[#allocation13 + $0x578] sm:$0xff]
    %v5584 = vld [vmem:[#allocation13 + $0x580] sm:$0xff]
    %v5585 = vld [vmem:[#allocation13 + $0x588] sm:$0xff]
    %v5586 = vld [vmem:[#allocation13 + $0x590] sm:$0xff]
    %v5587 = vld [vmem:[#allocation13 + $0x598] sm:$0xff]
    %v5588 = vld [vmem:[#allocation13 + $0x5a0] sm:$0xff]
    %v5589 = vld [vmem:[#allocation13 + $0x5a8] sm:$0xff]
    %v5590 = vld [vmem:[#allocation13 + $0x5b0] sm:$0xff]
    %v5591 = vld [vmem:[#allocation13 + $0x5b8] sm:$0xff]
    %v5592 = vld [vmem:[#allocation13 + $0x5c0] sm:$0xff]
    %v5593 = vld [vmem:[#allocation13 + $0x5c8] sm:$0xff]
    %v5594 = vld [vmem:[#allocation13 + $0x5d0] sm:$0xff]
    %v5595 = vld [vmem:[#allocation13 + $0x5d8] sm:$0xff]
    %v5596 = vld [vmem:[#allocation13 + $0x5e0] sm:$0xff]
    %v5597 = vld [vmem:[#allocation13 + $0x5e8] sm:$0xff]
    %v5598 = vld [vmem:[#allocation13 + $0x5f0] sm:$0xff]
    %v5599 = vld [vmem:[#allocation13 + $0x5f8] sm:$0xff]
    %v5600 = vld [vmem:[#allocation13 + $0x600] sm:$0xff]
    %v5601 = vld [vmem:[#allocation13 + $0x608] sm:$0xff]
    %v5602 = vld [vmem:[#allocation13 + $0x610] sm:$0xff]
    %v5603 = vld [vmem:[#allocation13 + $0x618] sm:$0xff]
    %v5604 = vld [vmem:[#allocation13 + $0x620] sm:$0xff]
    %v5605 = vld [vmem:[#allocation13 + $0x628] sm:$0xff]
    %v5606 = vld [vmem:[#allocation13 + $0x630] sm:$0xff]
    %v5607 = vld [vmem:[#allocation13 + $0x638] sm:$0xff]
    %v5608 = vld [vmem:[#allocation13 + $0x640] sm:$0xff]
    %v5609 = vld [vmem:[#allocation13 + $0x648] sm:$0xff]
    %v5610 = vld [vmem:[#allocation13 + $0x650] sm:$0xff]
    %v5611 = vld [vmem:[#allocation13 + $0x658] sm:$0xff]
    %v5612 = vld [vmem:[#allocation13 + $0x660] sm:$0xff]
    %v5613 = vld [vmem:[#allocation13 + $0x668] sm:$0xff]
    %v5614 = vld [vmem:[#allocation13 + $0x670] sm:$0xff]
    %v5615 = vld [vmem:[#allocation13 + $0x678] sm:$0xff]
    %v5616 = vld [vmem:[#allocation13 + $0x680] sm:$0xff]
    %v5617 = vld [vmem:[#allocation13 + $0x688] sm:$0xff]
    %v5618 = vld [vmem:[#allocation13 + $0x690] sm:$0xff]
    %v5619 = vld [vmem:[#allocation13 + $0x698] sm:$0xff]
    %v5620 = vld [vmem:[#allocation13 + $0x6a0] sm:$0xff]
    %v5621 = vld [vmem:[#allocation13 + $0x6a8] sm:$0xff]
    %v5622 = vld [vmem:[#allocation13 + $0x6b0] sm:$0xff]
    %v5623 = vld [vmem:[#allocation13 + $0x6b8] sm:$0xff]
    %v5624 = vld [vmem:[#allocation13 + $0x6c0] sm:$0xff]
    %v5625 = vld [vmem:[#allocation13 + $0x6c8] sm:$0xff]
    %v5626 = vld [vmem:[#allocation13 + $0x6d0] sm:$0xff]
    %v5627 = vld [vmem:[#allocation13 + $0x6d8] sm:$0xff]
    %v5628 = vld [vmem:[#allocation13 + $0x6e0] sm:$0xff]
    %v5629 = vld [vmem:[#allocation13 + $0x6e8] sm:$0xff]
    %v5630 = vld [vmem:[#allocation13 + $0x6f0] sm:$0xff]
    %v5631 = vld [vmem:[#allocation13 + $0x6f8] sm:$0xff]
    %v5632 = vld [vmem:[#allocation13 + $0x700] sm:$0xff]
    %v5633 = vld [vmem:[#allocation13 + $0x708] sm:$0xff]
    %v5634 = vld [vmem:[#allocation13 + $0x710] sm:$0xff]
    %v5635 = vld [vmem:[#allocation13 + $0x718] sm:$0xff]
    %v5636 = vld [vmem:[#allocation13 + $0x720] sm:$0xff]
    %v5637 = vld [vmem:[#allocation13 + $0x728] sm:$0xff]
    %v5638 = vld [vmem:[#allocation13 + $0x730] sm:$0xff]
    %v5639 = vld [vmem:[#allocation13 + $0x738] sm:$0xff]
    %v5640 = vld [vmem:[#allocation13 + $0x740] sm:$0xff]
    %v5641 = vld [vmem:[#allocation13 + $0x748] sm:$0xff]
    %v5642 = vld [vmem:[#allocation13 + $0x750] sm:$0xff]
    %v5643 = vld [vmem:[#allocation13 + $0x758] sm:$0xff]
    %v5644 = vld [vmem:[#allocation13 + $0x760] sm:$0xff]
    %v5645 = vld [vmem:[#allocation13 + $0x768] sm:$0xff]
    %v5646 = vld [vmem:[#allocation13 + $0x770] sm:$0xff]
    %v5647 = vld [vmem:[#allocation13 + $0x778] sm:$0xff]
    %v5648 = vld [vmem:[#allocation13 + $0x780] sm:$0xff]
    %v5649 = vld [vmem:[#allocation13 + $0x788] sm:$0xff]
    %v5650 = vld [vmem:[#allocation13 + $0x790] sm:$0xff]
    %v5651 = vld [vmem:[#allocation13 + $0x798] sm:$0xff]
    %v5652 = vld [vmem:[#allocation13 + $0x7a0] sm:$0xff]
    %v5653 = vld [vmem:[#allocation13 + $0x7a8] sm:$0xff]
    %v5654 = vld [vmem:[#allocation13 + $0x7b0] sm:$0xff]
    %v5655 = vld [vmem:[#allocation13 + $0x7b8] sm:$0xff]
    %v5656 = vld [vmem:[#allocation13 + $0x7c0] sm:$0xff]
    %v5657 = vld [vmem:[#allocation13 + $0x7c8] sm:$0xff]
    %v5658 = vld [vmem:[#allocation13 + $0x7d0] sm:$0xff]
    %v5659 = vld [vmem:[#allocation13 + $0x7d8] sm:$0xff]
    %v5660 = vld [vmem:[#allocation13 + $0x7e0] sm:$0xff]
    %v5661 = vld [vmem:[#allocation13 + $0x7e8] sm:$0xff]
    %v5662 = vld [vmem:[#allocation13 + $0x7f0] sm:$0xff]
    %v5663 = vld [vmem:[#allocation13 + $0x7f8] sm:$0xff]
    %5664 = vmatpush.msra.mxu0 %v5468
    %5665 = vmatpush.msra.mxu0 %v5464
    %5666 = vmatpush.msra.mxu0 %v5460
    %5667 = vmatpush.msra.mxu0 %v5456
    %5668 = vmatpush.msra.mxu0 %v5452
    %5669 = vmatpush.msra.mxu0 %v5448
    %5670 = vmatpush.msra.mxu0 %v5444
    %5671 = vmatpush.msra.mxu0 %v5440
    %5672 = vmatpush.msra.mxu0 %v5436
    %5673 = vmatpush.msra.mxu0 %v5432
    %5674 = vmatpush.msra.mxu0 %v5428
    %5675 = vmatpush.msra.mxu0 %v5424
    %5676 = vmatpush.msra.mxu0 %v5420
    %5677 = vmatpush.msra.mxu0 %v5416
    %5678 = vmatpush.msra.mxu0 %v5412
    %5679 = vmatpush.msra.mxu0 %v5408
    %5680 = vmatmul.f32.gmra.mxu0 %v5400
    %v5681 = vpop.f32.mrf.mxu0
    %v5682 = vadd.f32 0.0, %v5681
    %5683 = vmatmul.f32.gmra.mxu0 %v5401
    %v5684 = vpop.f32.mrf.mxu0
    %v5685 = vadd.f32 0.0, %v5684
    %5686 = vdwg.mxu0
    %5687 = vmatpush.msra.mxu0 %v5532
    %5688 = vmatpush.msra.mxu0 %v5528
    %5689 = vmatpush.msra.mxu0 %v5524
    %5690 = vmatpush.msra.mxu0 %v5520
    %5691 = vmatpush.msra.mxu0 %v5516
    %5692 = vmatpush.msra.mxu0 %v5512
    %5693 = vmatpush.msra.mxu0 %v5508
    %5694 = vmatpush.msra.mxu0 %v5504
    %5695 = vmatpush.msra.mxu0 %v5500
    %5696 = vmatpush.msra.mxu0 %v5496
    %5697 = vmatpush.msra.mxu0 %v5492
    %5698 = vmatpush.msra.mxu0 %v5488
    %5699 = vmatpush.msra.mxu0 %v5484
    %5700 = vmatpush.msra.mxu0 %v5480
    %5701 = vmatpush.msra.mxu0 %v5476
    %5702 = vmatpush.msra.mxu0 %v5472
    %5703 = vmatmul.f32.gmra.mxu0 %v5402
    %v5704 = vpop.f32.mrf.mxu0
    %v5705 = vadd.f32 %v5682, %v5704
    %5706 = vmatmul.f32.gmra.mxu0 %v5403
    %v5707 = vpop.f32.mrf.mxu0
    %v5708 = vadd.f32 %v5685, %v5707
    %5709 = vdwg.mxu0
    %5710 = vmatpush.msra.mxu0 %v5596
    %5711 = vmatpush.msra.mxu0 %v5592
    %5712 = vmatpush.msra.mxu0 %v5588
    %5713 = vmatpush.msra.mxu0 %v5584
    %5714 = vmatpush.msra.mxu0 %v5580
    %5715 = vmatpush.msra.mxu0 %v5576
    %5716 = vmatpush.msra.mxu0 %v5572
    %5717 = vmatpush.msra.mxu0 %v5568
    %5718 = vmatpush.msra.mxu0 %v5564
    %5719 = vmatpush.msra.mxu0 %v5560
    %5720 = vmatpush.msra.mxu0 %v5556
    %5721 = vmatpush.msra.mxu0 %v5552
    %5722 = vmatpush.msra.mxu0 %v5548
    %5723 = vmatpush.msra.mxu0 %v5544
    %5724 = vmatpush.msra.mxu0 %v5540
    %5725 = vmatpush.msra.mxu0 %v5536
    %5726 = vmatmul.f32.gmra.mxu0 %v5404
    %v5727 = vpop.f32.mrf.mxu0
    %v5728 = vadd.f32 %v5705, %v5727
    %5729 = vmatmul.f32.gmra.mxu0 %v5405
    %v5730 = vpop.f32.mrf.mxu0
    %v5731 = vadd.f32 %v5708, %v5730
    %5732 = vdwg.mxu0
    %5733 = vmatpush.msra.mxu0 %v5660
    %5734 = vmatpush.msra.mxu0 %v5656
    %5735 = vmatpush.msra.mxu0 %v5652
    %5736 = vmatpush.msra.mxu0 %v5648
    %5737 = vmatpush.msra.mxu0 %v5644
    %5738 = vmatpush.msra.mxu0 %v5640
    %5739 = vmatpush.msra.mxu0 %v5636
    %5740 = vmatpush.msra.mxu0 %v5632
    %5741 = vmatpush.msra.mxu0 %v5628
    %5742 = vmatpush.msra.mxu0 %v5624
    %5743 = vmatpush.msra.mxu0 %v5620
    %5744 = vmatpush.msra.mxu0 %v5616
    %5745 = vmatpush.msra.mxu0 %v5612
    %5746 = vmatpush.msra.mxu0 %v5608
    %5747 = vmatpush.msra.mxu0 %v5604
    %5748 = vmatpush.msra.mxu0 %v5600
    %5749 = vmatmul.f32.gmra.mxu0 %v5406
    %v5750 = vpop.f32.mrf.mxu0
    %v5751 = vadd.f32 %v5728, %v5750
    %5752 = vmatmul.f32.gmra.mxu0 %v5407
    %v5753 = vpop.f32.mrf.mxu0
    %v5754 = vadd.f32 %v5731, %v5753
    %5755 = vdwg.mxu0
    %5756 = vmatpush.msra.mxu0 %v5469
    %5757 = vmatpush.msra.mxu0 %v5465
    %5758 = vmatpush.msra.mxu0 %v5461
    %5759 = vmatpush.msra.mxu0 %v5457
    %5760 = vmatpush.msra.mxu0 %v5453
    %5761 = vmatpush.msra.mxu0 %v5449
    %5762 = vmatpush.msra.mxu0 %v5445
    %5763 = vmatpush.msra.mxu0 %v5441
    %5764 = vmatpush.msra.mxu0 %v5437
    %5765 = vmatpush.msra.mxu0 %v5433
    %5766 = vmatpush.msra.mxu0 %v5429
    %5767 = vmatpush.msra.mxu0 %v5425
    %5768 = vmatpush.msra.mxu0 %v5421
    %5769 = vmatpush.msra.mxu0 %v5417
    %5770 = vmatpush.msra.mxu0 %v5413
    %5771 = vmatpush.msra.mxu0 %v5409
    %5772 = vmatmul.f32.gmra.mxu0 %v5400
    %v5773 = vpop.f32.mrf.mxu0
    %v5774 = vadd.f32 0.0, %v5773
    %5775 = vmatmul.f32.gmra.mxu0 %v5401
    %v5776 = vpop.f32.mrf.mxu0
    %v5777 = vadd.f32 0.0, %v5776
    %5778 = vdwg.mxu0
    %5779 = vmatpush.msra.mxu0 %v5533
    %5780 = vmatpush.msra.mxu0 %v5529
    %5781 = vmatpush.msra.mxu0 %v5525
    %5782 = vmatpush.msra.mxu0 %v5521
    %5783 = vmatpush.msra.mxu0 %v5517
    %5784 = vmatpush.msra.mxu0 %v5513
    %5785 = vmatpush.msra.mxu0 %v5509
    %5786 = vmatpush.msra.mxu0 %v5505
    %5787 = vmatpush.msra.mxu0 %v5501
    %5788 = vmatpush.msra.mxu0 %v5497
    %5789 = vmatpush.msra.mxu0 %v5493
    %5790 = vmatpush.msra.mxu0 %v5489
    %5791 = vmatpush.msra.mxu0 %v5485
    %5792 = vmatpush.msra.mxu0 %v5481
    %5793 = vmatpush.msra.mxu0 %v5477
    %5794 = vmatpush.msra.mxu0 %v5473
    %5795 = vmatmul.f32.gmra.mxu0 %v5402
    %v5796 = vpop.f32.mrf.mxu0
    %v5797 = vadd.f32 %v5774, %v5796
    %5798 = vmatmul.f32.gmra.mxu0 %v5403
    %v5799 = vpop.f32.mrf.mxu0
    %v5800 = vadd.f32 %v5777, %v5799
    %5801 = vdwg.mxu0
    %5802 = vmatpush.msra.mxu0 %v5597
    %5803 = vmatpush.msra.mxu0 %v5593
    %5804 = vmatpush.msra.mxu0 %v5589
    %5805 = vmatpush.msra.mxu0 %v5585
    %5806 = vmatpush.msra.mxu0 %v5581
    %5807 = vmatpush.msra.mxu0 %v5577
    %5808 = vmatpush.msra.mxu0 %v5573
    %5809 = vmatpush.msra.mxu0 %v5569
    %5810 = vmatpush.msra.mxu0 %v5565
    %5811 = vmatpush.msra.mxu0 %v5561
    %5812 = vmatpush.msra.mxu0 %v5557
    %5813 = vmatpush.msra.mxu0 %v5553
    %5814 = vmatpush.msra.mxu0 %v5549
    %5815 = vmatpush.msra.mxu0 %v5545
    %5816 = vmatpush.msra.mxu0 %v5541
    %5817 = vmatpush.msra.mxu0 %v5537
    %5818 = vmatmul.f32.gmra.mxu0 %v5404
    %v5819 = vpop.f32.mrf.mxu0
    %v5820 = vadd.f32 %v5797, %v5819
    %5821 = vmatmul.f32.gmra.mxu0 %v5405
    %v5822 = vpop.f32.mrf.mxu0
    %v5823 = vadd.f32 %v5800, %v5822
    %5824 = vdwg.mxu0
    %5825 = vmatpush.msra.mxu0 %v5661
    %5826 = vmatpush.msra.mxu0 %v5657
    %5827 = vmatpush.msra.mxu0 %v5653
    %5828 = vmatpush.msra.mxu0 %v5649
    %5829 = vmatpush.msra.mxu0 %v5645
    %5830 = vmatpush.msra.mxu0 %v5641
    %5831 = vmatpush.msra.mxu0 %v5637
    %5832 = vmatpush.msra.mxu0 %v5633
    %5833 = vmatpush.msra.mxu0 %v5629
    %5834 = vmatpush.msra.mxu0 %v5625
    %5835 = vmatpush.msra.mxu0 %v5621
    %5836 = vmatpush.msra.mxu0 %v5617
    %5837 = vmatpush.msra.mxu0 %v5613
    %5838 = vmatpush.msra.mxu0 %v5609
    %5839 = vmatpush.msra.mxu0 %v5605
    %5840 = vmatpush.msra.mxu0 %v5601
    %5841 = vmatmul.f32.gmra.mxu0 %v5406
    %v5842 = vpop.f32.mrf.mxu0
    %v5843 = vadd.f32 %v5820, %v5842
    %5844 = vmatmul.f32.gmra.mxu0 %v5407
    %v5845 = vpop.f32.mrf.mxu0
    %v5846 = vadd.f32 %v5823, %v5845
    %5847 = vdwg.mxu0
    %5848 = vmatpush.msra.mxu0 %v5470
    %5849 = vmatpush.msra.mxu0 %v5466
    %5850 = vmatpush.msra.mxu0 %v5462
    %5851 = vmatpush.msra.mxu0 %v5458
    %5852 = vmatpush.msra.mxu0 %v5454
    %5853 = vmatpush.msra.mxu0 %v5450
    %5854 = vmatpush.msra.mxu0 %v5446
    %5855 = vmatpush.msra.mxu0 %v5442
    %5856 = vmatpush.msra.mxu0 %v5438
    %5857 = vmatpush.msra.mxu0 %v5434
    %5858 = vmatpush.msra.mxu0 %v5430
    %5859 = vmatpush.msra.mxu0 %v5426
    %5860 = vmatpush.msra.mxu0 %v5422
    %5861 = vmatpush.msra.mxu0 %v5418
    %5862 = vmatpush.msra.mxu0 %v5414
    %5863 = vmatpush.msra.mxu0 %v5410
    %5864 = vmatmul.f32.gmra.mxu0 %v5400
    %v5865 = vpop.f32.mrf.mxu0
    %v5866 = vadd.f32 0.0, %v5865
    %5867 = vmatmul.f32.gmra.mxu0 %v5401
    %v5868 = vpop.f32.mrf.mxu0
    %v5869 = vadd.f32 0.0, %v5868
    %5870 = vdwg.mxu0
    %5871 = vmatpush.msra.mxu0 %v5534
    %5872 = vmatpush.msra.mxu0 %v5530
    %5873 = vmatpush.msra.mxu0 %v5526
    %5874 = vmatpush.msra.mxu0 %v5522
    %5875 = vmatpush.msra.mxu0 %v5518
    %5876 = vmatpush.msra.mxu0 %v5514
    %5877 = vmatpush.msra.mxu0 %v5510
    %5878 = vmatpush.msra.mxu0 %v5506
    %5879 = vmatpush.msra.mxu0 %v5502
    %5880 = vmatpush.msra.mxu0 %v5498
    %5881 = vmatpush.msra.mxu0 %v5494
    %5882 = vmatpush.msra.mxu0 %v5490
    %5883 = vmatpush.msra.mxu0 %v5486
    %5884 = vmatpush.msra.mxu0 %v5482
    %5885 = vmatpush.msra.mxu0 %v5478
    %5886 = vmatpush.msra.mxu0 %v5474
    %5887 = vmatmul.f32.gmra.mxu0 %v5402
    %v5888 = vpop.f32.mrf.mxu0
    %v5889 = vadd.f32 %v5866, %v5888
    %5890 = vmatmul.f32.gmra.mxu0 %v5403
    %v5891 = vpop.f32.mrf.mxu0
    %v5892 = vadd.f32 %v5869, %v5891
    %5893 = vdwg.mxu0
    %5894 = vmatpush.msra.mxu0 %v5598
    %5895 = vmatpush.msra.mxu0 %v5594
    %5896 = vmatpush.msra.mxu0 %v5590
    %5897 = vmatpush.msra.mxu0 %v5586
    %5898 = vmatpush.msra.mxu0 %v5582
    %5899 = vmatpush.msra.mxu0 %v5578
    %5900 = vmatpush.msra.mxu0 %v5574
    %5901 = vmatpush.msra.mxu0 %v5570
    %5902 = vmatpush.msra.mxu0 %v5566
    %5903 = vmatpush.msra.mxu0 %v5562
    %5904 = vmatpush.msra.mxu0 %v5558
    %5905 = vmatpush.msra.mxu0 %v5554
    %5906 = vmatpush.msra.mxu0 %v5550
    %5907 = vmatpush.msra.mxu0 %v5546
    %5908 = vmatpush.msra.mxu0 %v5542
    %5909 = vmatpush.msra.mxu0 %v5538
    %5910 = vmatmul.f32.gmra.mxu0 %v5404
    %v5911 = vpop.f32.mrf.mxu0
    %v5912 = vadd.f32 %v5889, %v5911
    %5913 = vmatmul.f32.gmra.mxu0 %v5405
    %v5914 = vpop.f32.mrf.mxu0
    %v5915 = vadd.f32 %v5892, %v5914
    %5916 = vdwg.mxu0
    %5917 = vmatpush.msra.mxu0 %v5662
    %5918 = vmatpush.msra.mxu0 %v5658
    %5919 = vmatpush.msra.mxu0 %v5654
    %5920 = vmatpush.msra.mxu0 %v5650
    %5921 = vmatpush.msra.mxu0 %v5646
    %5922 = vmatpush.msra.mxu0 %v5642
    %5923 = vmatpush.msra.mxu0 %v5638
    %5924 = vmatpush.msra.mxu0 %v5634
    %5925 = vmatpush.msra.mxu0 %v5630
    %5926 = vmatpush.msra.mxu0 %v5626
    %5927 = vmatpush.msra.mxu0 %v5622
    %5928 = vmatpush.msra.mxu0 %v5618
    %5929 = vmatpush.msra.mxu0 %v5614
    %5930 = vmatpush.msra.mxu0 %v5610
    %5931 = vmatpush.msra.mxu0 %v5606
    %5932 = vmatpush.msra.mxu0 %v5602
    %5933 = vmatmul.f32.gmra.mxu0 %v5406
    %v5934 = vpop.f32.mrf.mxu0
    %v5935 = vadd.f32 %v5912, %v5934
    %5936 = vmatmul.f32.gmra.mxu0 %v5407
    %v5937 = vpop.f32.mrf.mxu0
    %v5938 = vadd.f32 %v5915, %v5937
    %5939 = vdwg.mxu0
    %5940 = vmatpush.msra.mxu0 %v5471
    %5941 = vmatpush.msra.mxu0 %v5467
    %5942 = vmatpush.msra.mxu0 %v5463
    %5943 = vmatpush.msra.mxu0 %v5459
    %5944 = vmatpush.msra.mxu0 %v5455
    %5945 = vmatpush.msra.mxu0 %v5451
    %5946 = vmatpush.msra.mxu0 %v5447
    %5947 = vmatpush.msra.mxu0 %v5443
    %5948 = vmatpush.msra.mxu0 %v5439
    %5949 = vmatpush.msra.mxu0 %v5435
    %5950 = vmatpush.msra.mxu0 %v5431
    %5951 = vmatpush.msra.mxu0 %v5427
    %5952 = vmatpush.msra.mxu0 %v5423
    %5953 = vmatpush.msra.mxu0 %v5419
    %5954 = vmatpush.msra.mxu0 %v5415
    %5955 = vmatpush.msra.mxu0 %v5411
    %5956 = vmatmul.f32.gmra.mxu0 %v5400
    %v5957 = vpop.f32.mrf.mxu0
    %v5958 = vadd.f32 0.0, %v5957
    %5959 = vmatmul.f32.gmra.mxu0 %v5401
    %v5960 = vpop.f32.mrf.mxu0
    %v5961 = vadd.f32 0.0, %v5960
    %5962 = vdwg.mxu0
    %5963 = vmatpush.msra.mxu0 %v5535
    %5964 = vmatpush.msra.mxu0 %v5531
    %5965 = vmatpush.msra.mxu0 %v5527
    %5966 = vmatpush.msra.mxu0 %v5523
    %5967 = vmatpush.msra.mxu0 %v5519
    %5968 = vmatpush.msra.mxu0 %v5515
    %5969 = vmatpush.msra.mxu0 %v5511
    %5970 = vmatpush.msra.mxu0 %v5507
    %5971 = vmatpush.msra.mxu0 %v5503
    %5972 = vmatpush.msra.mxu0 %v5499
    %5973 = vmatpush.msra.mxu0 %v5495
    %5974 = vmatpush.msra.mxu0 %v5491
    %5975 = vmatpush.msra.mxu0 %v5487
    %5976 = vmatpush.msra.mxu0 %v5483
    %5977 = vmatpush.msra.mxu0 %v5479
    %5978 = vmatpush.msra.mxu0 %v5475
    %5979 = vmatmul.f32.gmra.mxu0 %v5402
    %v5980 = vpop.f32.mrf.mxu0
    %v5981 = vadd.f32 %v5958, %v5980
    %5982 = vmatmul.f32.gmra.mxu0 %v5403
    %v5983 = vpop.f32.mrf.mxu0
    %v5984 = vadd.f32 %v5961, %v5983
    %5985 = vdwg.mxu0
    %5986 = vmatpush.msra.mxu0 %v5599
    %5987 = vmatpush.msra.mxu0 %v5595
    %5988 = vmatpush.msra.mxu0 %v5591
    %5989 = vmatpush.msra.mxu0 %v5587
    %5990 = vmatpush.msra.mxu0 %v5583
    %5991 = vmatpush.msra.mxu0 %v5579
    %5992 = vmatpush.msra.mxu0 %v5575
    %5993 = vmatpush.msra.mxu0 %v5571
    %5994 = vmatpush.msra.mxu0 %v5567
    %5995 = vmatpush.msra.mxu0 %v5563
    %5996 = vmatpush.msra.mxu0 %v5559
    %5997 = vmatpush.msra.mxu0 %v5555
    %5998 = vmatpush.msra.mxu0 %v5551
    %5999 = vmatpush.msra.mxu0 %v5547
    %6000 = vmatpush.msra.mxu0 %v5543
    %6001 = vmatpush.msra.mxu0 %v5539
    %6002 = vmatmul.f32.gmra.mxu0 %v5404
    %v6003 = vpop.f32.mrf.mxu0
    %v6004 = vadd.f32 %v5981, %v6003
    %6005 = vmatmul.f32.gmra.mxu0 %v5405
    %v6006 = vpop.f32.mrf.mxu0
    %v6007 = vadd.f32 %v5984, %v6006
    %6008 = vdwg.mxu0
    %6009 = vmatpush.msra.mxu0 %v5663
    %6010 = vmatpush.msra.mxu0 %v5659
    %6011 = vmatpush.msra.mxu0 %v5655
    %6012 = vmatpush.msra.mxu0 %v5651
    %6013 = vmatpush.msra.mxu0 %v5647
    %6014 = vmatpush.msra.mxu0 %v5643
    %6015 = vmatpush.msra.mxu0 %v5639
    %6016 = vmatpush.msra.mxu0 %v5635
    %6017 = vmatpush.msra.mxu0 %v5631
    %6018 = vmatpush.msra.mxu0 %v5627
    %6019 = vmatpush.msra.mxu0 %v5623
    %6020 = vmatpush.msra.mxu0 %v5619
    %6021 = vmatpush.msra.mxu0 %v5615
    %6022 = vmatpush.msra.mxu0 %v5611
    %6023 = vmatpush.msra.mxu0 %v5607
    %6024 = vmatpush.msra.mxu0 %v5603
    %6025 = vmatmul.f32.gmra.mxu0 %v5406
    %v6026 = vpop.f32.mrf.mxu0
    %v6027 = vadd.f32 %v6004, %v6026
    %6028 = vmatmul.f32.gmra.mxu0 %v5407
    %v6029 = vpop.f32.mrf.mxu0
    %v6030 = vadd.f32 %v6007, %v6029
    %6031 = vdwg.mxu0
    %6032 = vst [vmem:[#allocation14] sm:$0xff] %v5751
    %6033 = vst [vmem:[#allocation14 + $0x8] sm:$0xff] %v5843
    %6034 = vst [vmem:[#allocation14 + $0x10] sm:$0xff] %v5935
    %6035 = vst [vmem:[#allocation14 + $0x18] sm:$0xff] %v6027
    %6036 = vst [vmem:[#allocation14 + $0x20] sm:$0x3] %v5754
    %6037 = vst [vmem:[#allocation14 + $0x28] sm:$0x3] %v5846
    %6038 = vst [vmem:[#allocation14 + $0x30] sm:$0x3] %v5938
    %6039 = vst [vmem:[#allocation14 + $0x38] sm:$0x3] %v6030
    // Predicated region
    $region62: #{tpu_custom_call.1} parent=1 // pred_check
      _
    $region63: #{tpu_custom_call.1} parent=1 // pred_check_branch
      %6041 = sbr.rel (0) target = $region65
    $region64: #{tpu_custom_call.1} parent=1 // pred_region
      %6043 = vsyncadd [#allocation4], 0
      %s6044 = sshll.u32 [#allocation14], 4
      %s6045 = int_to_ptr.vmem [resolvable:$true] %s6044
      %s6046 = sshll.u32 %s8, 4
      %s6047 = int_to_ptr.hbm [resolvable:$true] %s6046
      %6052 = dma.vmem_to_hbm [thread:$0]  %s6045, 1024, %s6047, [#allocation4], 512, 512, 32
    $region65: #{tpu_custom_call.1} parent=1 // pred_fallthru
      _
    // Predicated region
    $region66: #{tpu_custom_call.1} parent=1 // pred_check
      _
    $region67: #{tpu_custom_call.1} parent=1 // pred_check_branch
      %6054 = sbr.rel (0) target = $region69
    $region68: #{tpu_custom_call.1} parent=1 // pred_region
      _
    $region69: #{tpu_custom_call.1} parent=1 // pred_fallthru
      _
    // Predicated region
    $region70: #{tpu_custom_call.1} parent=1 // pred_check
      _
    $region71: #{tpu_custom_call.1} parent=1 // pred_check_branch
      %6056 = sbr.rel (0) target = $region73
    $region72: #{tpu_custom_call.1} parent=1 // pred_region
      %6058 = dma.done [#allocation4], 1024
    $region73: #{tpu_custom_call.1} parent=1 // pred_fallthru
      _
    // Predicated region
    $region74: #{tpu_custom_call.1} parent=1 // pred_check
      _
    $region75: #{tpu_custom_call.1} parent=1 // pred_check_branch
      %6060 = sbr.rel (0) target = $region77
    $region76: #{tpu_custom_call.1} parent=1 // pred_region
      _
    $region77: #{tpu_custom_call.1} parent=1 // pred_fallthru
      _
    %6061 = vsyncpa [#allocation3], 1
    %6062 = vsyncpa [#allocation6], 1
    %6063 = vsyncpa [#allocation9], 1
    %6064 = vsyncpa [#allocation12], 1
    %6065 = vsyncpa [#allocation4], 1

</llo_original>
